<compile_context>
chip_gen: v7x
topology: tpu7x:2x2x1
jax: 0.10.0
libtpu: 0.0.40
codegen_flags: <defaults>
</compile_context>

<pallas_src>
import math
import functools

import jax
import jax.numpy as jnp
from jax import lax
from jax.experimental import pallas as pl
from jax.experimental.pallas import tpu as pltpu

_VMEM_LIMIT = 32 * 1024 * 1024  # fits v7x (64 MiB phys) and raises v5e's 16 MiB default


def _pick_tile(dim, candidates):
    for c in candidates:
        if c <= dim and dim % c == 0:
            return c
    return dim  # full extent always satisfies the (8,128) layout rule


# ------------------------------------------------------------------ Linear ---
def linear_kernel(x_ref, w_ref, o_ref, acc_ref, *, compute_dtype):
    # y = x @ W^T ; contraction tiled along grid axis 2 with a resident f32 accumulator.
    @pl.when(pl.program_id(2) == 0)
    def _init():
        acc_ref[...] = jnp.zeros_like(acc_ref)

    acc_ref[...] += lax.dot_general(
        x_ref[...].astype(compute_dtype), w_ref[...].astype(compute_dtype),
        dimension_numbers=(((1,), (1,)), ((), ())),
        preferred_element_type=jnp.float32,
    )

    @pl.when(pl.program_id(2) == pl.num_programs(2) - 1)
    def _finalize():
        o_ref[...] = acc_ref[...].astype(o_ref.dtype)


def linear_matmul(x2d, w, *, compute_dtype=jnp.float32):
    """x2d: (M, K), w: (N, K) -> (M, N) = x2d @ w.T, tiled + pipelined."""
    M, K = x2d.shape
    N = w.shape[0]
    tm = _pick_tile(M, (256, 128, 8))
    tn = _pick_tile(N, (256, 128))
    tk = _pick_tile(K, (512, 256, 128))
    grid = (M // tm, N // tn, K // tk)

    kernel = functools.partial(linear_kernel, compute_dtype=compute_dtype)
    return pl.pallas_call(
        kernel,
        out_shape=jax.ShapeDtypeStruct((M, N), x2d.dtype),
        grid_spec=pltpu.PrefetchScalarGridSpec(
            num_scalar_prefetch=0,
            grid=grid,
            in_specs=[
                pl.BlockSpec((tm, tk), lambda i, j, k: (i, k)),
                pl.BlockSpec((tn, tk), lambda i, j, k: (j, k)),
            ],
            out_specs=pl.BlockSpec((tm, tn), lambda i, j, k: (i, j)),
            scratch_shapes=[pltpu.VMEM((tm, tn), jnp.float32)],
        ),
        compiler_params=pltpu.CompilerParams(
            dimension_semantics=("parallel", "parallel", "arbitrary"),
            vmem_limit_bytes=_VMEM_LIMIT,
        ),
    )(x2d, w)


# --------------------------------------------------- Flash attention + RoPE ---
def flash_attn_kernel(q_ref, k_ref, v_ref,
                      cosq_ref, sinq_ref, cosk_ref, sink_ref,
                      o_ref, m_scr, l_scr, acc_scr, *, compute_dtype):
    qi = pl.program_id(2)
    ki = pl.program_id(3)
    nkv = pl.num_programs(3)

    @pl.when(ki == 0)
    def _init():
        m_scr[...] = jnp.full_like(m_scr, -jnp.inf)
        l_scr[...] = jnp.zeros_like(l_scr)
        acc_scr[...] = jnp.zeros_like(acc_scr)

    # Skip KV blocks that are entirely in the causal future (ki > qi).
    @pl.when(ki <= qi)
    def _compute():
        dh = q_ref.shape[-1]
        half = dh // 2
        scale = 1.0 / math.sqrt(dh)

        q = q_ref[...].astype(jnp.float32)
        k = k_ref[...].astype(jnp.float32)
        # Rotate-half RoPE (Q/K projection rows pre-permuted at init to match).
        q = q * cosq_ref[...] + pltpu.roll(q, shift=half, axis=1) * sinq_ref[...]
        k = k * cosk_ref[...] + pltpu.roll(k, shift=half, axis=1) * sink_ref[...]

        s = lax.dot_general(
            q.astype(compute_dtype), k.astype(compute_dtype),
            dimension_numbers=(((1,), (1,)), ((), ())),
            preferred_element_type=jnp.float32,
        ) * scale

        def online_softmax_update(s_blk):
            m_prev = m_scr[...]
            m_new = jnp.maximum(m_prev, jnp.max(s_blk, axis=-1, keepdims=True))
            alpha = jnp.exp(m_prev - m_new)
            p = jnp.exp(s_blk - m_new)
            l_scr[...] = alpha * l_scr[...] + jnp.sum(p, axis=-1, keepdims=True)
            pv = lax.dot_general(
                p.astype(compute_dtype), v_ref[...].astype(compute_dtype),
                dimension_numbers=(((1,), (0,)), ((), ())),
                preferred_element_type=jnp.float32,
            )
            acc_scr[...] = alpha * acc_scr[...] + pv
            m_scr[...] = m_new

        # Causal mask only on the diagonal block (bq == bkv, so local iotas suffice).
        @pl.when(ki == qi)
        def _diag():
            row = lax.broadcasted_iota(jnp.int32, s.shape, 0)
            col = lax.broadcasted_iota(jnp.int32, s.shape, 1)
            online_softmax_update(jnp.where(col <= row, s, -1e30))

        @pl.when(ki < qi)
        def _below_diag():
            online_softmax_update(s)

    @pl.when(ki == nkv - 1)
    def _finalize():
        if jnp.dtype(compute_dtype) != jnp.dtype(jnp.float32):
            inv_l = pl.reciprocal(l_scr[...], approx=True)   # EUP slot, off the VALU
        else:
            inv_l = 1.0 / l_scr[...]                         # exact for the f32 path
        o_ref[...] = (acc_scr[...] * inv_l).astype(o_ref.dtype)


def flash_attention(qkv, cos_rh, sin_rh, num_heads, *, compute_dtype=jnp.float32):
    """qkv: (B, S, 3*D) with columns [Q heads | K heads | V heads] -> (B, S, D)."""
    B, S, three_d = qkv.shape
    D = three_d // 3
    H = num_heads
    Dh = D // H
    # TODO(synk): pack multiple heads per block when Dh < 128 (lane-dense output for small heads).
    assert Dh % 128 == 0, "this kernel assumes head_dim is a multiple of 128"

    bq = 128 if S % 128 == 0 else S   # small blocks: VMEM-light (v7x) and MXU-sufficient
    bkv = bq
    nq, nkv = S // bq, S // bkv
    grid = (B, H, nq, nkv)

    def q_idx(b, h, qi, ki):   return (b, qi, h)
    def k_idx(b, h, qi, ki):   return (b, jnp.minimum(ki, qi), H + h)
    def v_idx(b, h, qi, ki):   return (b, jnp.minimum(ki, qi), 2 * H + h)
    def tq_idx(b, h, qi, ki):  return (qi, 0)
    def tk_idx(b, h, qi, ki):  return (jnp.minimum(ki, qi), 0)
    def o_idx(b, h, qi, ki):   return (b, qi, h)

    kernel = functools.partial(flash_attn_kernel, compute_dtype=compute_dtype)
    return pl.pallas_call(
        kernel,
        out_shape=jax.ShapeDtypeStruct((B, S, D), qkv.dtype),
        grid_spec=pltpu.PrefetchScalarGridSpec(
            num_scalar_prefetch=0,
            grid=grid,
            in_specs=[
                pl.BlockSpec((None, bq, Dh), q_idx),
                pl.BlockSpec((None, bkv, Dh), k_idx),
                pl.BlockSpec((None, bkv, Dh), v_idx),
                pl.BlockSpec((bq, Dh), tq_idx),
                pl.BlockSpec((bq, Dh), tq_idx),
                pl.BlockSpec((bkv, Dh), tk_idx),
                pl.BlockSpec((bkv, Dh), tk_idx),
            ],
            out_specs=pl.BlockSpec((None, bq, Dh), o_idx),
            scratch_shapes=[
                pltpu.VMEM((bq, 1), jnp.float32),    # m (running max)
                pltpu.VMEM((bq, 1), jnp.float32),    # l (running denom)
                pltpu.VMEM((bq, Dh), jnp.float32),   # acc
            ],
        ),
        compiler_params=pltpu.CompilerParams(
            dimension_semantics=("parallel", "parallel", "parallel", "arbitrary"),
            vmem_limit_bytes=_VMEM_LIMIT,
        ),
    )(qkv, qkv, qkv, cos_rh, sin_rh, cos_rh, sin_rh)


# ------------------------------------------------------------ full forward ---
def attention_forward(x, w_qkv, w_out, cos_rh, sin_rh, *, num_heads,
                      compute_dtype=jnp.float32):
    B, S, D = x.shape
    # Fused Q/K/V projection: activation streamed from HBM once.
    qkv = linear_matmul(x.reshape(B * S, D), w_qkv, compute_dtype=compute_dtype)
    qkv = qkv.reshape(B, S, 3 * D)                        # free reshape
    attn = flash_attention(qkv, cos_rh, sin_rh, num_heads,
                           compute_dtype=compute_dtype)    # (B, S, D), heads merged
    out = linear_matmul(attn.reshape(B * S, D), w_out, compute_dtype=compute_dtype)
    return out.reshape(B, S, D)


# ------------------------------------------------------- init-time buffers ---
def _rotate_half_row_perm(d_model, num_heads):
    """Per-head row permutation taking interleaved (even/odd) dims to [evens|odds]."""
    dh = d_model // num_heads
    half = dh // 2
    d = jnp.arange(dh)
    src = jnp.where(d < half, 2 * d, 2 * (d - half) + 1)
    return (jnp.arange(num_heads)[:, None] * dh + src[None, :]).reshape(-1)


def prepare_qkv_weight(Wq, Wk, Wv, num_heads):
    """Permute Q/K projection rows into rotate-half order (once) and stack Q/K/V."""
    perm = _rotate_half_row_perm(Wq.shape[0], num_heads)
    return jnp.concatenate([Wq[perm], Wk[perm], Wv], axis=0)   # (3*D, D)


def make_rope_buffers(theta, d_k, max_seq_len):
    half = d_k // 2
    inv_freq = theta ** (-(2.0 * jnp.arange(half, dtype=jnp.float32) / d_k))
    pos = jnp.arange(max_seq_len, dtype=jnp.float32)
    angles = pos[:, None] * inv_freq[None, :]            # (S, half)
    sin, cos = jnp.sin(angles), jnp.cos(angles)
    # Rotate-half layout tables for the kernel.
    cos_rh = jnp.concatenate([cos, cos], axis=-1)        # (S, d_k)
    sin_rh = jnp.concatenate([-sin, sin], axis=-1)       # (S, d_k)
    return cos, sin, cos_rh, sin_rh


def init_linear_weight(key, d_in, d_out):
    sigma = (2.0 / (d_in + d_out)) ** 0.5
    w = sigma ** 2 * jax.random.normal(key, (d_out, d_in), jnp.float32)
    return jnp.clip(w, -3.0 * sigma, 3.0 * sigma)


# ------------------------------------------------------ pure-JAX reference ---
def ref_forward(x, Wq, Wk, Wv, Wo, cos, sin, num_heads):
    B, S, D = x.shape
    H = num_heads
    Dh = D // H
    q, k, v = x @ Wq.T, x @ Wk.T, x @ Wv.T

    def split(t):
        return t.reshape(B, S, H, Dh).transpose(0, 2, 1, 3)

    q, k, v = split(q), split(k), split(v)

    def rope(t):                                  # interleaved RoPE, as in the module
        te, to = t[..., 0::2], t[..., 1::2]
        e = te * cos - to * sin
        o = to * cos + te * sin
        return jnp.stack([e, o], axis=-1).reshape(t.shape)

    q, k = rope(q), rope(k)
    s = jnp.einsum('bhqd,bhkd->bhqk', q, k) / math.sqrt(Dh)
    mask = jnp.tril(jnp.ones((S, S), bool))
    s = jnp.where(mask, s, -jnp.inf)
    largest = jnp.max(s)                          # global max, as in the torch softmax
    p = jnp.exp(s - largest)
    attn = p / p.sum(-1, keepdims=True)
    out = jnp.einsum('bhqk,bhkd->bhqd', attn, v)
    out = out.transpose(0, 2, 1, 3).reshape(B, S, D)
    return out @ Wo.T


# ----------------------------------------------------------------------------
if __name__ == "__main__":
    B, S, d_model, num_heads = 2, 256, 256, 2
    Dh = d_model // num_heads
    theta = 10000.0

    key = jax.random.PRNGKey(0)
    kx, kq, kk, kv, ko = jax.random.split(key, 5)

    x = jax.random.normal(kx, (B, S, d_model), jnp.float32)
    Wq = init_linear_weight(kq, d_model, d_model)
    Wk = init_linear_weight(kk, d_model, d_model)
    Wv = init_linear_weight(kv, d_model, d_model)
    Wo = init_linear_weight(ko, d_model, d_model)

    cos_half, sin_half, cos_rh, sin_rh = make_rope_buffers(theta, Dh, S)
    w_qkv = prepare_qkv_weight(Wq, Wk, Wv, num_heads)   # one-time init transform

    ref = ref_forward(x, Wq, Wk, Wv, Wo, cos_half, sin_half, num_heads)

    # f32 operands (exact; suits v5e which lacks bf16 VPU/EUP).
    fwd_f32 = jax.jit(functools.partial(attention_forward, num_heads=num_heads,
                                        compute_dtype=jnp.float32))
    out = jax.block_until_ready(fwd_f32(x, w_qkv, Wo, cos_rh, sin_rh))
    assert out.shape == (B, S, d_model)
    assert jnp.allclose(out, ref, atol=1e-4, rtol=1e-4), (
        f"f32 max abs diff = {jnp.max(jnp.abs(out - ref))}")

    # bf16 MXU-operand path (f32 accumulation) — the v6e/v7x throughput recipe.
    fwd_bf16 = jax.jit(functools.partial(attention_forward, num_heads=num_heads,
                                         compute_dtype=jnp.bfloat16))
    out_bf16 = jax.block_until_ready(fwd_bf16(x, w_qkv, Wo, cos_rh, sin_rh))
    assert jnp.allclose(out_bf16, ref, atol=1e-3, rtol=5e-2), (
        f"bf16 max abs diff = {jnp.max(jnp.abs(out_bf16 - ref))}")

    print("KERNEL_OK")
</pallas_src>

<mosaic_0001>
module attributes {stable_mosaic.version = 11 : i64} {
  func.func @linear_kernel(%arg0: i32, %arg1: i32, %arg2: i32, %arg3: memref<256x256xf32, #tpu.memory_space<vmem>>, %arg4: memref<256x256xf32, #tpu.memory_space<vmem>>, %arg5: memref<256x256xf32, #tpu.memory_space<vmem>>, %arg6: memref<256x256xf32, #tpu.memory_space<vmem>>) attributes {dimension_semantics = [#tpu.dimension_semantics<parallel>, #tpu.dimension_semantics<parallel>, #tpu.dimension_semantics<arbitrary>], iteration_bounds = array<i64: 2, 3, 1>, scalar_prefetch = 0 : i64, scratch_operands = 1 : i64, tpu.core_type = #tpu.core_type<tc>, window_params = [{transform_indices = @transform_0, window_bounds = array<i64: 256, 256>}, {transform_indices = @transform_1, window_bounds = array<i64: 256, 256>}, {transform_indices = @transform_2, window_bounds = array<i64: 256, 256>}]} {
    %c0_i32 = arith.constant 0 : i32
    %0 = arith.cmpi eq, %arg2, %c0_i32 : i32
    %1 = arith.extui %0 : i1 to i32
    %c0_i32_0 = arith.constant 0 : i32
    %2 = arith.cmpi ne, %1, %c0_i32_0 : i32
    scf.if %2 {
      %cst_10 = arith.constant 0.000000e+00 : f32
      %12 = vector.broadcast %cst_10 : f32 to vector<256x256xf32>
      %c0_11 = arith.constant 0 : index
      %c0_12 = arith.constant 0 : index
      %13 = vector.load %arg6[%c0_11, %c0_12] : memref<256x256xf32, #tpu.memory_space<vmem>>, vector<256x256xf32>
      tpu.vector_store %arg6[%c0_11, %c0_12], %12 {strides = array<i32>} : memref<256x256xf32, #tpu.memory_space<vmem>>, vector<256x256xf32>,
    } else {
    }
    %c0 = arith.constant 0 : index
    %c0_1 = arith.constant 0 : index
    %3 = vector.load %arg6[%c0, %c0_1] : memref<256x256xf32, #tpu.memory_space<vmem>>, vector<256x256xf32>
    %c0_2 = arith.constant 0 : index
    %c0_3 = arith.constant 0 : index
    %4 = vector.load %arg3[%c0_2, %c0_3] : memref<256x256xf32, #tpu.memory_space<vmem>>, vector<256x256xf32>
    %c0_4 = arith.constant 0 : index
    %c0_5 = arith.constant 0 : index
    %5 = vector.load %arg4[%c0_4, %c0_5] : memref<256x256xf32, #tpu.memory_space<vmem>>, vector<256x256xf32>
    %cst = arith.constant dense<0.000000e+00> : vector<256x256xf32>
    %6 = tpu.matmul %4, %5, %cst {dimension_numbers = #tpu.dot_dimension_numbers<[1], [1], [0], [0], [0, 0, 1, 0], [], []>} : vector<256x256xf32>, vector<256x256xf32>, vector<256x256xf32> -> vector<256x256xf32>
    %7 = arith.addf %3, %6 : vector<256x256xf32>
    %c0_6 = arith.constant 0 : index
    %c0_7 = arith.constant 0 : index
    %8 = vector.load %arg6[%c0_6, %c0_7] : memref<256x256xf32, #tpu.memory_space<vmem>>, vector<256x256xf32>
    tpu.vector_store %arg6[%c0_6, %c0_7], %7 {strides = array<i32>} : memref<256x256xf32, #tpu.memory_space<vmem>>, vector<256x256xf32>,
    %c0_i32_8 = arith.constant 0 : i32
    %9 = arith.cmpi eq, %arg2, %c0_i32_8 : i32
    %10 = arith.extui %9 : i1 to i32
    %c0_i32_9 = arith.constant 0 : i32
    %11 = arith.cmpi ne, %10, %c0_i32_9 : i32
    scf.if %11 {
      %c0_10 = arith.constant 0 : index
      %c0_11 = arith.constant 0 : index
      %12 = vector.load %arg6[%c0_10, %c0_11] : memref<256x256xf32, #tpu.memory_space<vmem>>, vector<256x256xf32>
      %c0_12 = arith.constant 0 : index
      %c0_13 = arith.constant 0 : index
      %13 = vector.load %arg5[%c0_12, %c0_13] : memref<256x256xf32, #tpu.memory_space<vmem>>, vector<256x256xf32>
      tpu.vector_store %arg5[%c0_12, %c0_13], %12 {strides = array<i32>} : memref<256x256xf32, #tpu.memory_space<vmem>>, vector<256x256xf32>,
    } else {
    }
    return
  }
  func.func @transform_0(%arg0: i32, %arg1: i32, %arg2: i32) -> (i32, i32) {
    %c0_i32 = arith.constant 0 : i32
    return %arg0, %arg2 : i32, i32
  }
  func.func @transform_1(%arg0: i32, %arg1: i32, %arg2: i32) -> (i32, i32) {
    %c0_i32 = arith.constant 0 : i32
    return %arg1, %arg2 : i32, i32
  }
  func.func @transform_2(%arg0: i32, %arg1: i32, %arg2: i32) -> (i32, i32) {
    %c0_i32 = arith.constant 0 : i32
    return %arg0, %arg1 : i32, i32
  }
}

module attributes {stable_mosaic.version = 11 : i64} {
  func.func @flash_attn_kernel(%arg0: i32, %arg1: i32, %arg2: i32, %arg3: i32, %arg4: memref<1x128x128xf32, #tpu.memory_space<vmem>>, %arg5: memref<1x128x128xf32, #tpu.memory_space<vmem>>, %arg6: memref<1x128x128xf32, #tpu.memory_space<vmem>>, %arg7: memref<128x128xf32, #tpu.memory_space<vmem>>, %arg8: memref<128x128xf32, #tpu.memory_space<vmem>>, %arg9: memref<128x128xf32, #tpu.memory_space<vmem>>, %arg10: memref<128x128xf32, #tpu.memory_space<vmem>>, %arg11: memref<1x128x128xf32, #tpu.memory_space<vmem>>, %arg12: memref<128x1xf32, #tpu.memory_space<vmem>>, %arg13: memref<128x1xf32, #tpu.memory_space<vmem>>, %arg14: memref<128x128xf32, #tpu.memory_space<vmem>>) attributes {dimension_semantics = [#tpu.dimension_semantics<parallel>, #tpu.dimension_semantics<parallel>, #tpu.dimension_semantics<parallel>, #tpu.dimension_semantics<arbitrary>], iteration_bounds = array<i64: 2, 2, 2, 2>, scalar_prefetch = 0 : i64, scratch_operands = 3 : i64, tpu.core_type = #tpu.core_type<tc>, window_params = [{transform_indices = @transform_0, window_bounds = array<i64: 1, 128, 128>}, {transform_indices = @transform_1, window_bounds = array<i64: 1, 128, 128>}, {transform_indices = @transform_2, window_bounds = array<i64: 1, 128, 128>}, {transform_indices = @transform_3, window_bounds = array<i64: 128, 128>}, {transform_indices = @transform_4, window_bounds = array<i64: 128, 128>}, {transform_indices = @transform_5, window_bounds = array<i64: 128, 128>}, {transform_indices = @transform_6, window_bounds = array<i64: 128, 128>}, {transform_indices = @transform_7, window_bounds = array<i64: 1, 128, 128>}]} {
    %c0_i32 = arith.constant 0 : i32
    %0 = arith.cmpi eq, %arg3, %c0_i32 : i32
    %1 = arith.extui %0 : i1 to i32
    %c0_i32_0 = arith.constant 0 : i32
    %2 = arith.cmpi ne, %1, %c0_i32_0 : i32
    scf.if %2 {
      %cst = arith.constant 0xFF800000 : f32
      %9 = vector.broadcast %cst : f32 to vector<128x1xf32>
      %c0 = arith.constant 0 : index
      %c0_3 = arith.constant 0 : index
      %10 = vector.load %arg12[%c0, %c0_3] : memref<128x1xf32, #tpu.memory_space<vmem>>, vector<128x1xf32>
      tpu.vector_store %arg12[%c0, %c0_3], %9 {strides = array<i32>} : memref<128x1xf32, #tpu.memory_space<vmem>>, vector<128x1xf32>,
      %cst_4 = arith.constant 0.000000e+00 : f32
      %11 = vector.broadcast %cst_4 : f32 to vector<128x1xf32>
      %c0_5 = arith.constant 0 : index
      %c0_6 = arith.constant 0 : index
      %12 = vector.load %arg13[%c0_5, %c0_6] : memref<128x1xf32, #tpu.memory_space<vmem>>, vector<128x1xf32>
      tpu.vector_store %arg13[%c0_5, %c0_6], %11 {strides = array<i32>} : memref<128x1xf32, #tpu.memory_space<vmem>>, vector<128x1xf32>,
      %cst_7 = arith.constant 0.000000e+00 : f32
      %13 = vector.broadcast %cst_7 : f32 to vector<128x128xf32>
      %c0_8 = arith.constant 0 : index
      %c0_9 = arith.constant 0 : index
      %14 = vector.load %arg14[%c0_8, %c0_9] : memref<128x128xf32, #tpu.memory_space<vmem>>, vector<128x128xf32>
      tpu.vector_store %arg14[%c0_8, %c0_9], %13 {strides = array<i32>} : memref<128x128xf32, #tpu.memory_space<vmem>>, vector<128x128xf32>,
    } else {
    }
    %3 = arith.cmpi sle, %arg3, %arg2 : i32
    %4 = arith.extui %3 : i1 to i32
    %c0_i32_1 = arith.constant 0 : i32
    %5 = arith.cmpi ne, %4, %c0_i32_1 : i32
    scf.if %5 {
      %c0 = arith.constant 0 : index
      %c0_3 = arith.constant 0 : index
      %c0_4 = arith.constant 0 : index
      %9 = vector.load %arg4[%c0, %c0_3, %c0_4] : memref<1x128x128xf32, #tpu.memory_space<vmem>>, vector<1x128x128xf32>
      %10 = vector.shape_cast %9 : vector<1x128x128xf32> to vector<128x128xf32>
      %c0_5 = arith.constant 0 : index
      %c0_6 = arith.constant 0 : index
      %c0_7 = arith.constant 0 : index
      %11 = vector.load %arg5[%c0_5, %c0_6, %c0_7] : memref<1x128x128xf32, #tpu.memory_space<vmem>>, vector<1x128x128xf32>
      %12 = vector.shape_cast %11 : vector<1x128x128xf32> to vector<128x128xf32>
      %c0_8 = arith.constant 0 : index
      %c0_9 = arith.constant 0 : index
      %13 = vector.load %arg7[%c0_8, %c0_9] : memref<128x128xf32, #tpu.memory_space<vmem>>, vector<128x128xf32>
      %14 = arith.mulf %10, %13 : vector<128x128xf32>
      %c64_i32 = arith.constant 64 : i32
      %15 = tpu.dynamic_rotate %10 by %c64_i32 dim 1 : vector<128x128xf32>, i32 -> vector<128x128xf32>
      %c0_10 = arith.constant 0 : index
      %c0_11 = arith.constant 0 : index
      %16 = vector.load %arg8[%c0_10, %c0_11] : memref<128x128xf32, #tpu.memory_space<vmem>>, vector<128x128xf32>
      %17 = arith.mulf %15, %16 : vector<128x128xf32>
      %18 = arith.addf %14, %17 : vector<128x128xf32>
      %c0_12 = arith.constant 0 : index
      %c0_13 = arith.constant 0 : index
      %19 = vector.load %arg9[%c0_12, %c0_13] : memref<128x128xf32, #tpu.memory_space<vmem>>, vector<128x128xf32>
      %20 = arith.mulf %12, %19 : vector<128x128xf32>
      %c64_i32_14 = arith.constant 64 : i32
      %21 = tpu.dynamic_rotate %12 by %c64_i32_14 dim 1 : vector<128x128xf32>, i32 -> vector<128x128xf32>
      %c0_15 = arith.constant 0 : index
      %c0_16 = arith.constant 0 : index
      %22 = vector.load %arg10[%c0_15, %c0_16] : memref<128x128xf32, #tpu.memory_space<vmem>>, vector<128x128xf32>
      %23 = arith.mulf %21, %22 : vector<128x128xf32>
      %24 = arith.addf %20, %23 : vector<128x128xf32>
      %cst = arith.constant dense<0.000000e+00> : vector<128x128xf32>
      %25 = tpu.matmul %18, %24, %cst {dimension_numbers = #tpu.dot_dimension_numbers<[1], [1], [0], [0], [0, 0, 1, 0], [], []>} : vector<128x128xf32>, vector<128x128xf32>, vector<128x128xf32> -> vector<128x128xf32>
      %cst_17 = arith.constant 0.0883883461 : f32
      %26 = vector.broadcast %cst_17 : f32 to vector<128x128xf32>
      %27 = arith.mulf %25, %26 : vector<128x128xf32>
      %28 = arith.cmpi eq, %arg3, %arg2 : i32
      %29 = arith.extui %28 : i1 to i32
      %c0_i32_18 = arith.constant 0 : i32
      %30 = arith.cmpi ne, %29, %c0_i32_18 : i32
      scf.if %30 {
        %34 = tpu.iota {dimensions = array<i32: 0>} : vector<128x128xi32>
        %35 = tpu.iota {dimensions = array<i32: 1>} : vector<128x128xi32>
        %36 = arith.cmpi sle, %35, %34 : vector<128x128xi32>
        %cst_20 = arith.constant -1.000000e+30 : f32
        %37 = vector.broadcast %cst_20 : f32 to vector<128x128xf32>
        %38 = arith.select %36, %27, %37 : vector<128x128xi1>, vector<128x128xf32>
        %c0_21 = arith.constant 0 : index
        %c0_22 = arith.constant 0 : index
        %39 = vector.load %arg12[%c0_21, %c0_22] : memref<128x1xf32, #tpu.memory_space<vmem>>, vector<128x1xf32>
        %cst_23 = arith.constant dense<0xFF800000> : vector<128xf32>
        %40 = vector.multi_reduction <maximumf>, %38, %cst_23 [1] : vector<128x128xf32> to vector<128xf32>
        %41 = vector.shape_cast %40 : vector<128xf32> to vector<128x1xf32>
        %42 = arith.maximumf %39, %41 : vector<128x1xf32>
        %43 = arith.subf %39, %42 : vector<128x1xf32>
        %44 = math.exp %43 : vector<128x1xf32>
        %45 = vector.broadcast %42 : vector<128x1xf32> to vector<128x128xf32>
        %46 = arith.subf %38, %45 : vector<128x128xf32>
        %47 = math.exp %46 : vector<128x128xf32>
        %c0_24 = arith.constant 0 : index
        %c0_25 = arith.constant 0 : index
        %48 = vector.load %arg13[%c0_24, %c0_25] : memref<128x1xf32, #tpu.memory_space<vmem>>, vector<128x1xf32>
        %49 = arith.mulf %44, %48 : vector<128x1xf32>
        %cst_26 = arith.constant dense<0.000000e+00> : vector<128xf32>
        %50 = vector.multi_reduction <add>, %47, %cst_26 [1] : vector<128x128xf32> to vector<128xf32>
        %51 = vector.shape_cast %50 : vector<128xf32> to vector<128x1xf32>
        %52 = arith.addf %49, %51 : vector<128x1xf32>
        %c0_27 = arith.constant 0 : index
        %c0_28 = arith.constant 0 : index
        %53 = vector.load %arg13[%c0_27, %c0_28] : memref<128x1xf32, #tpu.memory_space<vmem>>, vector<128x1xf32>
        tpu.vector_store %arg13[%c0_27, %c0_28], %52 {strides = array<i32>} : memref<128x1xf32, #tpu.memory_space<vmem>>, vector<128x1xf32>,
        %c0_29 = arith.constant 0 : index
        %c0_30 = arith.constant 0 : index
        %c0_31 = arith.constant 0 : index
        %54 = vector.load %arg6[%c0_29, %c0_30, %c0_31] : memref<1x128x128xf32, #tpu.memory_space<vmem>>, vector<1x128x128xf32>
        %55 = vector.shape_cast %54 : vector<1x128x128xf32> to vector<128x128xf32>
        %cst_32 = arith.constant dense<0.000000e+00> : vector<128x128xf32>
        %56 = tpu.matmul %47, %55, %cst_32 {dimension_numbers = #tpu.dot_dimension_numbers<[1], [0], [0], [1], [0, 0, 1, 1], [], []>} : vector<128x128xf32>, vector<128x128xf32>, vector<128x128xf32> -> vector<128x128xf32>
        %c0_33 = arith.constant 0 : index
        %c0_34 = arith.constant 0 : index
        %57 = vector.load %arg14[%c0_33, %c0_34] : memref<128x128xf32, #tpu.memory_space<vmem>>, vector<128x128xf32>
        %58 = vector.broadcast %44 : vector<128x1xf32> to vector<128x128xf32>
        %59 = arith.mulf %58, %57 : vector<128x128xf32>
        %60 = arith.addf %59, %56 : vector<128x128xf32>
        %c0_35 = arith.constant 0 : index
        %c0_36 = arith.constant 0 : index
        %61 = vector.load %arg14[%c0_35, %c0_36] : memref<128x128xf32, #tpu.memory_space<vmem>>, vector<128x128xf32>
        tpu.vector_store %arg14[%c0_35, %c0_36], %60 {strides = array<i32>} : memref<128x128xf32, #tpu.memory_space<vmem>>, vector<128x128xf32>,
        %c0_37 = arith.constant 0 : index
        %c0_38 = arith.constant 0 : index
        %62 = vector.load %arg12[%c0_37, %c0_38] : memref<128x1xf32, #tpu.memory_space<vmem>>, vector<128x1xf32>
        tpu.vector_store %arg12[%c0_37, %c0_38], %42 {strides = array<i32>} : memref<128x1xf32, #tpu.memory_space<vmem>>, vector<128x1xf32>,
      } else {
      }
      %31 = arith.cmpi slt, %arg3, %arg2 : i32
      %32 = arith.extui %31 : i1 to i32
      %c0_i32_19 = arith.constant 0 : i32
      %33 = arith.cmpi ne, %32, %c0_i32_19 : i32
      scf.if %33 {
        %c0_20 = arith.constant 0 : index
        %c0_21 = arith.constant 0 : index
        %34 = vector.load %arg12[%c0_20, %c0_21] : memref<128x1xf32, #tpu.memory_space<vmem>>, vector<128x1xf32>
        %cst_22 = arith.constant dense<0xFF800000> : vector<128xf32>
        %35 = vector.multi_reduction <maximumf>, %27, %cst_22 [1] : vector<128x128xf32> to vector<128xf32>
        %36 = vector.shape_cast %35 : vector<128xf32> to vector<128x1xf32>
        %37 = arith.maximumf %34, %36 : vector<128x1xf32>
        %38 = arith.subf %34, %37 : vector<128x1xf32>
        %39 = math.exp %38 : vector<128x1xf32>
        %40 = vector.broadcast %37 : vector<128x1xf32> to vector<128x128xf32>
        %41 = arith.subf %27, %40 : vector<128x128xf32>
        %42 = math.exp %41 : vector<128x128xf32>
        %c0_23 = arith.constant 0 : index
        %c0_24 = arith.constant 0 : index
        %43 = vector.load %arg13[%c0_23, %c0_24] : memref<128x1xf32, #tpu.memory_space<vmem>>, vector<128x1xf32>
        %44 = arith.mulf %39, %43 : vector<128x1xf32>
        %cst_25 = arith.constant dense<0.000000e+00> : vector<128xf32>
        %45 = vector.multi_reduction <add>, %42, %cst_25 [1] : vector<128x128xf32> to vector<128xf32>
        %46 = vector.shape_cast %45 : vector<128xf32> to vector<128x1xf32>
        %47 = arith.addf %44, %46 : vector<128x1xf32>
        %c0_26 = arith.constant 0 : index
        %c0_27 = arith.constant 0 : index
        %48 = vector.load %arg13[%c0_26, %c0_27] : memref<128x1xf32, #tpu.memory_space<vmem>>, vector<128x1xf32>
        tpu.vector_store %arg13[%c0_26, %c0_27], %47 {strides = array<i32>} : memref<128x1xf32, #tpu.memory_space<vmem>>, vector<128x1xf32>,
        %c0_28 = arith.constant 0 : index
        %c0_29 = arith.constant 0 : index
        %c0_30 = arith.constant 0 : index
        %49 = vector.load %arg6[%c0_28, %c0_29, %c0_30] : memref<1x128x128xf32, #tpu.memory_space<vmem>>, vector<1x128x128xf32>
        %50 = vector.shape_cast %49 : vector<1x128x128xf32> to vector<128x128xf32>
        %cst_31 = arith.constant dense<0.000000e+00> : vector<128x128xf32>
        %51 = tpu.matmul %42, %50, %cst_31 {dimension_numbers = #tpu.dot_dimension_numbers<[1], [0], [0], [1], [0, 0, 1, 1], [], []>} : vector<128x128xf32>, vector<128x128xf32>, vector<128x128xf32> -> vector<128x128xf32>
        %c0_32 = arith.constant 0 : index
        %c0_33 = arith.constant 0 : index
        %52 = vector.load %arg14[%c0_32, %c0_33] : memref<128x128xf32, #tpu.memory_space<vmem>>, vector<128x128xf32>
        %53 = vector.broadcast %39 : vector<128x1xf32> to vector<128x128xf32>
        %54 = arith.mulf %53, %52 : vector<128x128xf32>
        %55 = arith.addf %54, %51 : vector<128x128xf32>
        %c0_34 = arith.constant 0 : index
        %c0_35 = arith.constant 0 : index
        %56 = vector.load %arg14[%c0_34, %c0_35] : memref<128x128xf32, #tpu.memory_space<vmem>>, vector<128x128xf32>
        tpu.vector_store %arg14[%c0_34, %c0_35], %55 {strides = array<i32>} : memref<128x128xf32, #tpu.memory_space<vmem>>, vector<128x128xf32>,
        %c0_36 = arith.constant 0 : index
        %c0_37 = arith.constant 0 : index
        %57 = vector.load %arg12[%c0_36, %c0_37] : memref<128x1xf32, #tpu.memory_space<vmem>>, vector<128x1xf32>
        tpu.vector_store %arg12[%c0_36, %c0_37], %37 {strides = array<i32>} : memref<128x1xf32, #tpu.memory_space<vmem>>, vector<128x1xf32>,
      } else {
      }
    } else {
    }
    %c1_i32 = arith.constant 1 : i32
    %6 = arith.cmpi eq, %arg3, %c1_i32 : i32
    %7 = arith.extui %6 : i1 to i32
    %c0_i32_2 = arith.constant 0 : i32
    %8 = arith.cmpi ne, %7, %c0_i32_2 : i32
    scf.if %8 {
      %c0 = arith.constant 0 : index
      %c0_3 = arith.constant 0 : index
      %9 = vector.load %arg13[%c0, %c0_3] : memref<128x1xf32, #tpu.memory_space<vmem>>, vector<128x1xf32>
      %cst = arith.constant 1.000000e+00 : f32
      %10 = vector.broadcast %cst : f32 to vector<128x1xf32>
      %11 = arith.divf %10, %9 : vector<128x1xf32>
      %c0_4 = arith.constant 0 : index
      %c0_5 = arith.constant 0 : index
      %12 = vector.load %arg14[%c0_4, %c0_5] : memref<128x128xf32, #tpu.memory_space<vmem>>, vector<128x128xf32>
      %13 = vector.broadcast %11 : vector<128x1xf32> to vector<128x128xf32>
      %14 = arith.mulf %12, %13 : vector<128x128xf32>
      %c0_6 = arith.constant 0 : index
      %c0_7 = arith.constant 0 : index
      %c0_8 = arith.constant 0 : index
      %15 = vector.load %arg11[%c0_6, %c0_7, %c0_8] : memref<1x128x128xf32, #tpu.memory_space<vmem>>, vector<1x128x128xf32>
      %16 = vector.shape_cast %15 : vector<1x128x128xf32> to vector<128x128xf32>
      %17 = vector.shape_cast %14 : vector<128x128xf32> to vector<1x128x128xf32>
      tpu.vector_store %arg11[%c0_6, %c0_7, %c0_8], %17 {strides = array<i32>} : memref<1x128x128xf32, #tpu.memory_space<vmem>>, vector<1x128x128xf32>,
    } else {
    }
    return
  }
  func.func @transform_0(%arg0: i32, %arg1: i32, %arg2: i32, %arg3: i32) -> (i32, i32, i32) {
    %c0_i32 = arith.constant 0 : i32
    return %arg0, %arg2, %arg1 : i32, i32, i32
  }
  func.func @transform_1(%arg0: i32, %arg1: i32, %arg2: i32, %arg3: i32) -> (i32, i32, i32) {
    %0 = arith.minsi %arg3, %arg2 : i32
    %c2_i32 = arith.constant 2 : i32
    %1 = arith.addi %c2_i32, %arg1 : i32
    %c0_i32 = arith.constant 0 : i32
    return %arg0, %0, %1 : i32, i32, i32
  }
  func.func @transform_2(%arg0: i32, %arg1: i32, %arg2: i32, %arg3: i32) -> (i32, i32, i32) {
    %0 = arith.minsi %arg3, %arg2 : i32
    %c4_i32 = arith.constant 4 : i32
    %1 = arith.addi %c4_i32, %arg1 : i32
    %c0_i32 = arith.constant 0 : i32
    return %arg0, %0, %1 : i32, i32, i32
  }
  func.func @transform_3(%arg0: i32, %arg1: i32, %arg2: i32, %arg3: i32) -> (i32, i32) {
    %c0_i32 = arith.constant 0 : i32
    %c0_i32_0 = arith.constant 0 : i32
    return %arg2, %c0_i32 : i32, i32
  }
  func.func @transform_4(%arg0: i32, %arg1: i32, %arg2: i32, %arg3: i32) -> (i32, i32) {
    %c0_i32 = arith.constant 0 : i32
    %c0_i32_0 = arith.constant 0 : i32
    return %arg2, %c0_i32 : i32, i32
  }
  func.func @transform_5(%arg0: i32, %arg1: i32, %arg2: i32, %arg3: i32) -> (i32, i32) {
    %0 = arith.minsi %arg3, %arg2 : i32
    %c0_i32 = arith.constant 0 : i32
    %c0_i32_0 = arith.constant 0 : i32
    return %0, %c0_i32 : i32, i32
  }
  func.func @transform_6(%arg0: i32, %arg1: i32, %arg2: i32, %arg3: i32) -> (i32, i32) {
    %0 = arith.minsi %arg3, %arg2 : i32
    %c0_i32 = arith.constant 0 : i32
    %c0_i32_0 = arith.constant 0 : i32
    return %0, %c0_i32 : i32, i32
  }
  func.func @transform_7(%arg0: i32, %arg1: i32, %arg2: i32, %arg3: i32) -> (i32, i32, i32) {
    %c0_i32 = arith.constant 0 : i32
    return %arg0, %arg2, %arg1 : i32, i32, i32
  }
}

module attributes {stable_mosaic.version = 11 : i64} {
  func.func @linear_kernel(%arg0: i32, %arg1: i32, %arg2: i32, %arg3: memref<256x256xf32, #tpu.memory_space<vmem>>, %arg4: memref<256x256xf32, #tpu.memory_space<vmem>>, %arg5: memref<256x256xf32, #tpu.memory_space<vmem>>, %arg6: memref<256x256xf32, #tpu.memory_space<vmem>>) attributes {dimension_semantics = [#tpu.dimension_semantics<parallel>, #tpu.dimension_semantics<parallel>, #tpu.dimension_semantics<arbitrary>], iteration_bounds = array<i64: 2, 1, 1>, scalar_prefetch = 0 : i64, scratch_operands = 1 : i64, tpu.core_type = #tpu.core_type<tc>, window_params = [{transform_indices = @transform_0, window_bounds = array<i64: 256, 256>}, {transform_indices = @transform_1, window_bounds = array<i64: 256, 256>}, {transform_indices = @transform_2, window_bounds = array<i64: 256, 256>}]} {
    %c0_i32 = arith.constant 0 : i32
    %0 = arith.cmpi eq, %arg2, %c0_i32 : i32
    %1 = arith.extui %0 : i1 to i32
    %c0_i32_0 = arith.constant 0 : i32
    %2 = arith.cmpi ne, %1, %c0_i32_0 : i32
    scf.if %2 {
      %cst_10 = arith.constant 0.000000e+00 : f32
      %12 = vector.broadcast %cst_10 : f32 to vector<256x256xf32>
      %c0_11 = arith.constant 0 : index
      %c0_12 = arith.constant 0 : index
      %13 = vector.load %arg6[%c0_11, %c0_12] : memref<256x256xf32, #tpu.memory_space<vmem>>, vector<256x256xf32>
      tpu.vector_store %arg6[%c0_11, %c0_12], %12 {strides = array<i32>} : memref<256x256xf32, #tpu.memory_space<vmem>>, vector<256x256xf32>,
    } else {
    }
    %c0 = arith.constant 0 : index
    %c0_1 = arith.constant 0 : index
    %3 = vector.load %arg6[%c0, %c0_1] : memref<256x256xf32, #tpu.memory_space<vmem>>, vector<256x256xf32>
    %c0_2 = arith.constant 0 : index
    %c0_3 = arith.constant 0 : index
    %4 = vector.load %arg3[%c0_2, %c0_3] : memref<256x256xf32, #tpu.memory_space<vmem>>, vector<256x256xf32>
    %c0_4 = arith.constant 0 : index
    %c0_5 = arith.constant 0 : index
    %5 = vector.load %arg4[%c0_4, %c0_5] : memref<256x256xf32, #tpu.memory_space<vmem>>, vector<256x256xf32>
    %cst = arith.constant dense<0.000000e+00> : vector<256x256xf32>
    %6 = tpu.matmul %4, %5, %cst {dimension_numbers = #tpu.dot_dimension_numbers<[1], [1], [0], [0], [0, 0, 1, 0], [], []>} : vector<256x256xf32>, vector<256x256xf32>, vector<256x256xf32> -> vector<256x256xf32>
    %7 = arith.addf %3, %6 : vector<256x256xf32>
    %c0_6 = arith.constant 0 : index
    %c0_7 = arith.constant 0 : index
    %8 = vector.load %arg6[%c0_6, %c0_7] : memref<256x256xf32, #tpu.memory_space<vmem>>, vector<256x256xf32>
    tpu.vector_store %arg6[%c0_6, %c0_7], %7 {strides = array<i32>} : memref<256x256xf32, #tpu.memory_space<vmem>>, vector<256x256xf32>,
    %c0_i32_8 = arith.constant 0 : i32
    %9 = arith.cmpi eq, %arg2, %c0_i32_8 : i32
    %10 = arith.extui %9 : i1 to i32
    %c0_i32_9 = arith.constant 0 : i32
    %11 = arith.cmpi ne, %10, %c0_i32_9 : i32
    scf.if %11 {
      %c0_10 = arith.constant 0 : index
      %c0_11 = arith.constant 0 : index
      %12 = vector.load %arg6[%c0_10, %c0_11] : memref<256x256xf32, #tpu.memory_space<vmem>>, vector<256x256xf32>
      %c0_12 = arith.constant 0 : index
      %c0_13 = arith.constant 0 : index
      %13 = vector.load %arg5[%c0_12, %c0_13] : memref<256x256xf32, #tpu.memory_space<vmem>>, vector<256x256xf32>
      tpu.vector_store %arg5[%c0_12, %c0_13], %12 {strides = array<i32>} : memref<256x256xf32, #tpu.memory_space<vmem>>, vector<256x256xf32>,
    } else {
    }
    return
  }
  func.func @transform_0(%arg0: i32, %arg1: i32, %arg2: i32) -> (i32, i32) {
    %c0_i32 = arith.constant 0 : i32
    return %arg0, %arg2 : i32, i32
  }
  func.func @transform_1(%arg0: i32, %arg1: i32, %arg2: i32) -> (i32, i32) {
    %c0_i32 = arith.constant 0 : i32
    return %arg1, %arg2 : i32, i32
  }
  func.func @transform_2(%arg0: i32, %arg1: i32, %arg2: i32) -> (i32, i32) {
    %c0_i32 = arith.constant 0 : i32
    return %arg0, %arg1 : i32, i32
  }
}

</mosaic_0001>

<llo_original>
// kernel: attention_forward.3
$region0: #{attention_forward.3}
  #allocation0 [shape = 'u32[]', space=smem, size = 0x4, offset = 0x4, fixed_abs, tag = 'smem constant byte address 0x4 - core index']
  #allocation1 [shape = 'u32[144,128]{1,0:T(1,128)}', space=vmem, size = 0x12000, scoped, tag = 'internal scratch']
  #allocation2 [shape = 'f32[256,256]{1,0:T(8,128)}', space=vmem, size = 0x40000, scoped, tag = 'scratch operand']
  %s0 = inlined_call_operand.hbm [shape: f32[512,256], index: 0, kind: input, shape index: {}]
  %s1 = inlined_call_operand.hbm [shape: f32[768,256], index: 1, kind: input, shape index: {}]
  %s2 = inlined_call_operand.vmem [shape: f32[512,768], index: 2, kind: output, shape index: {}]
  %s3 = sld [smem:[#allocation0]]
  $region76: #{attention_forward.3} parent=0
    _
  %s5 = ssub.s32 1, %s3
  %s6 = scalar_select 0, %s5, %s3
  $region1: #{attention_forward.3} parent=0
    #allocation3 [shape = 'u8[524288]{0}', space=vmem, size = 0x80000, scoped, tag = 'input window, operand 0']
    #allocation4 [shape = 's32[2]{0}', space=sflag, size = 0x8, scoped, tag = 'scoped memory for attention_forward.3']
    #allocation5 [shape = 'u8[524288]{0}', space=vmem, size = 0x80000, scoped, tag = 'input window, operand 1']
    #allocation6 [shape = 's32[2]{0}', space=sflag, size = 0x8, scoped, tag = 'scoped memory for attention_forward.3']
    #allocation7 [shape = 'u8[524288]{0}', space=vmem, size = 0x80000, scoped, tag = 'output window, operand 0']
    %7 = vsyncpa [#allocation4], 0
    %s8 = scalar_lea.sflag [#allocation4], 1
    %9 = vsyncpa %s8, 0
    %10 = vsyncpa [#allocation6], 0
    %s11 = scalar_lea.sflag [#allocation6], 1
    %12 = vsyncpa %s11, 0
    loop: start=0, step=1, limit=8
    $region2: #{attention_forward.3} parent=1 // loop_pre_header
      _
    $region3: #{attention_forward.3} parent=1 // loop_header
      %s14 = sphi 0, %s18
      %p15 = scmp.ge.s32.totalorder %s14, 8
      %s21 = sphi 0, %s40
      %s22 = sphi 0, %s36
      %s23 = sphi 0, %s32
      %s24 = sphi 0, %s21
      %s25 = sphi 0, %s22
      %s26 = sphi 0, %s23
      %s27 = sphi 0, %s24
      %s28 = sphi 0, %s25
      %s29 = sphi 0, %s26
      %s45 = sphi 0, %s47
      %s48 = sphi 0, %s45
      %s49 = sphi 0, %s48
      %s65 = sphi 0, %s49
      %s73 = sphi 0, %s75
      %s76 = sphi 0, %s73
      %s77 = sphi 0, %s76
      %s93 = sphi 0, %s77
      %s101 = sphi 0, %s103
      %s104 = sphi 0, %s101
      %s105 = sphi 0, %s104
      %s121 = sphi 0, %s105
    $region4: #{attention_forward.3} parent=1 // loop_header_branch
      %17 = sbr.rel (%p15) target = $region8
    $region5: #{attention_forward.3} parent=1 // loop_body
      %s19 = ssub.s32 %s14, 1
      %s20 = ssub.s32 %s14, 2
      %s30 = sadd.s32 1, %s23
      %p31 = scmp.ge.s32.totalorder %s30, 1
      %s32 = scalar_select %p31, 0, %s30
      %s33 = sadd.s32 1, %s22
      %s34 = scalar_select %p31, %s33, %s22
      %p35 = scmp.ge.s32.totalorder %s34, 3
      %s36 = scalar_select %p35, 0, %s34
      %s37 = sadd.s32 1, %s21
      %s38 = scalar_select %p35, %s37, %s21
      %p39 = scmp.ge.s32.totalorder %s38, 2
      %s40 = scalar_select %p39, 0, %s38
      %s41 = ssub.s32 %s21, %s40
      %s42 = ssub.s32 %s23, %s32
      %s43 = sor.u32 %s41, %s42
      %p44 = scmp.eq.s32.totalorder %s43, 0
      %s46 = sadd.s32 %s45, 1
      %s47 = scalar_select %p44, %s45, %s46
      %p50 = pneg %p44
      %p51 = scmp.eq.s32.totalorder %s14, 5
      %p52 = por %p50, %p51
      %p53 = scmp.ne.s32.totalorder %s45, %s48
      %p54 = scmp.eq.s32.totalorder %s14, 0
      %p55 = por %p53, %p54
      %p56 = scmp.ne.s32.totalorder %s45, %s48
      %p57 = scmp.eq.s32.totalorder %s19, 5
      %p58 = por %p56, %p57
      %p59 = scmp.ne.s32.totalorder %s48, %s49
      %p60 = scmp.eq.s32.totalorder %s19, 0
      %p61 = por %p59, %p60
      %p62 = scmp.ne.s32.totalorder %s48, %s49
      %p63 = scmp.eq.s32.totalorder %s20, 5
      %p64 = por %p62, %p63
      %p66 = scmp.ne.s32.totalorder %s49, %s65
      %p67 = scmp.eq.s32.totalorder %s20, 0
      %p68 = por %p66, %p67
      %s69 = ssub.s32 %s22, %s36
      %s70 = ssub.s32 %s23, %s32
      %s71 = sor.u32 %s69, %s70
      %p72 = scmp.eq.s32.totalorder %s71, 0
      %s74 = sadd.s32 %s73, 1
      %s75 = scalar_select %p72, %s73, %s74
      %p78 = pneg %p72
      %p79 = scmp.eq.s32.totalorder %s14, 5
      %p80 = por %p78, %p79
      %p81 = scmp.ne.s32.totalorder %s73, %s76
      %p82 = scmp.eq.s32.totalorder %s14, 0
      %p83 = por %p81, %p82
      %p84 = scmp.ne.s32.totalorder %s73, %s76
      %p85 = scmp.eq.s32.totalorder %s19, 5
      %p86 = por %p84, %p85
      %p87 = scmp.ne.s32.totalorder %s76, %s77
      %p88 = scmp.eq.s32.totalorder %s19, 0
      %p89 = por %p87, %p88
      %p90 = scmp.ne.s32.totalorder %s76, %s77
      %p91 = scmp.eq.s32.totalorder %s20, 5
      %p92 = por %p90, %p91
      %p94 = scmp.ne.s32.totalorder %s77, %s93
      %p95 = scmp.eq.s32.totalorder %s20, 0
      %p96 = por %p94, %p95
      %s97 = ssub.s32 %s21, %s40
      %s98 = ssub.s32 %s22, %s36
      %s99 = sor.u32 %s97, %s98
      %p100 = scmp.eq.s32.totalorder %s99, 0
      %s102 = sadd.s32 %s101, 1
      %s103 = scalar_select %p100, %s101, %s102
      %p106 = pneg %p100
      %p107 = scmp.eq.s32.totalorder %s14, 5
      %p108 = por %p106, %p107
      %p109 = scmp.ne.s32.totalorder %s101, %s104
      %p110 = scmp.eq.s32.totalorder %s14, 0
      %p111 = por %p109, %p110
      %p112 = scmp.ne.s32.totalorder %s101, %s104
      %p113 = scmp.eq.s32.totalorder %s19, 5
      %p114 = por %p112, %p113
      %p115 = scmp.ne.s32.totalorder %s104, %s105
      %p116 = scmp.eq.s32.totalorder %s19, 0
      %p117 = por %p115, %p116
      %p118 = scmp.ne.s32.totalorder %s104, %s105
      %p119 = scmp.eq.s32.totalorder %s20, 5
      %p120 = por %p118, %p119
      %p122 = scmp.ne.s32.totalorder %s105, %s121
      %p123 = scmp.eq.s32.totalorder %s20, 0
      %p124 = por %p122, %p123
      %p125 = scmp.le.s32.totalorder 1, %s14
      %p126 = scmp.lt.s32.totalorder %s14, 7
      %p127 = pnand %p125, %p126
      %p128 = pneg %p127
      // Predicated region
      $region9: #{attention_forward.3} parent=5 // pred_check
        _
      $region10: #{attention_forward.3} parent=5 // pred_check_branch
        %130 = sbr.rel (%p127) target = $region12
      $region11: #{attention_forward.3} parent=5 // pred_region
        %s131 = ssub.s32 %s14, 1
      $region12: #{attention_forward.3} parent=5 // pred_fallthru
        _
      %p132 = scmp.lt.s32.totalorder %s14, 6
      // Predicated region
      $region13: #{attention_forward.3} parent=5 // pred_check
        %p133 = pneg %p132
      $region14: #{attention_forward.3} parent=5 // pred_check_branch
        %135 = sbr.rel (%p133) target = $region16
      $region15: #{attention_forward.3} parent=5 // pred_region
        // Predicated region
        $region17: #{attention_forward.3} parent=15 // pred_check
          %p136 = pneg %p55
        $region18: #{attention_forward.3} parent=15 // pred_check_branch
          %138 = sbr.rel (%p136) target = $region20
        $region19: #{attention_forward.3} parent=15 // pred_region
          %s139 = sand.u32 %s45, 1
          %s140 = scalar_lea.sflag [#allocation4], %s139
          %s141 = sand.u32 %s45, 1
          %s142 = smul.addr %s141, 512
          %s143 = scalar_lea.vmem [#allocation3], %s142
          %s144 = smul.u32 32, %s21
          %s145 = smul.u32 2, %s23
          %s147 = ssub.s32 8192, 8192
          %148 = vsyncadd %s140, %s147
          %s149 = smul.addr %s144, 2
          %s150 = sadd.s32 %s145, %s149
          %s151 = smul.addr %s150, 128
          %s152 = scalar_lea.hbm %s0, %s151
          %s153 = sshll.u32 %s143, 4
          %s154 = int_to_ptr.vmem [resolvable:$true] %s153
          %159 = dma.hbm_to_vmem [thread:$0]  %s152, 8192, %s154, %s140, 256, 256, 16
        $region20: #{attention_forward.3} parent=15 // pred_fallthru
          _
        // Predicated region
        $region21: #{attention_forward.3} parent=15 // pred_check
          %p160 = pneg %p83
        $region22: #{attention_forward.3} parent=15 // pred_check_branch
          %162 = sbr.rel (%p160) target = $region24
        $region23: #{attention_forward.3} parent=15 // pred_region
          %s163 = sand.u32 %s73, 1
          %s164 = scalar_lea.sflag [#allocation6], %s163
          %s165 = sand.u32 %s73, 1
          %s166 = smul.addr %s165, 512
          %s167 = scalar_lea.vmem [#allocation5], %s166
          %s168 = smul.u32 32, %s22
          %s169 = smul.u32 2, %s23
          %s171 = ssub.s32 8192, 8192
          %172 = vsyncadd %s164, %s171
          %s173 = smul.addr %s168, 2
          %s174 = sadd.s32 %s169, %s173
          %s175 = smul.addr %s174, 128
          %s176 = scalar_lea.hbm %s1, %s175
          %s177 = sshll.u32 %s167, 4
          %s178 = int_to_ptr.vmem [resolvable:$true] %s177
          %183 = dma.hbm_to_vmem [thread:$0]  %s176, 8192, %s178, %s164, 256, 256, 16
        $region24: #{attention_forward.3} parent=15 // pred_fallthru
          _
      $region16: #{attention_forward.3} parent=5 // pred_fallthru
        _
      %p184 = scmp.le.s32.totalorder 1, %s14
      %p185 = scmp.lt.s32.totalorder %s14, 7
      %p186 = pnand %p184, %p185
      %p187 = pneg %p186
      // Predicated region
      $region25: #{attention_forward.3} parent=5 // pred_check
        _
      $region26: #{attention_forward.3} parent=5 // pred_check_branch
        %189 = sbr.rel (%p186) target = $region28
      $region27: #{attention_forward.3} parent=5 // pred_region
        %s190 = ssub.s32 %s14, 1
        %s191 = sand.u32 %s48, 1
        %s192 = scalar_lea.sflag [#allocation4], %s191
        %s193 = sand.u32 %s48, 1
        %s194 = smul.addr %s193, 512
        %s195 = scalar_lea.vmem [#allocation3], %s194
        // Predicated region
        $region29: #{attention_forward.3} parent=27 // pred_check
          %p196 = pneg %p61
        $region30: #{attention_forward.3} parent=27 // pred_check_branch
          %198 = sbr.rel (%p196) target = $region32
        $region31: #{attention_forward.3} parent=27 // pred_region
          %199 = dma.done %s192, 8192
        $region32: #{attention_forward.3} parent=27 // pred_fallthru
          _
        %s200 = sand.u32 %s76, 1
        %s201 = scalar_lea.sflag [#allocation6], %s200
        %s202 = sand.u32 %s76, 1
        %s203 = smul.addr %s202, 512
        %s204 = scalar_lea.vmem [#allocation5], %s203
        // Predicated region
        $region33: #{attention_forward.3} parent=27 // pred_check
          %p205 = pneg %p89
        $region34: #{attention_forward.3} parent=27 // pred_check_branch
          %207 = sbr.rel (%p205) target = $region36
        $region35: #{attention_forward.3} parent=27 // pred_region
          %208 = dma.done %s201, 8192
        $region36: #{attention_forward.3} parent=27 // pred_fallthru
          _
        %s209 = sand.u32 %s48, 1
        %s210 = scalar_lea.sflag [#allocation4], %s209
        %s211 = sand.u32 %s48, 1
        %s212 = smul.addr %s211, 512
        %s213 = scalar_lea.vmem [#allocation3], %s212
        %p214 = pneg %p61
        %p215 = pneg %p58
        %s216 = sand.u32 %s76, 1
        %s217 = scalar_lea.sflag [#allocation6], %s216
        %s218 = sand.u32 %s76, 1
        %s219 = smul.addr %s218, 512
        %s220 = scalar_lea.vmem [#allocation5], %s219
        %p221 = pneg %p89
        %p222 = pneg %p86
        %p223 = pneg %p117
        %p224 = pneg %p114
        %s225 = sand.u32 %s104, 1
        %s226 = sand.u32 %s104, 1
        %s227 = smul.addr %s226, 512
        %s228 = scalar_lea.vmem [#allocation7], %s227
        %s229 = smul.u32 32, %s24
        %s230 = smul.u32 2, %s26
        %s231 = smul.u32 32, %s25
        %s232 = smul.u32 2, %s26
        %s233 = smul.u32 32, %s24
        %s234 = smul.u32 2, %s25
        %p235 = scmp.eq.s32.totalorder %s26, 0
        // Predicated region
        $region37: #{attention_forward.3} parent=27 // pred_check
          %p236 = pneg %p235
        $region38: #{attention_forward.3} parent=27 // pred_check_branch
          %238 = sbr.rel (%p236) target = $region40
        $region39: #{attention_forward.3} parent=27 // pred_region
          %239 = vst [vmem:[#allocation2] sm:$0xff] 0.0
          %240 = vst [vmem:[#allocation2 + $0x8] sm:$0xff] 0.0
          %241 = vst [vmem:[#allocation2 + $0x10] sm:$0xff] 0.0
          %242 = vst [vmem:[#allocation2 + $0x18] sm:$0xff] 0.0
          %243 = vst [vmem:[#allocation2 + $0x20] sm:$0xff] 0.0
          %244 = vst [vmem:[#allocation2 + $0x28] sm:$0xff] 0.0
          %245 = vst [vmem:[#allocation2 + $0x30] sm:$0xff] 0.0
          %246 = vst [vmem:[#allocation2 + $0x38] sm:$0xff] 0.0
          %247 = vst [vmem:[#allocation2 + $0x40] sm:$0xff] 0.0
          %248 = vst [vmem:[#allocation2 + $0x48] sm:$0xff] 0.0
          %249 = vst [vmem:[#allocation2 + $0x50] sm:$0xff] 0.0
          %250 = vst [vmem:[#allocation2 + $0x58] sm:$0xff] 0.0
          %251 = vst [vmem:[#allocation2 + $0x60] sm:$0xff] 0.0
          %252 = vst [vmem:[#allocation2 + $0x68] sm:$0xff] 0.0
          %253 = vst [vmem:[#allocation2 + $0x70] sm:$0xff] 0.0
          %254 = vst [vmem:[#allocation2 + $0x78] sm:$0xff] 0.0
          %255 = vst [vmem:[#allocation2 + $0x80] sm:$0xff] 0.0
          %256 = vst [vmem:[#allocation2 + $0x88] sm:$0xff] 0.0
          %257 = vst [vmem:[#allocation2 + $0x90] sm:$0xff] 0.0
          %258 = vst [vmem:[#allocation2 + $0x98] sm:$0xff] 0.0
          %259 = vst [vmem:[#allocation2 + $0xa0] sm:$0xff] 0.0
          %260 = vst [vmem:[#allocation2 + $0xa8] sm:$0xff] 0.0
          %261 = vst [vmem:[#allocation2 + $0xb0] sm:$0xff] 0.0
          %262 = vst [vmem:[#allocation2 + $0xb8] sm:$0xff] 0.0
          %263 = vst [vmem:[#allocation2 + $0xc0] sm:$0xff] 0.0
          %264 = vst [vmem:[#allocation2 + $0xc8] sm:$0xff] 0.0
          %265 = vst [vmem:[#allocation2 + $0xd0] sm:$0xff] 0.0
          %266 = vst [vmem:[#allocation2 + $0xd8] sm:$0xff] 0.0
          %267 = vst [vmem:[#allocation2 + $0xe0] sm:$0xff] 0.0
          %268 = vst [vmem:[#allocation2 + $0xe8] sm:$0xff] 0.0
          %269 = vst [vmem:[#allocation2 + $0xf0] sm:$0xff] 0.0
          %270 = vst [vmem:[#allocation2 + $0xf8] sm:$0xff] 0.0
          %271 = vst [vmem:[#allocation2 + $0x100] sm:$0xff] 0.0
          %272 = vst [vmem:[#allocation2 + $0x108] sm:$0xff] 0.0
          %273 = vst [vmem:[#allocation2 + $0x110] sm:$0xff] 0.0
          %274 = vst [vmem:[#allocation2 + $0x118] sm:$0xff] 0.0
          %275 = vst [vmem:[#allocation2 + $0x120] sm:$0xff] 0.0
          %276 = vst [vmem:[#allocation2 + $0x128] sm:$0xff] 0.0
          %277 = vst [vmem:[#allocation2 + $0x130] sm:$0xff] 0.0
          %278 = vst [vmem:[#allocation2 + $0x138] sm:$0xff] 0.0
          %279 = vst [vmem:[#allocation2 + $0x140] sm:$0xff] 0.0
          %280 = vst [vmem:[#allocation2 + $0x148] sm:$0xff] 0.0
          %281 = vst [vmem:[#allocation2 + $0x150] sm:$0xff] 0.0
          %282 = vst [vmem:[#allocation2 + $0x158] sm:$0xff] 0.0
          %283 = vst [vmem:[#allocation2 + $0x160] sm:$0xff] 0.0
          %284 = vst [vmem:[#allocation2 + $0x168] sm:$0xff] 0.0
          %285 = vst [vmem:[#allocation2 + $0x170] sm:$0xff] 0.0
          %286 = vst [vmem:[#allocation2 + $0x178] sm:$0xff] 0.0
          %287 = vst [vmem:[#allocation2 + $0x180] sm:$0xff] 0.0
          %288 = vst [vmem:[#allocation2 + $0x188] sm:$0xff] 0.0
          %289 = vst [vmem:[#allocation2 + $0x190] sm:$0xff] 0.0
          %290 = vst [vmem:[#allocation2 + $0x198] sm:$0xff] 0.0
          %291 = vst [vmem:[#allocation2 + $0x1a0] sm:$0xff] 0.0
          %292 = vst [vmem:[#allocation2 + $0x1a8] sm:$0xff] 0.0
          %293 = vst [vmem:[#allocation2 + $0x1b0] sm:$0xff] 0.0
          %294 = vst [vmem:[#allocation2 + $0x1b8] sm:$0xff] 0.0
          %295 = vst [vmem:[#allocation2 + $0x1c0] sm:$0xff] 0.0
          %296 = vst [vmem:[#allocation2 + $0x1c8] sm:$0xff] 0.0
          %297 = vst [vmem:[#allocation2 + $0x1d0] sm:$0xff] 0.0
          %298 = vst [vmem:[#allocation2 + $0x1d8] sm:$0xff] 0.0
          %299 = vst [vmem:[#allocation2 + $0x1e0] sm:$0xff] 0.0
          %300 = vst [vmem:[#allocation2 + $0x1e8] sm:$0xff] 0.0
          %301 = vst [vmem:[#allocation2 + $0x1f0] sm:$0xff] 0.0
          %302 = vst [vmem:[#allocation2 + $0x1f8] sm:$0xff] 0.0
        $region40: #{attention_forward.3} parent=27 // pred_fallthru
          _
        %v303 = vld [vmem:[#allocation2] sm:$0xff]
        %v304 = vld [vmem:[#allocation2 + $0x8] sm:$0xff]
        %v305 = vld [vmem:[#allocation2 + $0x10] sm:$0xff]
        %v306 = vld [vmem:[#allocation2 + $0x18] sm:$0xff]
        %v307 = vld [vmem:[#allocation2 + $0x20] sm:$0xff]
        %v308 = vld [vmem:[#allocation2 + $0x28] sm:$0xff]
        %v309 = vld [vmem:[#allocation2 + $0x30] sm:$0xff]
        %v310 = vld [vmem:[#allocation2 + $0x38] sm:$0xff]
        %v311 = vld [vmem:[#allocation2 + $0x40] sm:$0xff]
        %v312 = vld [vmem:[#allocation2 + $0x48] sm:$0xff]
        %v313 = vld [vmem:[#allocation2 + $0x50] sm:$0xff]
        %v314 = vld [vmem:[#allocation2 + $0x58] sm:$0xff]
        %v315 = vld [vmem:[#allocation2 + $0x60] sm:$0xff]
        %v316 = vld [vmem:[#allocation2 + $0x68] sm:$0xff]
        %v317 = vld [vmem:[#allocation2 + $0x70] sm:$0xff]
        %v318 = vld [vmem:[#allocation2 + $0x78] sm:$0xff]
        %v319 = vld [vmem:[#allocation2 + $0x80] sm:$0xff]
        %v320 = vld [vmem:[#allocation2 + $0x88] sm:$0xff]
        %v321 = vld [vmem:[#allocation2 + $0x90] sm:$0xff]
        %v322 = vld [vmem:[#allocation2 + $0x98] sm:$0xff]
        %v323 = vld [vmem:[#allocation2 + $0xa0] sm:$0xff]
        %v324 = vld [vmem:[#allocation2 + $0xa8] sm:$0xff]
        %v325 = vld [vmem:[#allocation2 + $0xb0] sm:$0xff]
        %v326 = vld [vmem:[#allocation2 + $0xb8] sm:$0xff]
        %v327 = vld [vmem:[#allocation2 + $0xc0] sm:$0xff]
        %v328 = vld [vmem:[#allocation2 + $0xc8] sm:$0xff]
        %v329 = vld [vmem:[#allocation2 + $0xd0] sm:$0xff]
        %v330 = vld [vmem:[#allocation2 + $0xd8] sm:$0xff]
        %v331 = vld [vmem:[#allocation2 + $0xe0] sm:$0xff]
        %v332 = vld [vmem:[#allocation2 + $0xe8] sm:$0xff]
        %v333 = vld [vmem:[#allocation2 + $0xf0] sm:$0xff]
        %v334 = vld [vmem:[#allocation2 + $0xf8] sm:$0xff]
        %v335 = vld [vmem:[#allocation2 + $0x100] sm:$0xff]
        %v336 = vld [vmem:[#allocation2 + $0x108] sm:$0xff]
        %v337 = vld [vmem:[#allocation2 + $0x110] sm:$0xff]
        %v338 = vld [vmem:[#allocation2 + $0x118] sm:$0xff]
        %v339 = vld [vmem:[#allocation2 + $0x120] sm:$0xff]
        %v340 = vld [vmem:[#allocation2 + $0x128] sm:$0xff]
        %v341 = vld [vmem:[#allocation2 + $0x130] sm:$0xff]
        %v342 = vld [vmem:[#allocation2 + $0x138] sm:$0xff]
        %v343 = vld [vmem:[#allocation2 + $0x140] sm:$0xff]
        %v344 = vld [vmem:[#allocation2 + $0x148] sm:$0xff]
        %v345 = vld [vmem:[#allocation2 + $0x150] sm:$0xff]
        %v346 = vld [vmem:[#allocation2 + $0x158] sm:$0xff]
        %v347 = vld [vmem:[#allocation2 + $0x160] sm:$0xff]
        %v348 = vld [vmem:[#allocation2 + $0x168] sm:$0xff]
        %v349 = vld [vmem:[#allocation2 + $0x170] sm:$0xff]
        %v350 = vld [vmem:[#allocation2 + $0x178] sm:$0xff]
        %v351 = vld [vmem:[#allocation2 + $0x180] sm:$0xff]
        %v352 = vld [vmem:[#allocation2 + $0x188] sm:$0xff]
        %v353 = vld [vmem:[#allocation2 + $0x190] sm:$0xff]
        %v354 = vld [vmem:[#allocation2 + $0x198] sm:$0xff]
        %v355 = vld [vmem:[#allocation2 + $0x1a0] sm:$0xff]
        %v356 = vld [vmem:[#allocation2 + $0x1a8] sm:$0xff]
        %v357 = vld [vmem:[#allocation2 + $0x1b0] sm:$0xff]
        %v358 = vld [vmem:[#allocation2 + $0x1b8] sm:$0xff]
        %v359 = vld [vmem:[#allocation2 + $0x1c0] sm:$0xff]
        %v360 = vld [vmem:[#allocation2 + $0x1c8] sm:$0xff]
        %v361 = vld [vmem:[#allocation2 + $0x1d0] sm:$0xff]
        %v362 = vld [vmem:[#allocation2 + $0x1d8] sm:$0xff]
        %v363 = vld [vmem:[#allocation2 + $0x1e0] sm:$0xff]
        %v364 = vld [vmem:[#allocation2 + $0x1e8] sm:$0xff]
        %v365 = vld [vmem:[#allocation2 + $0x1f0] sm:$0xff]
        %v366 = vld [vmem:[#allocation2 + $0x1f8] sm:$0xff]
        %v367 = vld [vmem:[%s195] sm:$0xff]
        %v368 = vld [vmem:[%s195 + $0x8] sm:$0xff]
        %v369 = vld [vmem:[%s195 + $0x10] sm:$0xff]
        %v370 = vld [vmem:[%s195 + $0x18] sm:$0xff]
        %v371 = vld [vmem:[%s195 + $0x20] sm:$0xff]
        %v372 = vld [vmem:[%s195 + $0x28] sm:$0xff]
        %v373 = vld [vmem:[%s195 + $0x30] sm:$0xff]
        %v374 = vld [vmem:[%s195 + $0x38] sm:$0xff]
        %v375 = vld [vmem:[%s195 + $0x40] sm:$0xff]
        %v376 = vld [vmem:[%s195 + $0x48] sm:$0xff]
        %v377 = vld [vmem:[%s195 + $0x50] sm:$0xff]
        %v378 = vld [vmem:[%s195 + $0x58] sm:$0xff]
        %v379 = vld [vmem:[%s195 + $0x60] sm:$0xff]
        %v380 = vld [vmem:[%s195 + $0x68] sm:$0xff]
        %v381 = vld [vmem:[%s195 + $0x70] sm:$0xff]
        %v382 = vld [vmem:[%s195 + $0x78] sm:$0xff]
        %v383 = vld [vmem:[%s195 + $0x80] sm:$0xff]
        %v384 = vld [vmem:[%s195 + $0x88] sm:$0xff]
        %v385 = vld [vmem:[%s195 + $0x90] sm:$0xff]
        %v386 = vld [vmem:[%s195 + $0x98] sm:$0xff]
        %v387 = vld [vmem:[%s195 + $0xa0] sm:$0xff]
        %v388 = vld [vmem:[%s195 + $0xa8] sm:$0xff]
        %v389 = vld [vmem:[%s195 + $0xb0] sm:$0xff]
        %v390 = vld [vmem:[%s195 + $0xb8] sm:$0xff]
        %v391 = vld [vmem:[%s195 + $0xc0] sm:$0xff]
        %v392 = vld [vmem:[%s195 + $0xc8] sm:$0xff]
        %v393 = vld [vmem:[%s195 + $0xd0] sm:$0xff]
        %v394 = vld [vmem:[%s195 + $0xd8] sm:$0xff]
        %v395 = vld [vmem:[%s195 + $0xe0] sm:$0xff]
        %v396 = vld [vmem:[%s195 + $0xe8] sm:$0xff]
        %v397 = vld [vmem:[%s195 + $0xf0] sm:$0xff]
        %v398 = vld [vmem:[%s195 + $0xf8] sm:$0xff]
        %v399 = vld [vmem:[%s195 + $0x100] sm:$0xff]
        %v400 = vld [vmem:[%s195 + $0x108] sm:$0xff]
        %v401 = vld [vmem:[%s195 + $0x110] sm:$0xff]
        %v402 = vld [vmem:[%s195 + $0x118] sm:$0xff]
        %v403 = vld [vmem:[%s195 + $0x120] sm:$0xff]
        %v404 = vld [vmem:[%s195 + $0x128] sm:$0xff]
        %v405 = vld [vmem:[%s195 + $0x130] sm:$0xff]
        %v406 = vld [vmem:[%s195 + $0x138] sm:$0xff]
        %v407 = vld [vmem:[%s195 + $0x140] sm:$0xff]
        %v408 = vld [vmem:[%s195 + $0x148] sm:$0xff]
        %v409 = vld [vmem:[%s195 + $0x150] sm:$0xff]
        %v410 = vld [vmem:[%s195 + $0x158] sm:$0xff]
        %v411 = vld [vmem:[%s195 + $0x160] sm:$0xff]
        %v412 = vld [vmem:[%s195 + $0x168] sm:$0xff]
        %v413 = vld [vmem:[%s195 + $0x170] sm:$0xff]
        %v414 = vld [vmem:[%s195 + $0x178] sm:$0xff]
        %v415 = vld [vmem:[%s195 + $0x180] sm:$0xff]
        %v416 = vld [vmem:[%s195 + $0x188] sm:$0xff]
        %v417 = vld [vmem:[%s195 + $0x190] sm:$0xff]
        %v418 = vld [vmem:[%s195 + $0x198] sm:$0xff]
        %v419 = vld [vmem:[%s195 + $0x1a0] sm:$0xff]
        %v420 = vld [vmem:[%s195 + $0x1a8] sm:$0xff]
        %v421 = vld [vmem:[%s195 + $0x1b0] sm:$0xff]
        %v422 = vld [vmem:[%s195 + $0x1b8] sm:$0xff]
        %v423 = vld [vmem:[%s195 + $0x1c0] sm:$0xff]
        %v424 = vld [vmem:[%s195 + $0x1c8] sm:$0xff]
        %v425 = vld [vmem:[%s195 + $0x1d0] sm:$0xff]
        %v426 = vld [vmem:[%s195 + $0x1d8] sm:$0xff]
        %v427 = vld [vmem:[%s195 + $0x1e0] sm:$0xff]
        %v428 = vld [vmem:[%s195 + $0x1e8] sm:$0xff]
        %v429 = vld [vmem:[%s195 + $0x1f0] sm:$0xff]
        %v430 = vld [vmem:[%s195 + $0x1f8] sm:$0xff]
        %v431 = vld [vmem:[%s204] sm:$0xff]
        %v432 = vld [vmem:[%s204 + $0x8] sm:$0xff]
        %v433 = vld [vmem:[%s204 + $0x10] sm:$0xff]
        %v434 = vld [vmem:[%s204 + $0x18] sm:$0xff]
        %v435 = vld [vmem:[%s204 + $0x20] sm:$0xff]
        %v436 = vld [vmem:[%s204 + $0x28] sm:$0xff]
        %v437 = vld [vmem:[%s204 + $0x30] sm:$0xff]
        %v438 = vld [vmem:[%s204 + $0x38] sm:$0xff]
        %v439 = vld [vmem:[%s204 + $0x40] sm:$0xff]
        %v440 = vld [vmem:[%s204 + $0x48] sm:$0xff]
        %v441 = vld [vmem:[%s204 + $0x50] sm:$0xff]
        %v442 = vld [vmem:[%s204 + $0x58] sm:$0xff]
        %v443 = vld [vmem:[%s204 + $0x60] sm:$0xff]
        %v444 = vld [vmem:[%s204 + $0x68] sm:$0xff]
        %v445 = vld [vmem:[%s204 + $0x70] sm:$0xff]
        %v446 = vld [vmem:[%s204 + $0x78] sm:$0xff]
        %v447 = vld [vmem:[%s204 + $0x80] sm:$0xff]
        %v448 = vld [vmem:[%s204 + $0x88] sm:$0xff]
        %v449 = vld [vmem:[%s204 + $0x90] sm:$0xff]
        %v450 = vld [vmem:[%s204 + $0x98] sm:$0xff]
        %v451 = vld [vmem:[%s204 + $0xa0] sm:$0xff]
        %v452 = vld [vmem:[%s204 + $0xa8] sm:$0xff]
        %v453 = vld [vmem:[%s204 + $0xb0] sm:$0xff]
        %v454 = vld [vmem:[%s204 + $0xb8] sm:$0xff]
        %v455 = vld [vmem:[%s204 + $0xc0] sm:$0xff]
        %v456 = vld [vmem:[%s204 + $0xc8] sm:$0xff]
        %v457 = vld [vmem:[%s204 + $0xd0] sm:$0xff]
        %v458 = vld [vmem:[%s204 + $0xd8] sm:$0xff]
        %v459 = vld [vmem:[%s204 + $0xe0] sm:$0xff]
        %v460 = vld [vmem:[%s204 + $0xe8] sm:$0xff]
        %v461 = vld [vmem:[%s204 + $0xf0] sm:$0xff]
        %v462 = vld [vmem:[%s204 + $0xf8] sm:$0xff]
        %v463 = vld [vmem:[%s204 + $0x100] sm:$0xff]
        %v464 = vld [vmem:[%s204 + $0x108] sm:$0xff]
        %v465 = vld [vmem:[%s204 + $0x110] sm:$0xff]
        %v466 = vld [vmem:[%s204 + $0x118] sm:$0xff]
        %v467 = vld [vmem:[%s204 + $0x120] sm:$0xff]
        %v468 = vld [vmem:[%s204 + $0x128] sm:$0xff]
        %v469 = vld [vmem:[%s204 + $0x130] sm:$0xff]
        %v470 = vld [vmem:[%s204 + $0x138] sm:$0xff]
        %v471 = vld [vmem:[%s204 + $0x140] sm:$0xff]
        %v472 = vld [vmem:[%s204 + $0x148] sm:$0xff]
        %v473 = vld [vmem:[%s204 + $0x150] sm:$0xff]
        %v474 = vld [vmem:[%s204 + $0x158] sm:$0xff]
        %v475 = vld [vmem:[%s204 + $0x160] sm:$0xff]
        %v476 = vld [vmem:[%s204 + $0x168] sm:$0xff]
        %v477 = vld [vmem:[%s204 + $0x170] sm:$0xff]
        %v478 = vld [vmem:[%s204 + $0x178] sm:$0xff]
        %v479 = vld [vmem:[%s204 + $0x180] sm:$0xff]
        %v480 = vld [vmem:[%s204 + $0x188] sm:$0xff]
        %v481 = vld [vmem:[%s204 + $0x190] sm:$0xff]
        %v482 = vld [vmem:[%s204 + $0x198] sm:$0xff]
        %v483 = vld [vmem:[%s204 + $0x1a0] sm:$0xff]
        %v484 = vld [vmem:[%s204 + $0x1a8] sm:$0xff]
        %v485 = vld [vmem:[%s204 + $0x1b0] sm:$0xff]
        %v486 = vld [vmem:[%s204 + $0x1b8] sm:$0xff]
        %v487 = vld [vmem:[%s204 + $0x1c0] sm:$0xff]
        %v488 = vld [vmem:[%s204 + $0x1c8] sm:$0xff]
        %v489 = vld [vmem:[%s204 + $0x1d0] sm:$0xff]
        %v490 = vld [vmem:[%s204 + $0x1d8] sm:$0xff]
        %v491 = vld [vmem:[%s204 + $0x1e0] sm:$0xff]
        %v492 = vld [vmem:[%s204 + $0x1e8] sm:$0xff]
        %v493 = vld [vmem:[%s204 + $0x1f0] sm:$0xff]
        %v494 = vld [vmem:[%s204 + $0x1f8] sm:$0xff]
        %495 = vmatprep.subr.mxu0 %v432
        %496 = vmatpush1.xpose.msra.mxu0 %v431
        %497 = vmatprep.subr.mxu0 %v434
        %498 = vmatpush1.xpose.msra.mxu0 %v433
        %499 = vmatprep.subr.mxu0 %v436
        %500 = vmatpush1.xpose.msra.mxu0 %v435
        %501 = vmatprep.subr.mxu0 %v438
        %502 = vmatpush1.xpose.msra.mxu0 %v437
        %503 = vmatprep.subr.mxu0 %v440
        %504 = vmatpush1.xpose.msra.mxu0 %v439
        %505 = vmatprep.subr.mxu0 %v442
        %506 = vmatpush1.xpose.msra.mxu0 %v441
        %507 = vmatprep.subr.mxu0 %v444
        %508 = vmatpush1.xpose.msra.mxu0 %v443
        %509 = vmatprep.subr.mxu0 %v446
        %510 = vmatpush1.xpose.msra.mxu0 %v445
        %511 = vmatprep.subr.mxu0 %v448
        %512 = vmatpush1.xpose.msra.mxu0 %v447
        %513 = vmatprep.subr.mxu0 %v450
        %514 = vmatpush1.xpose.msra.mxu0 %v449
        %515 = vmatprep.subr.mxu0 %v452
        %516 = vmatpush1.xpose.msra.mxu0 %v451
        %517 = vmatprep.subr.mxu0 %v454
        %518 = vmatpush1.xpose.msra.mxu0 %v453
        %519 = vmatprep.subr.mxu0 %v456
        %520 = vmatpush1.xpose.msra.mxu0 %v455
        %521 = vmatprep.subr.mxu0 %v458
        %522 = vmatpush1.xpose.msra.mxu0 %v457
        %523 = vmatprep.subr.mxu0 %v460
        %524 = vmatpush1.xpose.msra.mxu0 %v459
        %525 = vmatprep.subr.mxu0 %v462
        %526 = vmatpush1.xpose.msra.mxu0 %v461
        %527 = vmatprep.subr.mxu0 %v464
        %528 = vmatpush1.xpose.msra.mxu0 %v463
        %529 = vmatprep.subr.mxu0 %v466
        %530 = vmatpush1.xpose.msra.mxu0 %v465
        %531 = vmatprep.subr.mxu0 %v468
        %532 = vmatpush1.xpose.msra.mxu0 %v467
        %533 = vmatprep.subr.mxu0 %v470
        %534 = vmatpush1.xpose.msra.mxu0 %v469
        %535 = vmatprep.subr.mxu0 %v472
        %536 = vmatpush1.xpose.msra.mxu0 %v471
        %537 = vmatprep.subr.mxu0 %v474
        %538 = vmatpush1.xpose.msra.mxu0 %v473
        %539 = vmatprep.subr.mxu0 %v476
        %540 = vmatpush1.xpose.msra.mxu0 %v475
        %541 = vmatprep.subr.mxu0 %v478
        %542 = vmatpush1.xpose.msra.mxu0 %v477
        %543 = vmatprep.subr.mxu0 %v480
        %544 = vmatpush1.xpose.msra.mxu0 %v479
        %545 = vmatprep.subr.mxu0 %v482
        %546 = vmatpush1.xpose.msra.mxu0 %v481
        %547 = vmatprep.subr.mxu0 %v484
        %548 = vmatpush1.xpose.msra.mxu0 %v483
        %549 = vmatprep.subr.mxu0 %v486
        %550 = vmatpush1.xpose.msra.mxu0 %v485
        %551 = vmatprep.subr.mxu0 %v488
        %552 = vmatpush1.xpose.msra.mxu0 %v487
        %553 = vmatprep.subr.mxu0 %v490
        %554 = vmatpush1.xpose.msra.mxu0 %v489
        %555 = vmatprep.subr.mxu0 %v492
        %556 = vmatpush1.xpose.msra.mxu0 %v491
        %557 = vmatprep.subr.mxu0 %v494
        %558 = vmatpush1.xpose.msra.mxu0 %v493
        %559 = vmatprep.mubr.f32.mxu0 %v368
        %560 = vmatmul.mubr.f32.gmra.mrb[0].mxu0 %v367
        %v561 = vpop.f32.mrb[0].mxu0
        %v562 = vadd.f32 0.0, %v561
        %v563 = vpop.f32.mrb[0].mxu0
        %v564 = vadd.f32 0.0, %v563
        %565 = vmatprep.mubr.f32.mxu0 %v370
        %566 = vmatmul.mubr.f32.gmra.mrb[0].mxu0 %v369
        %v567 = vpop.f32.mrb[0].mxu0
        %v568 = vadd.f32 0.0, %v567
        %v569 = vpop.f32.mrb[0].mxu0
        %v570 = vadd.f32 0.0, %v569
        %571 = vmatprep.mubr.f32.mxu0 %v372
        %572 = vmatmul.mubr.f32.gmra.mrb[0].mxu0 %v371
        %v573 = vpop.f32.mrb[0].mxu0
        %v574 = vadd.f32 0.0, %v573
        %v575 = vpop.f32.mrb[0].mxu0
        %v576 = vadd.f32 0.0, %v575
        %577 = vmatprep.mubr.f32.mxu0 %v374
        %578 = vmatmul.mubr.f32.gmra.mrb[0].mxu0 %v373
        %v579 = vpop.f32.mrb[0].mxu0
        %v580 = vadd.f32 0.0, %v579
        %v581 = vpop.f32.mrb[0].mxu0
        %v582 = vadd.f32 0.0, %v581
        %583 = vmatprep.mubr.f32.mxu0 %v376
        %584 = vmatmul.mubr.f32.gmra.mrb[0].mxu0 %v375
        %v585 = vpop.f32.mrb[0].mxu0
        %v586 = vadd.f32 0.0, %v585
        %v587 = vpop.f32.mrb[0].mxu0
        %v588 = vadd.f32 0.0, %v587
        %589 = vmatprep.mubr.f32.mxu0 %v378
        %590 = vmatmul.mubr.f32.gmra.mrb[0].mxu0 %v377
        %v591 = vpop.f32.mrb[0].mxu0
        %v592 = vadd.f32 0.0, %v591
        %v593 = vpop.f32.mrb[0].mxu0
        %v594 = vadd.f32 0.0, %v593
        %595 = vmatprep.mubr.f32.mxu0 %v380
        %596 = vmatmul.mubr.f32.gmra.mrb[0].mxu0 %v379
        %v597 = vpop.f32.mrb[0].mxu0
        %v598 = vadd.f32 0.0, %v597
        %v599 = vpop.f32.mrb[0].mxu0
        %v600 = vadd.f32 0.0, %v599
        %601 = vmatprep.mubr.f32.mxu0 %v382
        %602 = vmatmul.mubr.f32.gmra.mrb[0].mxu0 %v381
        %v603 = vpop.f32.mrb[0].mxu0
        %v604 = vadd.f32 0.0, %v603
        %v605 = vpop.f32.mrb[0].mxu0
        %v606 = vadd.f32 0.0, %v605
        %607 = vmatprep.mubr.f32.mxu0 %v384
        %608 = vmatmul.mubr.f32.gmra.mrb[0].mxu0 %v383
        %v609 = vpop.f32.mrb[0].mxu0
        %v610 = vadd.f32 0.0, %v609
        %v611 = vpop.f32.mrb[0].mxu0
        %v612 = vadd.f32 0.0, %v611
        %613 = vmatprep.mubr.f32.mxu0 %v386
        %614 = vmatmul.mubr.f32.gmra.mrb[0].mxu0 %v385
        %v615 = vpop.f32.mrb[0].mxu0
        %v616 = vadd.f32 0.0, %v615
        %v617 = vpop.f32.mrb[0].mxu0
        %v618 = vadd.f32 0.0, %v617
        %619 = vmatprep.mubr.f32.mxu0 %v388
        %620 = vmatmul.mubr.f32.gmra.mrb[0].mxu0 %v387
        %v621 = vpop.f32.mrb[0].mxu0
        %v622 = vadd.f32 0.0, %v621
        %v623 = vpop.f32.mrb[0].mxu0
        %v624 = vadd.f32 0.0, %v623
        %625 = vmatprep.mubr.f32.mxu0 %v390
        %626 = vmatmul.mubr.f32.gmra.mrb[0].mxu0 %v389
        %v627 = vpop.f32.mrb[0].mxu0
        %v628 = vadd.f32 0.0, %v627
        %v629 = vpop.f32.mrb[0].mxu0
        %v630 = vadd.f32 0.0, %v629
        %631 = vmatprep.mubr.f32.mxu0 %v392
        %632 = vmatmul.mubr.f32.gmra.mrb[0].mxu0 %v391
        %v633 = vpop.f32.mrb[0].mxu0
        %v634 = vadd.f32 0.0, %v633
        %v635 = vpop.f32.mrb[0].mxu0
        %v636 = vadd.f32 0.0, %v635
        %637 = vmatprep.mubr.f32.mxu0 %v394
        %638 = vmatmul.mubr.f32.gmra.mrb[0].mxu0 %v393
        %v639 = vpop.f32.mrb[0].mxu0
        %v640 = vadd.f32 0.0, %v639
        %v641 = vpop.f32.mrb[0].mxu0
        %v642 = vadd.f32 0.0, %v641
        %643 = vmatprep.mubr.f32.mxu0 %v396
        %644 = vmatmul.mubr.f32.gmra.mrb[0].mxu0 %v395
        %v645 = vpop.f32.mrb[0].mxu0
        %v646 = vadd.f32 0.0, %v645
        %v647 = vpop.f32.mrb[0].mxu0
        %v648 = vadd.f32 0.0, %v647
        %649 = vmatprep.mubr.f32.mxu0 %v398
        %650 = vmatmul.mubr.f32.gmra.mrb[0].mxu0 %v397
        %v651 = vpop.f32.mrb[0].mxu0
        %v652 = vadd.f32 0.0, %v651
        %v653 = vpop.f32.mrb[0].mxu0
        %v654 = vadd.f32 0.0, %v653
        %655 = vmatprep.mubr.f32.mxu0 %v400
        %656 = vmatmul.mubr.f32.gmra.mrb[0].mxu0 %v399
        %v657 = vpop.f32.mrb[0].mxu0
        %v658 = vadd.f32 0.0, %v657
        %v659 = vpop.f32.mrb[0].mxu0
        %v660 = vadd.f32 0.0, %v659
        %661 = vmatprep.mubr.f32.mxu0 %v402
        %662 = vmatmul.mubr.f32.gmra.mrb[0].mxu0 %v401
        %v663 = vpop.f32.mrb[0].mxu0
        %v664 = vadd.f32 0.0, %v663
        %v665 = vpop.f32.mrb[0].mxu0
        %v666 = vadd.f32 0.0, %v665
        %667 = vmatprep.mubr.f32.mxu0 %v404
        %668 = vmatmul.mubr.f32.gmra.mrb[0].mxu0 %v403
        %v669 = vpop.f32.mrb[0].mxu0
        %v670 = vadd.f32 0.0, %v669
        %v671 = vpop.f32.mrb[0].mxu0
        %v672 = vadd.f32 0.0, %v671
        %673 = vmatprep.mubr.f32.mxu0 %v406
        %674 = vmatmul.mubr.f32.gmra.mrb[0].mxu0 %v405
        %v675 = vpop.f32.mrb[0].mxu0
        %v676 = vadd.f32 0.0, %v675
        %v677 = vpop.f32.mrb[0].mxu0
        %v678 = vadd.f32 0.0, %v677
        %679 = vmatprep.mubr.f32.mxu0 %v408
        %680 = vmatmul.mubr.f32.gmra.mrb[0].mxu0 %v407
        %v681 = vpop.f32.mrb[0].mxu0
        %v682 = vadd.f32 0.0, %v681
        %v683 = vpop.f32.mrb[0].mxu0
        %v684 = vadd.f32 0.0, %v683
        %685 = vmatprep.mubr.f32.mxu0 %v410
        %686 = vmatmul.mubr.f32.gmra.mrb[0].mxu0 %v409
        %v687 = vpop.f32.mrb[0].mxu0
        %v688 = vadd.f32 0.0, %v687
        %v689 = vpop.f32.mrb[0].mxu0
        %v690 = vadd.f32 0.0, %v689
        %691 = vmatprep.mubr.f32.mxu0 %v412
        %692 = vmatmul.mubr.f32.gmra.mrb[0].mxu0 %v411
        %v693 = vpop.f32.mrb[0].mxu0
        %v694 = vadd.f32 0.0, %v693
        %v695 = vpop.f32.mrb[0].mxu0
        %v696 = vadd.f32 0.0, %v695
        %697 = vmatprep.mubr.f32.mxu0 %v414
        %698 = vmatmul.mubr.f32.gmra.mrb[0].mxu0 %v413
        %v699 = vpop.f32.mrb[0].mxu0
        %v700 = vadd.f32 0.0, %v699
        %v701 = vpop.f32.mrb[0].mxu0
        %v702 = vadd.f32 0.0, %v701
        %703 = vmatprep.mubr.f32.mxu0 %v416
        %704 = vmatmul.mubr.f32.gmra.mrb[0].mxu0 %v415
        %v705 = vpop.f32.mrb[0].mxu0
        %v706 = vadd.f32 0.0, %v705
        %v707 = vpop.f32.mrb[0].mxu0
        %v708 = vadd.f32 0.0, %v707
        %709 = vmatprep.mubr.f32.mxu0 %v418
        %710 = vmatmul.mubr.f32.gmra.mrb[0].mxu0 %v417
        %v711 = vpop.f32.mrb[0].mxu0
        %v712 = vadd.f32 0.0, %v711
        %v713 = vpop.f32.mrb[0].mxu0
        %v714 = vadd.f32 0.0, %v713
        %715 = vmatprep.mubr.f32.mxu0 %v420
        %716 = vmatmul.mubr.f32.gmra.mrb[0].mxu0 %v419
        %v717 = vpop.f32.mrb[0].mxu0
        %v718 = vadd.f32 0.0, %v717
        %v719 = vpop.f32.mrb[0].mxu0
        %v720 = vadd.f32 0.0, %v719
        %721 = vmatprep.mubr.f32.mxu0 %v422
        %722 = vmatmul.mubr.f32.gmra.mrb[0].mxu0 %v421
        %v723 = vpop.f32.mrb[0].mxu0
        %v724 = vadd.f32 0.0, %v723
        %v725 = vpop.f32.mrb[0].mxu0
        %v726 = vadd.f32 0.0, %v725
        %727 = vmatprep.mubr.f32.mxu0 %v424
        %728 = vmatmul.mubr.f32.gmra.mrb[0].mxu0 %v423
        %v729 = vpop.f32.mrb[0].mxu0
        %v730 = vadd.f32 0.0, %v729
        %v731 = vpop.f32.mrb[0].mxu0
        %v732 = vadd.f32 0.0, %v731
        %733 = vmatprep.mubr.f32.mxu0 %v426
        %734 = vmatmul.mubr.f32.gmra.mrb[0].mxu0 %v425
        %v735 = vpop.f32.mrb[0].mxu0
        %v736 = vadd.f32 0.0, %v735
        %v737 = vpop.f32.mrb[0].mxu0
        %v738 = vadd.f32 0.0, %v737
        %739 = vmatprep.mubr.f32.mxu0 %v428
        %740 = vmatmul.mubr.f32.gmra.mrb[0].mxu0 %v427
        %v741 = vpop.f32.mrb[0].mxu0
        %v742 = vadd.f32 0.0, %v741
        %v743 = vpop.f32.mrb[0].mxu0
        %v744 = vadd.f32 0.0, %v743
        %745 = vmatprep.mubr.f32.mxu0 %v430
        %746 = vmatmul.mubr.f32.gmra.mrb[0].mxu0 %v429
        %v747 = vpop.f32.mrb[0].mxu0
        %v748 = vadd.f32 0.0, %v747
        %v749 = vpop.f32.mrb[0].mxu0
        %v750 = vadd.f32 0.0, %v749
        %751 = vdwg.mxu0
        %v752 = vadd.f32 %v303, %v562
        %v753 = vadd.f32 %v304, %v564
        %v754 = vadd.f32 %v305, %v568
        %v755 = vadd.f32 %v306, %v570
        %v756 = vadd.f32 %v307, %v574
        %v757 = vadd.f32 %v308, %v576
        %v758 = vadd.f32 %v309, %v580
        %v759 = vadd.f32 %v310, %v582
        %v760 = vadd.f32 %v311, %v586
        %v761 = vadd.f32 %v312, %v588
        %v762 = vadd.f32 %v313, %v592
        %v763 = vadd.f32 %v314, %v594
        %v764 = vadd.f32 %v315, %v598
        %v765 = vadd.f32 %v316, %v600
        %v766 = vadd.f32 %v317, %v604
        %v767 = vadd.f32 %v318, %v606
        %v768 = vadd.f32 %v319, %v610
        %v769 = vadd.f32 %v320, %v612
        %v770 = vadd.f32 %v321, %v616
        %v771 = vadd.f32 %v322, %v618
        %v772 = vadd.f32 %v323, %v622
        %v773 = vadd.f32 %v324, %v624
        %v774 = vadd.f32 %v325, %v628
        %v775 = vadd.f32 %v326, %v630
        %v776 = vadd.f32 %v327, %v634
        %v777 = vadd.f32 %v328, %v636
        %v778 = vadd.f32 %v329, %v640
        %v779 = vadd.f32 %v330, %v642
        %v780 = vadd.f32 %v331, %v646
        %v781 = vadd.f32 %v332, %v648
        %v782 = vadd.f32 %v333, %v652
        %v783 = vadd.f32 %v334, %v654
        %v784 = vadd.f32 %v335, %v658
        %v785 = vadd.f32 %v336, %v660
        %v786 = vadd.f32 %v337, %v664
        %v787 = vadd.f32 %v338, %v666
        %v788 = vadd.f32 %v339, %v670
        %v789 = vadd.f32 %v340, %v672
        %v790 = vadd.f32 %v341, %v676
        %v791 = vadd.f32 %v342, %v678
        %v792 = vadd.f32 %v343, %v682
        %v793 = vadd.f32 %v344, %v684
        %v794 = vadd.f32 %v345, %v688
        %v795 = vadd.f32 %v346, %v690
        %v796 = vadd.f32 %v347, %v694
        %v797 = vadd.f32 %v348, %v696
        %v798 = vadd.f32 %v349, %v700
        %v799 = vadd.f32 %v350, %v702
        %v800 = vadd.f32 %v351, %v706
        %v801 = vadd.f32 %v352, %v708
        %v802 = vadd.f32 %v353, %v712
        %v803 = vadd.f32 %v354, %v714
        %v804 = vadd.f32 %v355, %v718
        %v805 = vadd.f32 %v356, %v720
        %v806 = vadd.f32 %v357, %v724
        %v807 = vadd.f32 %v358, %v726
        %v808 = vadd.f32 %v359, %v730
        %v809 = vadd.f32 %v360, %v732
        %v810 = vadd.f32 %v361, %v736
        %v811 = vadd.f32 %v362, %v738
        %v812 = vadd.f32 %v363, %v742
        %v813 = vadd.f32 %v364, %v744
        %v814 = vadd.f32 %v365, %v748
        %v815 = vadd.f32 %v366, %v750
        %816 = vst [vmem:[#allocation2] sm:$0xff] %v752
        %817 = vst [vmem:[#allocation2 + $0x8] sm:$0xff] %v753
        %818 = vst [vmem:[#allocation2 + $0x10] sm:$0xff] %v754
        %819 = vst [vmem:[#allocation2 + $0x18] sm:$0xff] %v755
        %820 = vst [vmem:[#allocation2 + $0x20] sm:$0xff] %v756
        %821 = vst [vmem:[#allocation2 + $0x28] sm:$0xff] %v757
        %822 = vst [vmem:[#allocation2 + $0x30] sm:$0xff] %v758
        %823 = vst [vmem:[#allocation2 + $0x38] sm:$0xff] %v759
        %824 = vst [vmem:[#allocation2 + $0x40] sm:$0xff] %v760
        %825 = vst [vmem:[#allocation2 + $0x48] sm:$0xff] %v761
        %826 = vst [vmem:[#allocation2 + $0x50] sm:$0xff] %v762
        %827 = vst [vmem:[#allocation2 + $0x58] sm:$0xff] %v763
        %828 = vst [vmem:[#allocation2 + $0x60] sm:$0xff] %v764
        %829 = vst [vmem:[#allocation2 + $0x68] sm:$0xff] %v765
        %830 = vst [vmem:[#allocation2 + $0x70] sm:$0xff] %v766
        %831 = vst [vmem:[#allocation2 + $0x78] sm:$0xff] %v767
        %832 = vst [vmem:[#allocation2 + $0x80] sm:$0xff] %v768
        %833 = vst [vmem:[#allocation2 + $0x88] sm:$0xff] %v769
        %834 = vst [vmem:[#allocation2 + $0x90] sm:$0xff] %v770
        %835 = vst [vmem:[#allocation2 + $0x98] sm:$0xff] %v771
        %836 = vst [vmem:[#allocation2 + $0xa0] sm:$0xff] %v772
        %837 = vst [vmem:[#allocation2 + $0xa8] sm:$0xff] %v773
        %838 = vst [vmem:[#allocation2 + $0xb0] sm:$0xff] %v774
        %839 = vst [vmem:[#allocation2 + $0xb8] sm:$0xff] %v775
        %840 = vst [vmem:[#allocation2 + $0xc0] sm:$0xff] %v776
        %841 = vst [vmem:[#allocation2 + $0xc8] sm:$0xff] %v777
        %842 = vst [vmem:[#allocation2 + $0xd0] sm:$0xff] %v778
        %843 = vst [vmem:[#allocation2 + $0xd8] sm:$0xff] %v779
        %844 = vst [vmem:[#allocation2 + $0xe0] sm:$0xff] %v780
        %845 = vst [vmem:[#allocation2 + $0xe8] sm:$0xff] %v781
        %846 = vst [vmem:[#allocation2 + $0xf0] sm:$0xff] %v782
        %847 = vst [vmem:[#allocation2 + $0xf8] sm:$0xff] %v783
        %848 = vst [vmem:[#allocation2 + $0x100] sm:$0xff] %v784
        %849 = vst [vmem:[#allocation2 + $0x108] sm:$0xff] %v785
        %850 = vst [vmem:[#allocation2 + $0x110] sm:$0xff] %v786
        %851 = vst [vmem:[#allocation2 + $0x118] sm:$0xff] %v787
        %852 = vst [vmem:[#allocation2 + $0x120] sm:$0xff] %v788
        %853 = vst [vmem:[#allocation2 + $0x128] sm:$0xff] %v789
        %854 = vst [vmem:[#allocation2 + $0x130] sm:$0xff] %v790
        %855 = vst [vmem:[#allocation2 + $0x138] sm:$0xff] %v791
        %856 = vst [vmem:[#allocation2 + $0x140] sm:$0xff] %v792
        %857 = vst [vmem:[#allocation2 + $0x148] sm:$0xff] %v793
        %858 = vst [vmem:[#allocation2 + $0x150] sm:$0xff] %v794
        %859 = vst [vmem:[#allocation2 + $0x158] sm:$0xff] %v795
        %860 = vst [vmem:[#allocation2 + $0x160] sm:$0xff] %v796
        %861 = vst [vmem:[#allocation2 + $0x168] sm:$0xff] %v797
        %862 = vst [vmem:[#allocation2 + $0x170] sm:$0xff] %v798
        %863 = vst [vmem:[#allocation2 + $0x178] sm:$0xff] %v799
        %864 = vst [vmem:[#allocation2 + $0x180] sm:$0xff] %v800
        %865 = vst [vmem:[#allocation2 + $0x188] sm:$0xff] %v801
        %866 = vst [vmem:[#allocation2 + $0x190] sm:$0xff] %v802
        %867 = vst [vmem:[#allocation2 + $0x198] sm:$0xff] %v803
        %868 = vst [vmem:[#allocation2 + $0x1a0] sm:$0xff] %v804
        %869 = vst [vmem:[#allocation2 + $0x1a8] sm:$0xff] %v805
        %870 = vst [vmem:[#allocation2 + $0x1b0] sm:$0xff] %v806
        %871 = vst [vmem:[#allocation2 + $0x1b8] sm:$0xff] %v807
        %872 = vst [vmem:[#allocation2 + $0x1c0] sm:$0xff] %v808
        %873 = vst [vmem:[#allocation2 + $0x1c8] sm:$0xff] %v809
        %874 = vst [vmem:[#allocation2 + $0x1d0] sm:$0xff] %v810
        %875 = vst [vmem:[#allocation2 + $0x1d8] sm:$0xff] %v811
        %876 = vst [vmem:[#allocation2 + $0x1e0] sm:$0xff] %v812
        %877 = vst [vmem:[#allocation2 + $0x1e8] sm:$0xff] %v813
        %878 = vst [vmem:[#allocation2 + $0x1f0] sm:$0xff] %v814
        %879 = vst [vmem:[#allocation2 + $0x1f8] sm:$0xff] %v815
        // Predicated region
        $region41: #{attention_forward.3} parent=27 // pred_check
          %p880 = pneg %p235
        $region42: #{attention_forward.3} parent=27 // pred_check_branch
          %882 = sbr.rel (%p880) target = $region44
        $region43: #{attention_forward.3} parent=27 // pred_region
          %v883 = vld [vmem:[#allocation2] sm:$0xff]
          %v884 = vld [vmem:[#allocation2 + $0x8] sm:$0xff]
          %v885 = vld [vmem:[#allocation2 + $0x10] sm:$0xff]
          %v886 = vld [vmem:[#allocation2 + $0x18] sm:$0xff]
          %v887 = vld [vmem:[#allocation2 + $0x20] sm:$0xff]
          %v888 = vld [vmem:[#allocation2 + $0x28] sm:$0xff]
          %v889 = vld [vmem:[#allocation2 + $0x30] sm:$0xff]
          %v890 = vld [vmem:[#allocation2 + $0x38] sm:$0xff]
          %v891 = vld [vmem:[#allocation2 + $0x40] sm:$0xff]
          %v892 = vld [vmem:[#allocation2 + $0x48] sm:$0xff]
          %v893 = vld [vmem:[#allocation2 + $0x50] sm:$0xff]
          %v894 = vld [vmem:[#allocation2 + $0x58] sm:$0xff]
          %v895 = vld [vmem:[#allocation2 + $0x60] sm:$0xff]
          %v896 = vld [vmem:[#allocation2 + $0x68] sm:$0xff]
          %v897 = vld [vmem:[#allocation2 + $0x70] sm:$0xff]
          %v898 = vld [vmem:[#allocation2 + $0x78] sm:$0xff]
          %v899 = vld [vmem:[#allocation2 + $0x80] sm:$0xff]
          %v900 = vld [vmem:[#allocation2 + $0x88] sm:$0xff]
          %v901 = vld [vmem:[#allocation2 + $0x90] sm:$0xff]
          %v902 = vld [vmem:[#allocation2 + $0x98] sm:$0xff]
          %v903 = vld [vmem:[#allocation2 + $0xa0] sm:$0xff]
          %v904 = vld [vmem:[#allocation2 + $0xa8] sm:$0xff]
          %v905 = vld [vmem:[#allocation2 + $0xb0] sm:$0xff]
          %v906 = vld [vmem:[#allocation2 + $0xb8] sm:$0xff]
          %v907 = vld [vmem:[#allocation2 + $0xc0] sm:$0xff]
          %v908 = vld [vmem:[#allocation2 + $0xc8] sm:$0xff]
          %v909 = vld [vmem:[#allocation2 + $0xd0] sm:$0xff]
          %v910 = vld [vmem:[#allocation2 + $0xd8] sm:$0xff]
          %v911 = vld [vmem:[#allocation2 + $0xe0] sm:$0xff]
          %v912 = vld [vmem:[#allocation2 + $0xe8] sm:$0xff]
          %v913 = vld [vmem:[#allocation2 + $0xf0] sm:$0xff]
          %v914 = vld [vmem:[#allocation2 + $0xf8] sm:$0xff]
          %v915 = vld [vmem:[#allocation2 + $0x100] sm:$0xff]
          %v916 = vld [vmem:[#allocation2 + $0x108] sm:$0xff]
          %v917 = vld [vmem:[#allocation2 + $0x110] sm:$0xff]
          %v918 = vld [vmem:[#allocation2 + $0x118] sm:$0xff]
          %v919 = vld [vmem:[#allocation2 + $0x120] sm:$0xff]
          %v920 = vld [vmem:[#allocation2 + $0x128] sm:$0xff]
          %v921 = vld [vmem:[#allocation2 + $0x130] sm:$0xff]
          %v922 = vld [vmem:[#allocation2 + $0x138] sm:$0xff]
          %v923 = vld [vmem:[#allocation2 + $0x140] sm:$0xff]
          %v924 = vld [vmem:[#allocation2 + $0x148] sm:$0xff]
          %v925 = vld [vmem:[#allocation2 + $0x150] sm:$0xff]
          %v926 = vld [vmem:[#allocation2 + $0x158] sm:$0xff]
          %v927 = vld [vmem:[#allocation2 + $0x160] sm:$0xff]
          %v928 = vld [vmem:[#allocation2 + $0x168] sm:$0xff]
          %v929 = vld [vmem:[#allocation2 + $0x170] sm:$0xff]
          %v930 = vld [vmem:[#allocation2 + $0x178] sm:$0xff]
          %v931 = vld [vmem:[#allocation2 + $0x180] sm:$0xff]
          %v932 = vld [vmem:[#allocation2 + $0x188] sm:$0xff]
          %v933 = vld [vmem:[#allocation2 + $0x190] sm:$0xff]
          %v934 = vld [vmem:[#allocation2 + $0x198] sm:$0xff]
          %v935 = vld [vmem:[#allocation2 + $0x1a0] sm:$0xff]
          %v936 = vld [vmem:[#allocation2 + $0x1a8] sm:$0xff]
          %v937 = vld [vmem:[#allocation2 + $0x1b0] sm:$0xff]
          %v938 = vld [vmem:[#allocation2 + $0x1b8] sm:$0xff]
          %v939 = vld [vmem:[#allocation2 + $0x1c0] sm:$0xff]
          %v940 = vld [vmem:[#allocation2 + $0x1c8] sm:$0xff]
          %v941 = vld [vmem:[#allocation2 + $0x1d0] sm:$0xff]
          %v942 = vld [vmem:[#allocation2 + $0x1d8] sm:$0xff]
          %v943 = vld [vmem:[#allocation2 + $0x1e0] sm:$0xff]
          %v944 = vld [vmem:[#allocation2 + $0x1e8] sm:$0xff]
          %v945 = vld [vmem:[#allocation2 + $0x1f0] sm:$0xff]
          %v946 = vld [vmem:[#allocation2 + $0x1f8] sm:$0xff]
          %947 = vst [vmem:[%s228] sm:$0xff] %v883
          %948 = vst [vmem:[%s228 + $0x8] sm:$0xff] %v884
          %949 = vst [vmem:[%s228 + $0x10] sm:$0xff] %v885
          %950 = vst [vmem:[%s228 + $0x18] sm:$0xff] %v886
          %951 = vst [vmem:[%s228 + $0x20] sm:$0xff] %v887
          %952 = vst [vmem:[%s228 + $0x28] sm:$0xff] %v888
          %953 = vst [vmem:[%s228 + $0x30] sm:$0xff] %v889
          %954 = vst [vmem:[%s228 + $0x38] sm:$0xff] %v890
          %955 = vst [vmem:[%s228 + $0x40] sm:$0xff] %v891
          %956 = vst [vmem:[%s228 + $0x48] sm:$0xff] %v892
          %957 = vst [vmem:[%s228 + $0x50] sm:$0xff] %v893
          %958 = vst [vmem:[%s228 + $0x58] sm:$0xff] %v894
          %959 = vst [vmem:[%s228 + $0x60] sm:$0xff] %v895
          %960 = vst [vmem:[%s228 + $0x68] sm:$0xff] %v896
          %961 = vst [vmem:[%s228 + $0x70] sm:$0xff] %v897
          %962 = vst [vmem:[%s228 + $0x78] sm:$0xff] %v898
          %963 = vst [vmem:[%s228 + $0x80] sm:$0xff] %v899
          %964 = vst [vmem:[%s228 + $0x88] sm:$0xff] %v900
          %965 = vst [vmem:[%s228 + $0x90] sm:$0xff] %v901
          %966 = vst [vmem:[%s228 + $0x98] sm:$0xff] %v902
          %967 = vst [vmem:[%s228 + $0xa0] sm:$0xff] %v903
          %968 = vst [vmem:[%s228 + $0xa8] sm:$0xff] %v904
          %969 = vst [vmem:[%s228 + $0xb0] sm:$0xff] %v905
          %970 = vst [vmem:[%s228 + $0xb8] sm:$0xff] %v906
          %971 = vst [vmem:[%s228 + $0xc0] sm:$0xff] %v907
          %972 = vst [vmem:[%s228 + $0xc8] sm:$0xff] %v908
          %973 = vst [vmem:[%s228 + $0xd0] sm:$0xff] %v909
          %974 = vst [vmem:[%s228 + $0xd8] sm:$0xff] %v910
          %975 = vst [vmem:[%s228 + $0xe0] sm:$0xff] %v911
          %976 = vst [vmem:[%s228 + $0xe8] sm:$0xff] %v912
          %977 = vst [vmem:[%s228 + $0xf0] sm:$0xff] %v913
          %978 = vst [vmem:[%s228 + $0xf8] sm:$0xff] %v914
          %979 = vst [vmem:[%s228 + $0x100] sm:$0xff] %v915
          %980 = vst [vmem:[%s228 + $0x108] sm:$0xff] %v916
          %981 = vst [vmem:[%s228 + $0x110] sm:$0xff] %v917
          %982 = vst [vmem:[%s228 + $0x118] sm:$0xff] %v918
          %983 = vst [vmem:[%s228 + $0x120] sm:$0xff] %v919
          %984 = vst [vmem:[%s228 + $0x128] sm:$0xff] %v920
          %985 = vst [vmem:[%s228 + $0x130] sm:$0xff] %v921
          %986 = vst [vmem:[%s228 + $0x138] sm:$0xff] %v922
          %987 = vst [vmem:[%s228 + $0x140] sm:$0xff] %v923
          %988 = vst [vmem:[%s228 + $0x148] sm:$0xff] %v924
          %989 = vst [vmem:[%s228 + $0x150] sm:$0xff] %v925
          %990 = vst [vmem:[%s228 + $0x158] sm:$0xff] %v926
          %991 = vst [vmem:[%s228 + $0x160] sm:$0xff] %v927
          %992 = vst [vmem:[%s228 + $0x168] sm:$0xff] %v928
          %993 = vst [vmem:[%s228 + $0x170] sm:$0xff] %v929
          %994 = vst [vmem:[%s228 + $0x178] sm:$0xff] %v930
          %995 = vst [vmem:[%s228 + $0x180] sm:$0xff] %v931
          %996 = vst [vmem:[%s228 + $0x188] sm:$0xff] %v932
          %997 = vst [vmem:[%s228 + $0x190] sm:$0xff] %v933
          %998 = vst [vmem:[%s228 + $0x198] sm:$0xff] %v934
          %999 = vst [vmem:[%s228 + $0x1a0] sm:$0xff] %v935
          %1000 = vst [vmem:[%s228 + $0x1a8] sm:$0xff] %v936
          %1001 = vst [vmem:[%s228 + $0x1b0] sm:$0xff] %v937
          %1002 = vst [vmem:[%s228 + $0x1b8] sm:$0xff] %v938
          %1003 = vst [vmem:[%s228 + $0x1c0] sm:$0xff] %v939
          %1004 = vst [vmem:[%s228 + $0x1c8] sm:$0xff] %v940
          %1005 = vst [vmem:[%s228 + $0x1d0] sm:$0xff] %v941
          %1006 = vst [vmem:[%s228 + $0x1d8] sm:$0xff] %v942
          %1007 = vst [vmem:[%s228 + $0x1e0] sm:$0xff] %v943
          %1008 = vst [vmem:[%s228 + $0x1e8] sm:$0xff] %v944
          %1009 = vst [vmem:[%s228 + $0x1f0] sm:$0xff] %v945
          %1010 = vst [vmem:[%s228 + $0x1f8] sm:$0xff] %v946
        $region44: #{attention_forward.3} parent=27 // pred_fallthru
          _
        %s1011 = sand.u32 %s104, 1
        %s1012 = sand.u32 %s104, 1
        %s1013 = smul.addr %s1012, 512
        %s1014 = scalar_lea.vmem [#allocation7], %s1013
        // Predicated region
        $region45: #{attention_forward.3} parent=27 // pred_check
          %p1015 = pneg %p114
        $region46: #{attention_forward.3} parent=27 // pred_check_branch
          %1017 = sbr.rel (%p1015) target = $region48
        $region47: #{attention_forward.3} parent=27 // pred_region
          %s1018 = smul.u32 32, %s24
          %s1019 = smul.u32 2, %s25
          %s1020 = smul.addr %s1018, 6
          %s1021 = sadd.s32 %s1019, %s1020
          %s1022 = smul.addr %s1021, 8
          %s1023 = scalar_lea.vmem %s2, %s1022
          // Predicated region
          $region49: #{attention_forward.3} parent=47 // pred_check
            _
          $region50: #{attention_forward.3} parent=47 // pred_check_branch
            %1025 = sbr.rel (0) target = $region52
          $region51: #{attention_forward.3} parent=47 // pred_region
            // Predicated region
            $region53: #{attention_forward.3} parent=51 // pred_check
              _
            $region54: #{attention_forward.3} parent=51 // pred_check_branch
              %1027 = sbr.rel (0) target = $region56
            $region55: #{attention_forward.3} parent=51 // pred_region
              loop: start=0, step=1, limit=1
              $region57: #{attention_forward.3} parent=55 // loop_pre_header
                _
              $region58: #{attention_forward.3} parent=55 // loop_header
                %s1029 = sphi 0, %s1033
                %p1030 = scmp.ge.s32.totalorder %s1029, 1
                %s1034 = sphi %s1014, %s1014
                %s1035 = sphi %s1023, %s1023
              $region59: #{attention_forward.3} parent=55 // loop_header_branch
                %1032 = sbr.rel (%p1030) target = $region63
              $region60: #{attention_forward.3} parent=55 // loop_body
                %v1036 = vld [vmem:[%s1034] sm:$0xff]
                %1037 = vst [vmem:[%s1035] sm:$0xff] %v1036
                %v1038 = vld [vmem:[%s1034 + $0x8] sm:$0xff]
                %1039 = vst [vmem:[%s1035 + $0x8] sm:$0xff] %v1038
                %v1040 = vld [vmem:[%s1034 + $0x10] sm:$0xff]
                %1041 = vst [vmem:[%s1035 + $0x30] sm:$0xff] %v1040
                %v1042 = vld [vmem:[%s1034 + $0x18] sm:$0xff]
                %1043 = vst [vmem:[%s1035 + $0x38] sm:$0xff] %v1042
                %v1044 = vld [vmem:[%s1034 + $0x20] sm:$0xff]
                %1045 = vst [vmem:[%s1035 + $0x60] sm:$0xff] %v1044
                %v1046 = vld [vmem:[%s1034 + $0x28] sm:$0xff]
                %1047 = vst [vmem:[%s1035 + $0x68] sm:$0xff] %v1046
                %v1048 = vld [vmem:[%s1034 + $0x30] sm:$0xff]
                %1049 = vst [vmem:[%s1035 + $0x90] sm:$0xff] %v1048
                %v1050 = vld [vmem:[%s1034 + $0x38] sm:$0xff]
                %1051 = vst [vmem:[%s1035 + $0x98] sm:$0xff] %v1050
                %v1052 = vld [vmem:[%s1034 + $0x40] sm:$0xff]
                %1053 = vst [vmem:[%s1035 + $0xc0] sm:$0xff] %v1052
                %v1054 = vld [vmem:[%s1034 + $0x48] sm:$0xff]
                %1055 = vst [vmem:[%s1035 + $0xc8] sm:$0xff] %v1054
                %v1056 = vld [vmem:[%s1034 + $0x50] sm:$0xff]
                %1057 = vst [vmem:[%s1035 + $0xf0] sm:$0xff] %v1056
                %v1058 = vld [vmem:[%s1034 + $0x58] sm:$0xff]
                %1059 = vst [vmem:[%s1035 + $0xf8] sm:$0xff] %v1058
                %v1060 = vld [vmem:[%s1034 + $0x60] sm:$0xff]
                %1061 = vst [vmem:[%s1035 + $0x120] sm:$0xff] %v1060
                %v1062 = vld [vmem:[%s1034 + $0x68] sm:$0xff]
                %1063 = vst [vmem:[%s1035 + $0x128] sm:$0xff] %v1062
                %v1064 = vld [vmem:[%s1034 + $0x70] sm:$0xff]
                %1065 = vst [vmem:[%s1035 + $0x150] sm:$0xff] %v1064
                %v1066 = vld [vmem:[%s1034 + $0x78] sm:$0xff]
                %1067 = vst [vmem:[%s1035 + $0x158] sm:$0xff] %v1066
                %v1068 = vld [vmem:[%s1034 + $0x80] sm:$0xff]
                %1069 = vst [vmem:[%s1035 + $0x180] sm:$0xff] %v1068
                %v1070 = vld [vmem:[%s1034 + $0x88] sm:$0xff]
                %1071 = vst [vmem:[%s1035 + $0x188] sm:$0xff] %v1070
                %v1072 = vld [vmem:[%s1034 + $0x90] sm:$0xff]
                %1073 = vst [vmem:[%s1035 + $0x1b0] sm:$0xff] %v1072
                %v1074 = vld [vmem:[%s1034 + $0x98] sm:$0xff]
                %1075 = vst [vmem:[%s1035 + $0x1b8] sm:$0xff] %v1074
                %v1076 = vld [vmem:[%s1034 + $0xa0] sm:$0xff]
                %1077 = vst [vmem:[%s1035 + $0x1e0] sm:$0xff] %v1076
                %v1078 = vld [vmem:[%s1034 + $0xa8] sm:$0xff]
                %1079 = vst [vmem:[%s1035 + $0x1e8] sm:$0xff] %v1078
                %v1080 = vld [vmem:[%s1034 + $0xb0] sm:$0xff]
                %1081 = vst [vmem:[%s1035 + $0x210] sm:$0xff] %v1080
                %v1082 = vld [vmem:[%s1034 + $0xb8] sm:$0xff]
                %1083 = vst [vmem:[%s1035 + $0x218] sm:$0xff] %v1082
                %v1084 = vld [vmem:[%s1034 + $0xc0] sm:$0xff]
                %1085 = vst [vmem:[%s1035 + $0x240] sm:$0xff] %v1084
                %v1086 = vld [vmem:[%s1034 + $0xc8] sm:$0xff]
                %1087 = vst [vmem:[%s1035 + $0x248] sm:$0xff] %v1086
                %v1088 = vld [vmem:[%s1034 + $0xd0] sm:$0xff]
                %1089 = vst [vmem:[%s1035 + $0x270] sm:$0xff] %v1088
                %v1090 = vld [vmem:[%s1034 + $0xd8] sm:$0xff]
                %1091 = vst [vmem:[%s1035 + $0x278] sm:$0xff] %v1090
                %v1092 = vld [vmem:[%s1034 + $0xe0] sm:$0xff]
                %1093 = vst [vmem:[%s1035 + $0x2a0] sm:$0xff] %v1092
                %v1094 = vld [vmem:[%s1034 + $0xe8] sm:$0xff]
                %1095 = vst [vmem:[%s1035 + $0x2a8] sm:$0xff] %v1094
                %v1096 = vld [vmem:[%s1034 + $0xf0] sm:$0xff]
                %1097 = vst [vmem:[%s1035 + $0x2d0] sm:$0xff] %v1096
                %v1098 = vld [vmem:[%s1034 + $0xf8] sm:$0xff]
                %1099 = vst [vmem:[%s1035 + $0x2d8] sm:$0xff] %v1098
                %v1100 = vld [vmem:[%s1034 + $0x100] sm:$0xff]
                %1101 = vst [vmem:[%s1035 + $0x300] sm:$0xff] %v1100
                %v1102 = vld [vmem:[%s1034 + $0x108] sm:$0xff]
                %1103 = vst [vmem:[%s1035 + $0x308] sm:$0xff] %v1102
                %v1104 = vld [vmem:[%s1034 + $0x110] sm:$0xff]
                %1105 = vst [vmem:[%s1035 + $0x330] sm:$0xff] %v1104
                %v1106 = vld [vmem:[%s1034 + $0x118] sm:$0xff]
                %1107 = vst [vmem:[%s1035 + $0x338] sm:$0xff] %v1106
                %v1108 = vld [vmem:[%s1034 + $0x120] sm:$0xff]
                %1109 = vst [vmem:[%s1035 + $0x360] sm:$0xff] %v1108
                %v1110 = vld [vmem:[%s1034 + $0x128] sm:$0xff]
                %1111 = vst [vmem:[%s1035 + $0x368] sm:$0xff] %v1110
                %v1112 = vld [vmem:[%s1034 + $0x130] sm:$0xff]
                %1113 = vst [vmem:[%s1035 + $0x390] sm:$0xff] %v1112
                %v1114 = vld [vmem:[%s1034 + $0x138] sm:$0xff]
                %1115 = vst [vmem:[%s1035 + $0x398] sm:$0xff] %v1114
                %v1116 = vld [vmem:[%s1034 + $0x140] sm:$0xff]
                %1117 = vst [vmem:[%s1035 + $0x3c0] sm:$0xff] %v1116
                %v1118 = vld [vmem:[%s1034 + $0x148] sm:$0xff]
                %1119 = vst [vmem:[%s1035 + $0x3c8] sm:$0xff] %v1118
                %v1120 = vld [vmem:[%s1034 + $0x150] sm:$0xff]
                %1121 = vst [vmem:[%s1035 + $0x3f0] sm:$0xff] %v1120
                %v1122 = vld [vmem:[%s1034 + $0x158] sm:$0xff]
                %1123 = vst [vmem:[%s1035 + $0x3f8] sm:$0xff] %v1122
                %v1124 = vld [vmem:[%s1034 + $0x160] sm:$0xff]
                %1125 = vst [vmem:[%s1035 + $0x420] sm:$0xff] %v1124
                %v1126 = vld [vmem:[%s1034 + $0x168] sm:$0xff]
                %1127 = vst [vmem:[%s1035 + $0x428] sm:$0xff] %v1126
                %v1128 = vld [vmem:[%s1034 + $0x170] sm:$0xff]
                %1129 = vst [vmem:[%s1035 + $0x450] sm:$0xff] %v1128
                %v1130 = vld [vmem:[%s1034 + $0x178] sm:$0xff]
                %1131 = vst [vmem:[%s1035 + $0x458] sm:$0xff] %v1130
                %v1132 = vld [vmem:[%s1034 + $0x180] sm:$0xff]
                %1133 = vst [vmem:[%s1035 + $0x480] sm:$0xff] %v1132
                %v1134 = vld [vmem:[%s1034 + $0x188] sm:$0xff]
                %1135 = vst [vmem:[%s1035 + $0x488] sm:$0xff] %v1134
                %v1136 = vld [vmem:[%s1034 + $0x190] sm:$0xff]
                %1137 = vst [vmem:[%s1035 + $0x4b0] sm:$0xff] %v1136
                %v1138 = vld [vmem:[%s1034 + $0x198] sm:$0xff]
                %1139 = vst [vmem:[%s1035 + $0x4b8] sm:$0xff] %v1138
                %v1140 = vld [vmem:[%s1034 + $0x1a0] sm:$0xff]
                %1141 = vst [vmem:[%s1035 + $0x4e0] sm:$0xff] %v1140
                %v1142 = vld [vmem:[%s1034 + $0x1a8] sm:$0xff]
                %1143 = vst [vmem:[%s1035 + $0x4e8] sm:$0xff] %v1142
                %v1144 = vld [vmem:[%s1034 + $0x1b0] sm:$0xff]
                %1145 = vst [vmem:[%s1035 + $0x510] sm:$0xff] %v1144
                %v1146 = vld [vmem:[%s1034 + $0x1b8] sm:$0xff]
                %1147 = vst [vmem:[%s1035 + $0x518] sm:$0xff] %v1146
                %v1148 = vld [vmem:[%s1034 + $0x1c0] sm:$0xff]
                %1149 = vst [vmem:[%s1035 + $0x540] sm:$0xff] %v1148
                %v1150 = vld [vmem:[%s1034 + $0x1c8] sm:$0xff]
                %1151 = vst [vmem:[%s1035 + $0x548] sm:$0xff] %v1150
                %v1152 = vld [vmem:[%s1034 + $0x1d0] sm:$0xff]
                %1153 = vst [vmem:[%s1035 + $0x570] sm:$0xff] %v1152
                %v1154 = vld [vmem:[%s1034 + $0x1d8] sm:$0xff]
                %1155 = vst [vmem:[%s1035 + $0x578] sm:$0xff] %v1154
                %v1156 = vld [vmem:[%s1034 + $0x1e0] sm:$0xff]
                %1157 = vst [vmem:[%s1035 + $0x5a0] sm:$0xff] %v1156
                %v1158 = vld [vmem:[%s1034 + $0x1e8] sm:$0xff]
                %1159 = vst [vmem:[%s1035 + $0x5a8] sm:$0xff] %v1158
                %v1160 = vld [vmem:[%s1034 + $0x1f0] sm:$0xff]
                %1161 = vst [vmem:[%s1035 + $0x5d0] sm:$0xff] %v1160
                %v1162 = vld [vmem:[%s1034 + $0x1f8] sm:$0xff]
                %1163 = vst [vmem:[%s1035 + $0x5d8] sm:$0xff] %v1162
              $region61: #{attention_forward.3} parent=55 // loop_footer
                %s1033 = sadd.s32 1, %s1029
              $region62: #{attention_forward.3} parent=55 // loop_footer_branch
                %1028 = sbr.rel target = $region58
              $region63: #{attention_forward.3} parent=55 // loop_exit
                _
            $region56: #{attention_forward.3} parent=51 // pred_fallthru
              _
            // Predicated region
            $region64: #{attention_forward.3} parent=51 // pred_check
              _
            $region65: #{attention_forward.3} parent=51 // pred_check_branch
              %1165 = sbr.rel target = $region67
            $region66: #{attention_forward.3} parent=51 // pred_region
              _
            $region67: #{attention_forward.3} parent=51 // pred_fallthru
              _
          $region52: #{attention_forward.3} parent=47 // pred_fallthru
            _
          %1166 = vnop
        $region48: #{attention_forward.3} parent=27 // pred_fallthru
          _
      $region28: #{attention_forward.3} parent=5 // pred_fallthru
        _
      %p1167 = scmp.le.s32.totalorder 2, %s14
      // Predicated region
      $region68: #{attention_forward.3} parent=5 // pred_check
        %p1168 = pneg %p1167
      $region69: #{attention_forward.3} parent=5 // pred_check_branch
        %1170 = sbr.rel (%p1168) target = $region71
      $region70: #{attention_forward.3} parent=5 // pred_region
        %s1171 = ssub.s32 %s14, 2
        // Predicated region
        $region72: #{attention_forward.3} parent=70 // pred_check
          %p1172 = pneg %p120
        $region73: #{attention_forward.3} parent=70 // pred_check_branch
          %1174 = sbr.rel (%p1172) target = $region75
        $region74: #{attention_forward.3} parent=70 // pred_region
          %s1175 = sand.u32 %s105, 1
          %s1176 = sand.u32 %s105, 1
          %s1177 = smul.addr %s1176, 512
          %s1178 = scalar_lea.vmem [#allocation7], %s1177
        $region75: #{attention_forward.3} parent=70 // pred_fallthru
          _
      $region71: #{attention_forward.3} parent=5 // pred_fallthru
        _
    $region6: #{attention_forward.3} parent=1 // loop_footer
      %s18 = sadd.s32 1, %s14
    $region7: #{attention_forward.3} parent=1 // loop_footer_branch
      %13 = sbr.rel target = $region3
    $region8: #{attention_forward.3} parent=1 // loop_exit
      _
    %1179 = vsyncpa [#allocation4], 1
    %s1180 = scalar_lea.sflag [#allocation4], 1
    %1181 = vsyncpa %s1180, 1
    %1182 = vsyncpa [#allocation6], 1
    %s1183 = scalar_lea.sflag [#allocation6], 1
    %1184 = vsyncpa %s1183, 1

// kernel: attention_forward.5
$region0: #{attention_forward.5}
  #allocation0 [shape = 'u32[]', space=smem, size = 0x4, offset = 0x4, fixed_abs, tag = 'smem constant byte address 0x4 - core index']
  #allocation1 [shape = 'u32[144,128]{1,0:T(1,128)}', space=vmem, size = 0x12000, scoped, tag = 'internal scratch']
  #allocation2 [shape = 'f32[256,256]{1,0:T(8,128)}', space=vmem, size = 0x40000, scoped, tag = 'scratch operand']
  %s0 = inlined_call_operand.vmem [shape: f32[512,256], index: 0, kind: input, shape index: {}]
  %s1 = inlined_call_operand.vmem [shape: f32[256,256], index: 1, kind: input, shape index: {}]
  %s2 = inlined_call_operand.hbm [shape: f32[512,256], index: 2, kind: output, shape index: {}]
  %s3 = sld [smem:[#allocation0]]
  $region49: #{attention_forward.5} parent=0
    _
  %s5 = ssub.s32 1, %s3
  %s6 = scalar_select 0, %s5, %s3
  $region1: #{attention_forward.5} parent=0
    #allocation3 [shape = 'u8[524288]{0}', space=vmem, size = 0x80000, scoped, tag = 'output window, operand 0']
    #allocation4 [shape = 's32[2]{0}', space=sflag, size = 0x8, scoped, tag = 'scoped memory for attention_forward.5']
    %7 = vsyncpa [#allocation4], 0
    %s8 = scalar_lea.sflag [#allocation4], 1
    %9 = vsyncpa %s8, 0
    loop: start=0, step=1, limit=4
    $region2: #{attention_forward.5} parent=1 // loop_pre_header
      _
    $region3: #{attention_forward.5} parent=1 // loop_header
      %s11 = sphi 0, %s15
      %p12 = scmp.ge.s32.totalorder %s11, 4
      %s18 = sphi 0, %s37
      %s19 = sphi 0, %s33
      %s20 = sphi 0, %s29
      %s21 = sphi 0, %s18
      %s22 = sphi 0, %s19
      %s23 = sphi 0, %s20
      %s24 = sphi 0, %s21
      %s25 = sphi 0, %s22
      %s26 = sphi 0, %s23
      %s42 = sphi 0, %s44
      %s45 = sphi 0, %s42
      %s46 = sphi 0, %s45
      %s62 = sphi 0, %s46
      %s70 = sphi 0, %s72
      %s73 = sphi 0, %s70
      %s74 = sphi 0, %s73
      %s90 = sphi 0, %s74
      %s98 = sphi 0, %s100
      %s101 = sphi 0, %s98
      %s102 = sphi 0, %s101
      %s118 = sphi 0, %s102
    $region4: #{attention_forward.5} parent=1 // loop_header_branch
      %14 = sbr.rel (%p12) target = $region8
    $region5: #{attention_forward.5} parent=1 // loop_body
      %s16 = ssub.s32 %s11, 1
      %s17 = ssub.s32 %s11, 2
      %s27 = sadd.s32 1, %s20
      %p28 = scmp.ge.s32.totalorder %s27, 1
      %s29 = scalar_select %p28, 0, %s27
      %s30 = sadd.s32 1, %s19
      %s31 = scalar_select %p28, %s30, %s19
      %p32 = scmp.ge.s32.totalorder %s31, 1
      %s33 = scalar_select %p32, 0, %s31
      %s34 = sadd.s32 1, %s18
      %s35 = scalar_select %p32, %s34, %s18
      %p36 = scmp.ge.s32.totalorder %s35, 2
      %s37 = scalar_select %p36, 0, %s35
      %s38 = ssub.s32 %s18, %s37
      %s39 = ssub.s32 %s20, %s29
      %s40 = sor.u32 %s38, %s39
      %p41 = scmp.eq.s32.totalorder %s40, 0
      %s43 = sadd.s32 %s42, 1
      %s44 = scalar_select %p41, %s42, %s43
      %p47 = pneg %p41
      %p48 = scmp.eq.s32.totalorder %s11, 1
      %p49 = por %p47, %p48
      %p50 = scmp.ne.s32.totalorder %s42, %s45
      %p51 = scmp.eq.s32.totalorder %s11, 0
      %p52 = por %p50, %p51
      %p53 = scmp.ne.s32.totalorder %s42, %s45
      %p54 = scmp.eq.s32.totalorder %s16, 1
      %p55 = por %p53, %p54
      %p56 = scmp.ne.s32.totalorder %s45, %s46
      %p57 = scmp.eq.s32.totalorder %s16, 0
      %p58 = por %p56, %p57
      %p59 = scmp.ne.s32.totalorder %s45, %s46
      %p60 = scmp.eq.s32.totalorder %s17, 1
      %p61 = por %p59, %p60
      %p63 = scmp.ne.s32.totalorder %s46, %s62
      %p64 = scmp.eq.s32.totalorder %s17, 0
      %p65 = por %p63, %p64
      %s66 = ssub.s32 %s19, %s33
      %s67 = ssub.s32 %s20, %s29
      %s68 = sor.u32 %s66, %s67
      %p69 = scmp.eq.s32.totalorder %s68, 0
      %s71 = sadd.s32 %s70, 1
      %s72 = scalar_select %p69, %s70, %s71
      %p75 = pneg %p69
      %p76 = scmp.eq.s32.totalorder %s11, 1
      %p77 = por %p75, %p76
      %p78 = scmp.ne.s32.totalorder %s70, %s73
      %p79 = scmp.eq.s32.totalorder %s11, 0
      %p80 = por %p78, %p79
      %p81 = scmp.ne.s32.totalorder %s70, %s73
      %p82 = scmp.eq.s32.totalorder %s16, 1
      %p83 = por %p81, %p82
      %p84 = scmp.ne.s32.totalorder %s73, %s74
      %p85 = scmp.eq.s32.totalorder %s16, 0
      %p86 = por %p84, %p85
      %p87 = scmp.ne.s32.totalorder %s73, %s74
      %p88 = scmp.eq.s32.totalorder %s17, 1
      %p89 = por %p87, %p88
      %p91 = scmp.ne.s32.totalorder %s74, %s90
      %p92 = scmp.eq.s32.totalorder %s17, 0
      %p93 = por %p91, %p92
      %s94 = ssub.s32 %s18, %s37
      %s95 = ssub.s32 %s19, %s33
      %s96 = sor.u32 %s94, %s95
      %p97 = scmp.eq.s32.totalorder %s96, 0
      %s99 = sadd.s32 %s98, 1
      %s100 = scalar_select %p97, %s98, %s99
      %p103 = pneg %p97
      %p104 = scmp.eq.s32.totalorder %s11, 1
      %p105 = por %p103, %p104
      %p106 = scmp.ne.s32.totalorder %s98, %s101
      %p107 = scmp.eq.s32.totalorder %s11, 0
      %p108 = por %p106, %p107
      %p109 = scmp.ne.s32.totalorder %s98, %s101
      %p110 = scmp.eq.s32.totalorder %s16, 1
      %p111 = por %p109, %p110
      %p112 = scmp.ne.s32.totalorder %s101, %s102
      %p113 = scmp.eq.s32.totalorder %s16, 0
      %p114 = por %p112, %p113
      %p115 = scmp.ne.s32.totalorder %s101, %s102
      %p116 = scmp.eq.s32.totalorder %s17, 1
      %p117 = por %p115, %p116
      %p119 = scmp.ne.s32.totalorder %s102, %s118
      %p120 = scmp.eq.s32.totalorder %s17, 0
      %p121 = por %p119, %p120
      %p122 = scmp.le.s32.totalorder 1, %s11
      %p123 = scmp.lt.s32.totalorder %s11, 3
      %p124 = pnand %p122, %p123
      %p125 = pneg %p124
      // Predicated region
      $region9: #{attention_forward.5} parent=5 // pred_check
        _
      $region10: #{attention_forward.5} parent=5 // pred_check_branch
        %127 = sbr.rel (%p124) target = $region12
      $region11: #{attention_forward.5} parent=5 // pred_region
        %s128 = ssub.s32 %s11, 1
        // Predicated region
        $region13: #{attention_forward.5} parent=11 // pred_check
          %p129 = pneg %p86
        $region14: #{attention_forward.5} parent=11 // pred_check_branch
          %131 = sbr.rel (%p129) target = $region16
        $region15: #{attention_forward.5} parent=11 // pred_region
          %s132 = smul.u32 32, %s22
          %s133 = smul.u32 2, %s23
          %p134 = scmp.lt.s32.totalorder %s132, 31
          %s135 = scalar_select %p134, %s132, 31
          %p136 = scmp.lt.s32.totalorder %s133, 1
          %s137 = scalar_select %p136, %s133, 1
          %s138 = smul.addr %s135, 2
          %s139 = sadd.s32 %s137, %s138
          %s140 = smul.addr %s139, 8
          %s141 = scalar_lea.vmem %s1, %s140
          %s142 = smul.u32 32, %s22
          %s143 = smul.u32 2, %s23
        $region16: #{attention_forward.5} parent=11 // pred_fallthru
          _
      $region12: #{attention_forward.5} parent=5 // pred_fallthru
        _
      %p144 = scmp.lt.s32.totalorder %s11, 2
      // Predicated region
      $region17: #{attention_forward.5} parent=5 // pred_check
        %p145 = pneg %p144
      $region18: #{attention_forward.5} parent=5 // pred_check_branch
        %147 = sbr.rel (%p145) target = $region20
      $region19: #{attention_forward.5} parent=5 // pred_region
        // Predicated region
        $region21: #{attention_forward.5} parent=19 // pred_check
          %p148 = pneg %p52
        $region22: #{attention_forward.5} parent=19 // pred_check_branch
          %150 = sbr.rel (%p148) target = $region24
        $region23: #{attention_forward.5} parent=19 // pred_region
          %s151 = smul.u32 32, %s18
          %s152 = smul.u32 2, %s20
          %p153 = scmp.lt.s32.totalorder %s151, 63
          %s154 = scalar_select %p153, %s151, 63
          %p155 = scmp.lt.s32.totalorder %s152, 1
          %s156 = scalar_select %p155, %s152, 1
          %s157 = smul.addr %s154, 2
          %s158 = sadd.s32 %s156, %s157
          %s159 = smul.addr %s158, 8
          %s160 = scalar_lea.vmem %s0, %s159
          %s161 = smul.u32 32, %s18
          %s162 = smul.u32 2, %s20
        $region24: #{attention_forward.5} parent=19 // pred_fallthru
          _
      $region20: #{attention_forward.5} parent=5 // pred_fallthru
        _
      %p163 = scmp.le.s32.totalorder 1, %s11
      %p164 = scmp.lt.s32.totalorder %s11, 3
      %p165 = pnand %p163, %p164
      %p166 = pneg %p165
      // Predicated region
      $region25: #{attention_forward.5} parent=5 // pred_check
        _
      $region26: #{attention_forward.5} parent=5 // pred_check_branch
        %168 = sbr.rel (%p165) target = $region28
      $region27: #{attention_forward.5} parent=5 // pred_region
        %s169 = ssub.s32 %s11, 1
        %s170 = smul.u32 32, %s21
        %s171 = smul.u32 2, %s23
        %p172 = scmp.lt.s32.totalorder %s170, 63
        %s173 = scalar_select %p172, %s170, 63
        %p174 = scmp.lt.s32.totalorder %s171, 1
        %s175 = scalar_select %p174, %s171, 1
        %s176 = smul.addr %s173, 2
        %s177 = sadd.s32 %s175, %s176
        %s178 = smul.addr %s177, 8
        %s179 = scalar_lea.vmem %s0, %s178
        %p180 = pneg %p58
        %p181 = pneg %p55
        %s182 = smul.u32 32, %s22
        %s183 = smul.u32 2, %s23
        %p184 = scmp.lt.s32.totalorder %s182, 31
        %s185 = scalar_select %p184, %s182, 31
        %p186 = scmp.lt.s32.totalorder %s183, 1
        %s187 = scalar_select %p186, %s183, 1
        %s188 = smul.addr %s185, 2
        %s189 = sadd.s32 %s187, %s188
        %s190 = smul.addr %s189, 8
        %s191 = scalar_lea.vmem %s1, %s190
        %p192 = pneg %p86
        %p193 = pneg %p83
        %p194 = pneg %p114
        %p195 = pneg %p111
        %s196 = sand.u32 %s101, 1
        %s197 = scalar_lea.sflag [#allocation4], %s196
        %s198 = sand.u32 %s101, 1
        %s199 = smul.addr %s198, 512
        %s200 = scalar_lea.vmem [#allocation3], %s199
        %s201 = smul.u32 32, %s21
        %s202 = smul.u32 2, %s23
        %p203 = scmp.lt.s32.totalorder %s201, 63
        %s204 = scalar_select %p203, %s201, 63
        %p205 = scmp.lt.s32.totalorder %s202, 1
        %s206 = scalar_select %p205, %s202, 1
        %s207 = smul.addr %s204, 2
        %s208 = sadd.s32 %s206, %s207
        %s209 = smul.addr %s208, 8
        %s210 = scalar_lea.vmem %s0, %s209
        %s211 = smul.u32 32, %s21
        %s212 = smul.u32 2, %s23
        %s213 = smul.u32 32, %s22
        %s214 = smul.u32 2, %s23
        %p215 = scmp.lt.s32.totalorder %s213, 31
        %s216 = scalar_select %p215, %s213, 31
        %p217 = scmp.lt.s32.totalorder %s214, 1
        %s218 = scalar_select %p217, %s214, 1
        %s219 = smul.addr %s216, 2
        %s220 = sadd.s32 %s218, %s219
        %s221 = smul.addr %s220, 8
        %s222 = scalar_lea.vmem %s1, %s221
        %s223 = smul.u32 32, %s22
        %s224 = smul.u32 2, %s23
        %s225 = smul.u32 32, %s21
        %s226 = smul.u32 2, %s22
        %p227 = scmp.eq.s32.totalorder %s23, 0
        // Predicated region
        $region29: #{attention_forward.5} parent=27 // pred_check
          %p228 = pneg %p227
        $region30: #{attention_forward.5} parent=27 // pred_check_branch
          %230 = sbr.rel (%p228) target = $region32
        $region31: #{attention_forward.5} parent=27 // pred_region
          %231 = vst [vmem:[#allocation2] sm:$0xff] 0.0
          %232 = vst [vmem:[#allocation2 + $0x8] sm:$0xff] 0.0
          %233 = vst [vmem:[#allocation2 + $0x10] sm:$0xff] 0.0
          %234 = vst [vmem:[#allocation2 + $0x18] sm:$0xff] 0.0
          %235 = vst [vmem:[#allocation2 + $0x20] sm:$0xff] 0.0
          %236 = vst [vmem:[#allocation2 + $0x28] sm:$0xff] 0.0
          %237 = vst [vmem:[#allocation2 + $0x30] sm:$0xff] 0.0
          %238 = vst [vmem:[#allocation2 + $0x38] sm:$0xff] 0.0
          %239 = vst [vmem:[#allocation2 + $0x40] sm:$0xff] 0.0
          %240 = vst [vmem:[#allocation2 + $0x48] sm:$0xff] 0.0
          %241 = vst [vmem:[#allocation2 + $0x50] sm:$0xff] 0.0
          %242 = vst [vmem:[#allocation2 + $0x58] sm:$0xff] 0.0
          %243 = vst [vmem:[#allocation2 + $0x60] sm:$0xff] 0.0
          %244 = vst [vmem:[#allocation2 + $0x68] sm:$0xff] 0.0
          %245 = vst [vmem:[#allocation2 + $0x70] sm:$0xff] 0.0
          %246 = vst [vmem:[#allocation2 + $0x78] sm:$0xff] 0.0
          %247 = vst [vmem:[#allocation2 + $0x80] sm:$0xff] 0.0
          %248 = vst [vmem:[#allocation2 + $0x88] sm:$0xff] 0.0
          %249 = vst [vmem:[#allocation2 + $0x90] sm:$0xff] 0.0
          %250 = vst [vmem:[#allocation2 + $0x98] sm:$0xff] 0.0
          %251 = vst [vmem:[#allocation2 + $0xa0] sm:$0xff] 0.0
          %252 = vst [vmem:[#allocation2 + $0xa8] sm:$0xff] 0.0
          %253 = vst [vmem:[#allocation2 + $0xb0] sm:$0xff] 0.0
          %254 = vst [vmem:[#allocation2 + $0xb8] sm:$0xff] 0.0
          %255 = vst [vmem:[#allocation2 + $0xc0] sm:$0xff] 0.0
          %256 = vst [vmem:[#allocation2 + $0xc8] sm:$0xff] 0.0
          %257 = vst [vmem:[#allocation2 + $0xd0] sm:$0xff] 0.0
          %258 = vst [vmem:[#allocation2 + $0xd8] sm:$0xff] 0.0
          %259 = vst [vmem:[#allocation2 + $0xe0] sm:$0xff] 0.0
          %260 = vst [vmem:[#allocation2 + $0xe8] sm:$0xff] 0.0
          %261 = vst [vmem:[#allocation2 + $0xf0] sm:$0xff] 0.0
          %262 = vst [vmem:[#allocation2 + $0xf8] sm:$0xff] 0.0
          %263 = vst [vmem:[#allocation2 + $0x100] sm:$0xff] 0.0
          %264 = vst [vmem:[#allocation2 + $0x108] sm:$0xff] 0.0
          %265 = vst [vmem:[#allocation2 + $0x110] sm:$0xff] 0.0
          %266 = vst [vmem:[#allocation2 + $0x118] sm:$0xff] 0.0
          %267 = vst [vmem:[#allocation2 + $0x120] sm:$0xff] 0.0
          %268 = vst [vmem:[#allocation2 + $0x128] sm:$0xff] 0.0
          %269 = vst [vmem:[#allocation2 + $0x130] sm:$0xff] 0.0
          %270 = vst [vmem:[#allocation2 + $0x138] sm:$0xff] 0.0
          %271 = vst [vmem:[#allocation2 + $0x140] sm:$0xff] 0.0
          %272 = vst [vmem:[#allocation2 + $0x148] sm:$0xff] 0.0
          %273 = vst [vmem:[#allocation2 + $0x150] sm:$0xff] 0.0
          %274 = vst [vmem:[#allocation2 + $0x158] sm:$0xff] 0.0
          %275 = vst [vmem:[#allocation2 + $0x160] sm:$0xff] 0.0
          %276 = vst [vmem:[#allocation2 + $0x168] sm:$0xff] 0.0
          %277 = vst [vmem:[#allocation2 + $0x170] sm:$0xff] 0.0
          %278 = vst [vmem:[#allocation2 + $0x178] sm:$0xff] 0.0
          %279 = vst [vmem:[#allocation2 + $0x180] sm:$0xff] 0.0
          %280 = vst [vmem:[#allocation2 + $0x188] sm:$0xff] 0.0
          %281 = vst [vmem:[#allocation2 + $0x190] sm:$0xff] 0.0
          %282 = vst [vmem:[#allocation2 + $0x198] sm:$0xff] 0.0
          %283 = vst [vmem:[#allocation2 + $0x1a0] sm:$0xff] 0.0
          %284 = vst [vmem:[#allocation2 + $0x1a8] sm:$0xff] 0.0
          %285 = vst [vmem:[#allocation2 + $0x1b0] sm:$0xff] 0.0
          %286 = vst [vmem:[#allocation2 + $0x1b8] sm:$0xff] 0.0
          %287 = vst [vmem:[#allocation2 + $0x1c0] sm:$0xff] 0.0
          %288 = vst [vmem:[#allocation2 + $0x1c8] sm:$0xff] 0.0
          %289 = vst [vmem:[#allocation2 + $0x1d0] sm:$0xff] 0.0
          %290 = vst [vmem:[#allocation2 + $0x1d8] sm:$0xff] 0.0
          %291 = vst [vmem:[#allocation2 + $0x1e0] sm:$0xff] 0.0
          %292 = vst [vmem:[#allocation2 + $0x1e8] sm:$0xff] 0.0
          %293 = vst [vmem:[#allocation2 + $0x1f0] sm:$0xff] 0.0
          %294 = vst [vmem:[#allocation2 + $0x1f8] sm:$0xff] 0.0
        $region32: #{attention_forward.5} parent=27 // pred_fallthru
          _
        %v295 = vld [vmem:[#allocation2] sm:$0xff]
        %v296 = vld [vmem:[#allocation2 + $0x8] sm:$0xff]
        %v297 = vld [vmem:[#allocation2 + $0x10] sm:$0xff]
        %v298 = vld [vmem:[#allocation2 + $0x18] sm:$0xff]
        %v299 = vld [vmem:[#allocation2 + $0x20] sm:$0xff]
        %v300 = vld [vmem:[#allocation2 + $0x28] sm:$0xff]
        %v301 = vld [vmem:[#allocation2 + $0x30] sm:$0xff]
        %v302 = vld [vmem:[#allocation2 + $0x38] sm:$0xff]
        %v303 = vld [vmem:[#allocation2 + $0x40] sm:$0xff]
        %v304 = vld [vmem:[#allocation2 + $0x48] sm:$0xff]
        %v305 = vld [vmem:[#allocation2 + $0x50] sm:$0xff]
        %v306 = vld [vmem:[#allocation2 + $0x58] sm:$0xff]
        %v307 = vld [vmem:[#allocation2 + $0x60] sm:$0xff]
        %v308 = vld [vmem:[#allocation2 + $0x68] sm:$0xff]
        %v309 = vld [vmem:[#allocation2 + $0x70] sm:$0xff]
        %v310 = vld [vmem:[#allocation2 + $0x78] sm:$0xff]
        %v311 = vld [vmem:[#allocation2 + $0x80] sm:$0xff]
        %v312 = vld [vmem:[#allocation2 + $0x88] sm:$0xff]
        %v313 = vld [vmem:[#allocation2 + $0x90] sm:$0xff]
        %v314 = vld [vmem:[#allocation2 + $0x98] sm:$0xff]
        %v315 = vld [vmem:[#allocation2 + $0xa0] sm:$0xff]
        %v316 = vld [vmem:[#allocation2 + $0xa8] sm:$0xff]
        %v317 = vld [vmem:[#allocation2 + $0xb0] sm:$0xff]
        %v318 = vld [vmem:[#allocation2 + $0xb8] sm:$0xff]
        %v319 = vld [vmem:[#allocation2 + $0xc0] sm:$0xff]
        %v320 = vld [vmem:[#allocation2 + $0xc8] sm:$0xff]
        %v321 = vld [vmem:[#allocation2 + $0xd0] sm:$0xff]
        %v322 = vld [vmem:[#allocation2 + $0xd8] sm:$0xff]
        %v323 = vld [vmem:[#allocation2 + $0xe0] sm:$0xff]
        %v324 = vld [vmem:[#allocation2 + $0xe8] sm:$0xff]
        %v325 = vld [vmem:[#allocation2 + $0xf0] sm:$0xff]
        %v326 = vld [vmem:[#allocation2 + $0xf8] sm:$0xff]
        %v327 = vld [vmem:[#allocation2 + $0x100] sm:$0xff]
        %v328 = vld [vmem:[#allocation2 + $0x108] sm:$0xff]
        %v329 = vld [vmem:[#allocation2 + $0x110] sm:$0xff]
        %v330 = vld [vmem:[#allocation2 + $0x118] sm:$0xff]
        %v331 = vld [vmem:[#allocation2 + $0x120] sm:$0xff]
        %v332 = vld [vmem:[#allocation2 + $0x128] sm:$0xff]
        %v333 = vld [vmem:[#allocation2 + $0x130] sm:$0xff]
        %v334 = vld [vmem:[#allocation2 + $0x138] sm:$0xff]
        %v335 = vld [vmem:[#allocation2 + $0x140] sm:$0xff]
        %v336 = vld [vmem:[#allocation2 + $0x148] sm:$0xff]
        %v337 = vld [vmem:[#allocation2 + $0x150] sm:$0xff]
        %v338 = vld [vmem:[#allocation2 + $0x158] sm:$0xff]
        %v339 = vld [vmem:[#allocation2 + $0x160] sm:$0xff]
        %v340 = vld [vmem:[#allocation2 + $0x168] sm:$0xff]
        %v341 = vld [vmem:[#allocation2 + $0x170] sm:$0xff]
        %v342 = vld [vmem:[#allocation2 + $0x178] sm:$0xff]
        %v343 = vld [vmem:[#allocation2 + $0x180] sm:$0xff]
        %v344 = vld [vmem:[#allocation2 + $0x188] sm:$0xff]
        %v345 = vld [vmem:[#allocation2 + $0x190] sm:$0xff]
        %v346 = vld [vmem:[#allocation2 + $0x198] sm:$0xff]
        %v347 = vld [vmem:[#allocation2 + $0x1a0] sm:$0xff]
        %v348 = vld [vmem:[#allocation2 + $0x1a8] sm:$0xff]
        %v349 = vld [vmem:[#allocation2 + $0x1b0] sm:$0xff]
        %v350 = vld [vmem:[#allocation2 + $0x1b8] sm:$0xff]
        %v351 = vld [vmem:[#allocation2 + $0x1c0] sm:$0xff]
        %v352 = vld [vmem:[#allocation2 + $0x1c8] sm:$0xff]
        %v353 = vld [vmem:[#allocation2 + $0x1d0] sm:$0xff]
        %v354 = vld [vmem:[#allocation2 + $0x1d8] sm:$0xff]
        %v355 = vld [vmem:[#allocation2 + $0x1e0] sm:$0xff]
        %v356 = vld [vmem:[#allocation2 + $0x1e8] sm:$0xff]
        %v357 = vld [vmem:[#allocation2 + $0x1f0] sm:$0xff]
        %v358 = vld [vmem:[#allocation2 + $0x1f8] sm:$0xff]
        %v359 = vld [vmem:[%s210] sm:$0xff]
        %v360 = vld [vmem:[%s210 + $0x8] sm:$0xff]
        %v361 = vld [vmem:[%s210 + $0x10] sm:$0xff]
        %v362 = vld [vmem:[%s210 + $0x18] sm:$0xff]
        %v363 = vld [vmem:[%s210 + $0x20] sm:$0xff]
        %v364 = vld [vmem:[%s210 + $0x28] sm:$0xff]
        %v365 = vld [vmem:[%s210 + $0x30] sm:$0xff]
        %v366 = vld [vmem:[%s210 + $0x38] sm:$0xff]
        %v367 = vld [vmem:[%s210 + $0x40] sm:$0xff]
        %v368 = vld [vmem:[%s210 + $0x48] sm:$0xff]
        %v369 = vld [vmem:[%s210 + $0x50] sm:$0xff]
        %v370 = vld [vmem:[%s210 + $0x58] sm:$0xff]
        %v371 = vld [vmem:[%s210 + $0x60] sm:$0xff]
        %v372 = vld [vmem:[%s210 + $0x68] sm:$0xff]
        %v373 = vld [vmem:[%s210 + $0x70] sm:$0xff]
        %v374 = vld [vmem:[%s210 + $0x78] sm:$0xff]
        %v375 = vld [vmem:[%s210 + $0x80] sm:$0xff]
        %v376 = vld [vmem:[%s210 + $0x88] sm:$0xff]
        %v377 = vld [vmem:[%s210 + $0x90] sm:$0xff]
        %v378 = vld [vmem:[%s210 + $0x98] sm:$0xff]
        %v379 = vld [vmem:[%s210 + $0xa0] sm:$0xff]
        %v380 = vld [vmem:[%s210 + $0xa8] sm:$0xff]
        %v381 = vld [vmem:[%s210 + $0xb0] sm:$0xff]
        %v382 = vld [vmem:[%s210 + $0xb8] sm:$0xff]
        %v383 = vld [vmem:[%s210 + $0xc0] sm:$0xff]
        %v384 = vld [vmem:[%s210 + $0xc8] sm:$0xff]
        %v385 = vld [vmem:[%s210 + $0xd0] sm:$0xff]
        %v386 = vld [vmem:[%s210 + $0xd8] sm:$0xff]
        %v387 = vld [vmem:[%s210 + $0xe0] sm:$0xff]
        %v388 = vld [vmem:[%s210 + $0xe8] sm:$0xff]
        %v389 = vld [vmem:[%s210 + $0xf0] sm:$0xff]
        %v390 = vld [vmem:[%s210 + $0xf8] sm:$0xff]
        %v391 = vld [vmem:[%s210 + $0x100] sm:$0xff]
        %v392 = vld [vmem:[%s210 + $0x108] sm:$0xff]
        %v393 = vld [vmem:[%s210 + $0x110] sm:$0xff]
        %v394 = vld [vmem:[%s210 + $0x118] sm:$0xff]
        %v395 = vld [vmem:[%s210 + $0x120] sm:$0xff]
        %v396 = vld [vmem:[%s210 + $0x128] sm:$0xff]
        %v397 = vld [vmem:[%s210 + $0x130] sm:$0xff]
        %v398 = vld [vmem:[%s210 + $0x138] sm:$0xff]
        %v399 = vld [vmem:[%s210 + $0x140] sm:$0xff]
        %v400 = vld [vmem:[%s210 + $0x148] sm:$0xff]
        %v401 = vld [vmem:[%s210 + $0x150] sm:$0xff]
        %v402 = vld [vmem:[%s210 + $0x158] sm:$0xff]
        %v403 = vld [vmem:[%s210 + $0x160] sm:$0xff]
        %v404 = vld [vmem:[%s210 + $0x168] sm:$0xff]
        %v405 = vld [vmem:[%s210 + $0x170] sm:$0xff]
        %v406 = vld [vmem:[%s210 + $0x178] sm:$0xff]
        %v407 = vld [vmem:[%s210 + $0x180] sm:$0xff]
        %v408 = vld [vmem:[%s210 + $0x188] sm:$0xff]
        %v409 = vld [vmem:[%s210 + $0x190] sm:$0xff]
        %v410 = vld [vmem:[%s210 + $0x198] sm:$0xff]
        %v411 = vld [vmem:[%s210 + $0x1a0] sm:$0xff]
        %v412 = vld [vmem:[%s210 + $0x1a8] sm:$0xff]
        %v413 = vld [vmem:[%s210 + $0x1b0] sm:$0xff]
        %v414 = vld [vmem:[%s210 + $0x1b8] sm:$0xff]
        %v415 = vld [vmem:[%s210 + $0x1c0] sm:$0xff]
        %v416 = vld [vmem:[%s210 + $0x1c8] sm:$0xff]
        %v417 = vld [vmem:[%s210 + $0x1d0] sm:$0xff]
        %v418 = vld [vmem:[%s210 + $0x1d8] sm:$0xff]
        %v419 = vld [vmem:[%s210 + $0x1e0] sm:$0xff]
        %v420 = vld [vmem:[%s210 + $0x1e8] sm:$0xff]
        %v421 = vld [vmem:[%s210 + $0x1f0] sm:$0xff]
        %v422 = vld [vmem:[%s210 + $0x1f8] sm:$0xff]
        %v423 = vld [vmem:[%s222] sm:$0xff]
        %v424 = vld [vmem:[%s222 + $0x8] sm:$0xff]
        %v425 = vld [vmem:[%s222 + $0x10] sm:$0xff]
        %v426 = vld [vmem:[%s222 + $0x18] sm:$0xff]
        %v427 = vld [vmem:[%s222 + $0x20] sm:$0xff]
        %v428 = vld [vmem:[%s222 + $0x28] sm:$0xff]
        %v429 = vld [vmem:[%s222 + $0x30] sm:$0xff]
        %v430 = vld [vmem:[%s222 + $0x38] sm:$0xff]
        %v431 = vld [vmem:[%s222 + $0x40] sm:$0xff]
        %v432 = vld [vmem:[%s222 + $0x48] sm:$0xff]
        %v433 = vld [vmem:[%s222 + $0x50] sm:$0xff]
        %v434 = vld [vmem:[%s222 + $0x58] sm:$0xff]
        %v435 = vld [vmem:[%s222 + $0x60] sm:$0xff]
        %v436 = vld [vmem:[%s222 + $0x68] sm:$0xff]
        %v437 = vld [vmem:[%s222 + $0x70] sm:$0xff]
        %v438 = vld [vmem:[%s222 + $0x78] sm:$0xff]
        %v439 = vld [vmem:[%s222 + $0x80] sm:$0xff]
        %v440 = vld [vmem:[%s222 + $0x88] sm:$0xff]
        %v441 = vld [vmem:[%s222 + $0x90] sm:$0xff]
        %v442 = vld [vmem:[%s222 + $0x98] sm:$0xff]
        %v443 = vld [vmem:[%s222 + $0xa0] sm:$0xff]
        %v444 = vld [vmem:[%s222 + $0xa8] sm:$0xff]
        %v445 = vld [vmem:[%s222 + $0xb0] sm:$0xff]
        %v446 = vld [vmem:[%s222 + $0xb8] sm:$0xff]
        %v447 = vld [vmem:[%s222 + $0xc0] sm:$0xff]
        %v448 = vld [vmem:[%s222 + $0xc8] sm:$0xff]
        %v449 = vld [vmem:[%s222 + $0xd0] sm:$0xff]
        %v450 = vld [vmem:[%s222 + $0xd8] sm:$0xff]
        %v451 = vld [vmem:[%s222 + $0xe0] sm:$0xff]
        %v452 = vld [vmem:[%s222 + $0xe8] sm:$0xff]
        %v453 = vld [vmem:[%s222 + $0xf0] sm:$0xff]
        %v454 = vld [vmem:[%s222 + $0xf8] sm:$0xff]
        %v455 = vld [vmem:[%s222 + $0x100] sm:$0xff]
        %v456 = vld [vmem:[%s222 + $0x108] sm:$0xff]
        %v457 = vld [vmem:[%s222 + $0x110] sm:$0xff]
        %v458 = vld [vmem:[%s222 + $0x118] sm:$0xff]
        %v459 = vld [vmem:[%s222 + $0x120] sm:$0xff]
        %v460 = vld [vmem:[%s222 + $0x128] sm:$0xff]
        %v461 = vld [vmem:[%s222 + $0x130] sm:$0xff]
        %v462 = vld [vmem:[%s222 + $0x138] sm:$0xff]
        %v463 = vld [vmem:[%s222 + $0x140] sm:$0xff]
        %v464 = vld [vmem:[%s222 + $0x148] sm:$0xff]
        %v465 = vld [vmem:[%s222 + $0x150] sm:$0xff]
        %v466 = vld [vmem:[%s222 + $0x158] sm:$0xff]
        %v467 = vld [vmem:[%s222 + $0x160] sm:$0xff]
        %v468 = vld [vmem:[%s222 + $0x168] sm:$0xff]
        %v469 = vld [vmem:[%s222 + $0x170] sm:$0xff]
        %v470 = vld [vmem:[%s222 + $0x178] sm:$0xff]
        %v471 = vld [vmem:[%s222 + $0x180] sm:$0xff]
        %v472 = vld [vmem:[%s222 + $0x188] sm:$0xff]
        %v473 = vld [vmem:[%s222 + $0x190] sm:$0xff]
        %v474 = vld [vmem:[%s222 + $0x198] sm:$0xff]
        %v475 = vld [vmem:[%s222 + $0x1a0] sm:$0xff]
        %v476 = vld [vmem:[%s222 + $0x1a8] sm:$0xff]
        %v477 = vld [vmem:[%s222 + $0x1b0] sm:$0xff]
        %v478 = vld [vmem:[%s222 + $0x1b8] sm:$0xff]
        %v479 = vld [vmem:[%s222 + $0x1c0] sm:$0xff]
        %v480 = vld [vmem:[%s222 + $0x1c8] sm:$0xff]
        %v481 = vld [vmem:[%s222 + $0x1d0] sm:$0xff]
        %v482 = vld [vmem:[%s222 + $0x1d8] sm:$0xff]
        %v483 = vld [vmem:[%s222 + $0x1e0] sm:$0xff]
        %v484 = vld [vmem:[%s222 + $0x1e8] sm:$0xff]
        %v485 = vld [vmem:[%s222 + $0x1f0] sm:$0xff]
        %v486 = vld [vmem:[%s222 + $0x1f8] sm:$0xff]
        %487 = vmatprep.subr.mxu0 %v424
        %488 = vmatpush1.xpose.msra.mxu0 %v423
        %489 = vmatprep.subr.mxu0 %v426
        %490 = vmatpush1.xpose.msra.mxu0 %v425
        %491 = vmatprep.subr.mxu0 %v428
        %492 = vmatpush1.xpose.msra.mxu0 %v427
        %493 = vmatprep.subr.mxu0 %v430
        %494 = vmatpush1.xpose.msra.mxu0 %v429
        %495 = vmatprep.subr.mxu0 %v432
        %496 = vmatpush1.xpose.msra.mxu0 %v431
        %497 = vmatprep.subr.mxu0 %v434
        %498 = vmatpush1.xpose.msra.mxu0 %v433
        %499 = vmatprep.subr.mxu0 %v436
        %500 = vmatpush1.xpose.msra.mxu0 %v435
        %501 = vmatprep.subr.mxu0 %v438
        %502 = vmatpush1.xpose.msra.mxu0 %v437
        %503 = vmatprep.subr.mxu0 %v440
        %504 = vmatpush1.xpose.msra.mxu0 %v439
        %505 = vmatprep.subr.mxu0 %v442
        %506 = vmatpush1.xpose.msra.mxu0 %v441
        %507 = vmatprep.subr.mxu0 %v444
        %508 = vmatpush1.xpose.msra.mxu0 %v443
        %509 = vmatprep.subr.mxu0 %v446
        %510 = vmatpush1.xpose.msra.mxu0 %v445
        %511 = vmatprep.subr.mxu0 %v448
        %512 = vmatpush1.xpose.msra.mxu0 %v447
        %513 = vmatprep.subr.mxu0 %v450
        %514 = vmatpush1.xpose.msra.mxu0 %v449
        %515 = vmatprep.subr.mxu0 %v452
        %516 = vmatpush1.xpose.msra.mxu0 %v451
        %517 = vmatprep.subr.mxu0 %v454
        %518 = vmatpush1.xpose.msra.mxu0 %v453
        %519 = vmatprep.subr.mxu0 %v456
        %520 = vmatpush1.xpose.msra.mxu0 %v455
        %521 = vmatprep.subr.mxu0 %v458
        %522 = vmatpush1.xpose.msra.mxu0 %v457
        %523 = vmatprep.subr.mxu0 %v460
        %524 = vmatpush1.xpose.msra.mxu0 %v459
        %525 = vmatprep.subr.mxu0 %v462
        %526 = vmatpush1.xpose.msra.mxu0 %v461
        %527 = vmatprep.subr.mxu0 %v464
        %528 = vmatpush1.xpose.msra.mxu0 %v463
        %529 = vmatprep.subr.mxu0 %v466
        %530 = vmatpush1.xpose.msra.mxu0 %v465
        %531 = vmatprep.subr.mxu0 %v468
        %532 = vmatpush1.xpose.msra.mxu0 %v467
        %533 = vmatprep.subr.mxu0 %v470
        %534 = vmatpush1.xpose.msra.mxu0 %v469
        %535 = vmatprep.subr.mxu0 %v472
        %536 = vmatpush1.xpose.msra.mxu0 %v471
        %537 = vmatprep.subr.mxu0 %v474
        %538 = vmatpush1.xpose.msra.mxu0 %v473
        %539 = vmatprep.subr.mxu0 %v476
        %540 = vmatpush1.xpose.msra.mxu0 %v475
        %541 = vmatprep.subr.mxu0 %v478
        %542 = vmatpush1.xpose.msra.mxu0 %v477
        %543 = vmatprep.subr.mxu0 %v480
        %544 = vmatpush1.xpose.msra.mxu0 %v479
        %545 = vmatprep.subr.mxu0 %v482
        %546 = vmatpush1.xpose.msra.mxu0 %v481
        %547 = vmatprep.subr.mxu0 %v484
        %548 = vmatpush1.xpose.msra.mxu0 %v483
        %549 = vmatprep.subr.mxu0 %v486
        %550 = vmatpush1.xpose.msra.mxu0 %v485
        %551 = vmatprep.mubr.f32.mxu0 %v360
        %552 = vmatmul.mubr.f32.gmra.mrb[0].mxu0 %v359
        %v553 = vpop.f32.mrb[0].mxu0
        %v554 = vadd.f32 0.0, %v553
        %v555 = vpop.f32.mrb[0].mxu0
        %v556 = vadd.f32 0.0, %v555
        %557 = vmatprep.mubr.f32.mxu0 %v362
        %558 = vmatmul.mubr.f32.gmra.mrb[0].mxu0 %v361
        %v559 = vpop.f32.mrb[0].mxu0
        %v560 = vadd.f32 0.0, %v559
        %v561 = vpop.f32.mrb[0].mxu0
        %v562 = vadd.f32 0.0, %v561
        %563 = vmatprep.mubr.f32.mxu0 %v364
        %564 = vmatmul.mubr.f32.gmra.mrb[0].mxu0 %v363
        %v565 = vpop.f32.mrb[0].mxu0
        %v566 = vadd.f32 0.0, %v565
        %v567 = vpop.f32.mrb[0].mxu0
        %v568 = vadd.f32 0.0, %v567
        %569 = vmatprep.mubr.f32.mxu0 %v366
        %570 = vmatmul.mubr.f32.gmra.mrb[0].mxu0 %v365
        %v571 = vpop.f32.mrb[0].mxu0
        %v572 = vadd.f32 0.0, %v571
        %v573 = vpop.f32.mrb[0].mxu0
        %v574 = vadd.f32 0.0, %v573
        %575 = vmatprep.mubr.f32.mxu0 %v368
        %576 = vmatmul.mubr.f32.gmra.mrb[0].mxu0 %v367
        %v577 = vpop.f32.mrb[0].mxu0
        %v578 = vadd.f32 0.0, %v577
        %v579 = vpop.f32.mrb[0].mxu0
        %v580 = vadd.f32 0.0, %v579
        %581 = vmatprep.mubr.f32.mxu0 %v370
        %582 = vmatmul.mubr.f32.gmra.mrb[0].mxu0 %v369
        %v583 = vpop.f32.mrb[0].mxu0
        %v584 = vadd.f32 0.0, %v583
        %v585 = vpop.f32.mrb[0].mxu0
        %v586 = vadd.f32 0.0, %v585
        %587 = vmatprep.mubr.f32.mxu0 %v372
        %588 = vmatmul.mubr.f32.gmra.mrb[0].mxu0 %v371
        %v589 = vpop.f32.mrb[0].mxu0
        %v590 = vadd.f32 0.0, %v589
        %v591 = vpop.f32.mrb[0].mxu0
        %v592 = vadd.f32 0.0, %v591
        %593 = vmatprep.mubr.f32.mxu0 %v374
        %594 = vmatmul.mubr.f32.gmra.mrb[0].mxu0 %v373
        %v595 = vpop.f32.mrb[0].mxu0
        %v596 = vadd.f32 0.0, %v595
        %v597 = vpop.f32.mrb[0].mxu0
        %v598 = vadd.f32 0.0, %v597
        %599 = vmatprep.mubr.f32.mxu0 %v376
        %600 = vmatmul.mubr.f32.gmra.mrb[0].mxu0 %v375
        %v601 = vpop.f32.mrb[0].mxu0
        %v602 = vadd.f32 0.0, %v601
        %v603 = vpop.f32.mrb[0].mxu0
        %v604 = vadd.f32 0.0, %v603
        %605 = vmatprep.mubr.f32.mxu0 %v378
        %606 = vmatmul.mubr.f32.gmra.mrb[0].mxu0 %v377
        %v607 = vpop.f32.mrb[0].mxu0
        %v608 = vadd.f32 0.0, %v607
        %v609 = vpop.f32.mrb[0].mxu0
        %v610 = vadd.f32 0.0, %v609
        %611 = vmatprep.mubr.f32.mxu0 %v380
        %612 = vmatmul.mubr.f32.gmra.mrb[0].mxu0 %v379
        %v613 = vpop.f32.mrb[0].mxu0
        %v614 = vadd.f32 0.0, %v613
        %v615 = vpop.f32.mrb[0].mxu0
        %v616 = vadd.f32 0.0, %v615
        %617 = vmatprep.mubr.f32.mxu0 %v382
        %618 = vmatmul.mubr.f32.gmra.mrb[0].mxu0 %v381
        %v619 = vpop.f32.mrb[0].mxu0
        %v620 = vadd.f32 0.0, %v619
        %v621 = vpop.f32.mrb[0].mxu0
        %v622 = vadd.f32 0.0, %v621
        %623 = vmatprep.mubr.f32.mxu0 %v384
        %624 = vmatmul.mubr.f32.gmra.mrb[0].mxu0 %v383
        %v625 = vpop.f32.mrb[0].mxu0
        %v626 = vadd.f32 0.0, %v625
        %v627 = vpop.f32.mrb[0].mxu0
        %v628 = vadd.f32 0.0, %v627
        %629 = vmatprep.mubr.f32.mxu0 %v386
        %630 = vmatmul.mubr.f32.gmra.mrb[0].mxu0 %v385
        %v631 = vpop.f32.mrb[0].mxu0
        %v632 = vadd.f32 0.0, %v631
        %v633 = vpop.f32.mrb[0].mxu0
        %v634 = vadd.f32 0.0, %v633
        %635 = vmatprep.mubr.f32.mxu0 %v388
        %636 = vmatmul.mubr.f32.gmra.mrb[0].mxu0 %v387
        %v637 = vpop.f32.mrb[0].mxu0
        %v638 = vadd.f32 0.0, %v637
        %v639 = vpop.f32.mrb[0].mxu0
        %v640 = vadd.f32 0.0, %v639
        %641 = vmatprep.mubr.f32.mxu0 %v390
        %642 = vmatmul.mubr.f32.gmra.mrb[0].mxu0 %v389
        %v643 = vpop.f32.mrb[0].mxu0
        %v644 = vadd.f32 0.0, %v643
        %v645 = vpop.f32.mrb[0].mxu0
        %v646 = vadd.f32 0.0, %v645
        %647 = vmatprep.mubr.f32.mxu0 %v392
        %648 = vmatmul.mubr.f32.gmra.mrb[0].mxu0 %v391
        %v649 = vpop.f32.mrb[0].mxu0
        %v650 = vadd.f32 0.0, %v649
        %v651 = vpop.f32.mrb[0].mxu0
        %v652 = vadd.f32 0.0, %v651
        %653 = vmatprep.mubr.f32.mxu0 %v394
        %654 = vmatmul.mubr.f32.gmra.mrb[0].mxu0 %v393
        %v655 = vpop.f32.mrb[0].mxu0
        %v656 = vadd.f32 0.0, %v655
        %v657 = vpop.f32.mrb[0].mxu0
        %v658 = vadd.f32 0.0, %v657
        %659 = vmatprep.mubr.f32.mxu0 %v396
        %660 = vmatmul.mubr.f32.gmra.mrb[0].mxu0 %v395
        %v661 = vpop.f32.mrb[0].mxu0
        %v662 = vadd.f32 0.0, %v661
        %v663 = vpop.f32.mrb[0].mxu0
        %v664 = vadd.f32 0.0, %v663
        %665 = vmatprep.mubr.f32.mxu0 %v398
        %666 = vmatmul.mubr.f32.gmra.mrb[0].mxu0 %v397
        %v667 = vpop.f32.mrb[0].mxu0
        %v668 = vadd.f32 0.0, %v667
        %v669 = vpop.f32.mrb[0].mxu0
        %v670 = vadd.f32 0.0, %v669
        %671 = vmatprep.mubr.f32.mxu0 %v400
        %672 = vmatmul.mubr.f32.gmra.mrb[0].mxu0 %v399
        %v673 = vpop.f32.mrb[0].mxu0
        %v674 = vadd.f32 0.0, %v673
        %v675 = vpop.f32.mrb[0].mxu0
        %v676 = vadd.f32 0.0, %v675
        %677 = vmatprep.mubr.f32.mxu0 %v402
        %678 = vmatmul.mubr.f32.gmra.mrb[0].mxu0 %v401
        %v679 = vpop.f32.mrb[0].mxu0
        %v680 = vadd.f32 0.0, %v679
        %v681 = vpop.f32.mrb[0].mxu0
        %v682 = vadd.f32 0.0, %v681
        %683 = vmatprep.mubr.f32.mxu0 %v404
        %684 = vmatmul.mubr.f32.gmra.mrb[0].mxu0 %v403
        %v685 = vpop.f32.mrb[0].mxu0
        %v686 = vadd.f32 0.0, %v685
        %v687 = vpop.f32.mrb[0].mxu0
        %v688 = vadd.f32 0.0, %v687
        %689 = vmatprep.mubr.f32.mxu0 %v406
        %690 = vmatmul.mubr.f32.gmra.mrb[0].mxu0 %v405
        %v691 = vpop.f32.mrb[0].mxu0
        %v692 = vadd.f32 0.0, %v691
        %v693 = vpop.f32.mrb[0].mxu0
        %v694 = vadd.f32 0.0, %v693
        %695 = vmatprep.mubr.f32.mxu0 %v408
        %696 = vmatmul.mubr.f32.gmra.mrb[0].mxu0 %v407
        %v697 = vpop.f32.mrb[0].mxu0
        %v698 = vadd.f32 0.0, %v697
        %v699 = vpop.f32.mrb[0].mxu0
        %v700 = vadd.f32 0.0, %v699
        %701 = vmatprep.mubr.f32.mxu0 %v410
        %702 = vmatmul.mubr.f32.gmra.mrb[0].mxu0 %v409
        %v703 = vpop.f32.mrb[0].mxu0
        %v704 = vadd.f32 0.0, %v703
        %v705 = vpop.f32.mrb[0].mxu0
        %v706 = vadd.f32 0.0, %v705
        %707 = vmatprep.mubr.f32.mxu0 %v412
        %708 = vmatmul.mubr.f32.gmra.mrb[0].mxu0 %v411
        %v709 = vpop.f32.mrb[0].mxu0
        %v710 = vadd.f32 0.0, %v709
        %v711 = vpop.f32.mrb[0].mxu0
        %v712 = vadd.f32 0.0, %v711
        %713 = vmatprep.mubr.f32.mxu0 %v414
        %714 = vmatmul.mubr.f32.gmra.mrb[0].mxu0 %v413
        %v715 = vpop.f32.mrb[0].mxu0
        %v716 = vadd.f32 0.0, %v715
        %v717 = vpop.f32.mrb[0].mxu0
        %v718 = vadd.f32 0.0, %v717
        %719 = vmatprep.mubr.f32.mxu0 %v416
        %720 = vmatmul.mubr.f32.gmra.mrb[0].mxu0 %v415
        %v721 = vpop.f32.mrb[0].mxu0
        %v722 = vadd.f32 0.0, %v721
        %v723 = vpop.f32.mrb[0].mxu0
        %v724 = vadd.f32 0.0, %v723
        %725 = vmatprep.mubr.f32.mxu0 %v418
        %726 = vmatmul.mubr.f32.gmra.mrb[0].mxu0 %v417
        %v727 = vpop.f32.mrb[0].mxu0
        %v728 = vadd.f32 0.0, %v727
        %v729 = vpop.f32.mrb[0].mxu0
        %v730 = vadd.f32 0.0, %v729
        %731 = vmatprep.mubr.f32.mxu0 %v420
        %732 = vmatmul.mubr.f32.gmra.mrb[0].mxu0 %v419
        %v733 = vpop.f32.mrb[0].mxu0
        %v734 = vadd.f32 0.0, %v733
        %v735 = vpop.f32.mrb[0].mxu0
        %v736 = vadd.f32 0.0, %v735
        %737 = vmatprep.mubr.f32.mxu0 %v422
        %738 = vmatmul.mubr.f32.gmra.mrb[0].mxu0 %v421
        %v739 = vpop.f32.mrb[0].mxu0
        %v740 = vadd.f32 0.0, %v739
        %v741 = vpop.f32.mrb[0].mxu0
        %v742 = vadd.f32 0.0, %v741
        %743 = vdwg.mxu0
        %v744 = vadd.f32 %v295, %v554
        %v745 = vadd.f32 %v296, %v556
        %v746 = vadd.f32 %v297, %v560
        %v747 = vadd.f32 %v298, %v562
        %v748 = vadd.f32 %v299, %v566
        %v749 = vadd.f32 %v300, %v568
        %v750 = vadd.f32 %v301, %v572
        %v751 = vadd.f32 %v302, %v574
        %v752 = vadd.f32 %v303, %v578
        %v753 = vadd.f32 %v304, %v580
        %v754 = vadd.f32 %v305, %v584
        %v755 = vadd.f32 %v306, %v586
        %v756 = vadd.f32 %v307, %v590
        %v757 = vadd.f32 %v308, %v592
        %v758 = vadd.f32 %v309, %v596
        %v759 = vadd.f32 %v310, %v598
        %v760 = vadd.f32 %v311, %v602
        %v761 = vadd.f32 %v312, %v604
        %v762 = vadd.f32 %v313, %v608
        %v763 = vadd.f32 %v314, %v610
        %v764 = vadd.f32 %v315, %v614
        %v765 = vadd.f32 %v316, %v616
        %v766 = vadd.f32 %v317, %v620
        %v767 = vadd.f32 %v318, %v622
        %v768 = vadd.f32 %v319, %v626
        %v769 = vadd.f32 %v320, %v628
        %v770 = vadd.f32 %v321, %v632
        %v771 = vadd.f32 %v322, %v634
        %v772 = vadd.f32 %v323, %v638
        %v773 = vadd.f32 %v324, %v640
        %v774 = vadd.f32 %v325, %v644
        %v775 = vadd.f32 %v326, %v646
        %v776 = vadd.f32 %v327, %v650
        %v777 = vadd.f32 %v328, %v652
        %v778 = vadd.f32 %v329, %v656
        %v779 = vadd.f32 %v330, %v658
        %v780 = vadd.f32 %v331, %v662
        %v781 = vadd.f32 %v332, %v664
        %v782 = vadd.f32 %v333, %v668
        %v783 = vadd.f32 %v334, %v670
        %v784 = vadd.f32 %v335, %v674
        %v785 = vadd.f32 %v336, %v676
        %v786 = vadd.f32 %v337, %v680
        %v787 = vadd.f32 %v338, %v682
        %v788 = vadd.f32 %v339, %v686
        %v789 = vadd.f32 %v340, %v688
        %v790 = vadd.f32 %v341, %v692
        %v791 = vadd.f32 %v342, %v694
        %v792 = vadd.f32 %v343, %v698
        %v793 = vadd.f32 %v344, %v700
        %v794 = vadd.f32 %v345, %v704
        %v795 = vadd.f32 %v346, %v706
        %v796 = vadd.f32 %v347, %v710
        %v797 = vadd.f32 %v348, %v712
        %v798 = vadd.f32 %v349, %v716
        %v799 = vadd.f32 %v350, %v718
        %v800 = vadd.f32 %v351, %v722
        %v801 = vadd.f32 %v352, %v724
        %v802 = vadd.f32 %v353, %v728
        %v803 = vadd.f32 %v354, %v730
        %v804 = vadd.f32 %v355, %v734
        %v805 = vadd.f32 %v356, %v736
        %v806 = vadd.f32 %v357, %v740
        %v807 = vadd.f32 %v358, %v742
        %808 = vst [vmem:[#allocation2] sm:$0xff] %v744
        %809 = vst [vmem:[#allocation2 + $0x8] sm:$0xff] %v745
        %810 = vst [vmem:[#allocation2 + $0x10] sm:$0xff] %v746
        %811 = vst [vmem:[#allocation2 + $0x18] sm:$0xff] %v747
        %812 = vst [vmem:[#allocation2 + $0x20] sm:$0xff] %v748
        %813 = vst [vmem:[#allocation2 + $0x28] sm:$0xff] %v749
        %814 = vst [vmem:[#allocation2 + $0x30] sm:$0xff] %v750
        %815 = vst [vmem:[#allocation2 + $0x38] sm:$0xff] %v751
        %816 = vst [vmem:[#allocation2 + $0x40] sm:$0xff] %v752
        %817 = vst [vmem:[#allocation2 + $0x48] sm:$0xff] %v753
        %818 = vst [vmem:[#allocation2 + $0x50] sm:$0xff] %v754
        %819 = vst [vmem:[#allocation2 + $0x58] sm:$0xff] %v755
        %820 = vst [vmem:[#allocation2 + $0x60] sm:$0xff] %v756
        %821 = vst [vmem:[#allocation2 + $0x68] sm:$0xff] %v757
        %822 = vst [vmem:[#allocation2 + $0x70] sm:$0xff] %v758
        %823 = vst [vmem:[#allocation2 + $0x78] sm:$0xff] %v759
        %824 = vst [vmem:[#allocation2 + $0x80] sm:$0xff] %v760
        %825 = vst [vmem:[#allocation2 + $0x88] sm:$0xff] %v761
        %826 = vst [vmem:[#allocation2 + $0x90] sm:$0xff] %v762
        %827 = vst [vmem:[#allocation2 + $0x98] sm:$0xff] %v763
        %828 = vst [vmem:[#allocation2 + $0xa0] sm:$0xff] %v764
        %829 = vst [vmem:[#allocation2 + $0xa8] sm:$0xff] %v765
        %830 = vst [vmem:[#allocation2 + $0xb0] sm:$0xff] %v766
        %831 = vst [vmem:[#allocation2 + $0xb8] sm:$0xff] %v767
        %832 = vst [vmem:[#allocation2 + $0xc0] sm:$0xff] %v768
        %833 = vst [vmem:[#allocation2 + $0xc8] sm:$0xff] %v769
        %834 = vst [vmem:[#allocation2 + $0xd0] sm:$0xff] %v770
        %835 = vst [vmem:[#allocation2 + $0xd8] sm:$0xff] %v771
        %836 = vst [vmem:[#allocation2 + $0xe0] sm:$0xff] %v772
        %837 = vst [vmem:[#allocation2 + $0xe8] sm:$0xff] %v773
        %838 = vst [vmem:[#allocation2 + $0xf0] sm:$0xff] %v774
        %839 = vst [vmem:[#allocation2 + $0xf8] sm:$0xff] %v775
        %840 = vst [vmem:[#allocation2 + $0x100] sm:$0xff] %v776
        %841 = vst [vmem:[#allocation2 + $0x108] sm:$0xff] %v777
        %842 = vst [vmem:[#allocation2 + $0x110] sm:$0xff] %v778
        %843 = vst [vmem:[#allocation2 + $0x118] sm:$0xff] %v779
        %844 = vst [vmem:[#allocation2 + $0x120] sm:$0xff] %v780
        %845 = vst [vmem:[#allocation2 + $0x128] sm:$0xff] %v781
        %846 = vst [vmem:[#allocation2 + $0x130] sm:$0xff] %v782
        %847 = vst [vmem:[#allocation2 + $0x138] sm:$0xff] %v783
        %848 = vst [vmem:[#allocation2 + $0x140] sm:$0xff] %v784
        %849 = vst [vmem:[#allocation2 + $0x148] sm:$0xff] %v785
        %850 = vst [vmem:[#allocation2 + $0x150] sm:$0xff] %v786
        %851 = vst [vmem:[#allocation2 + $0x158] sm:$0xff] %v787
        %852 = vst [vmem:[#allocation2 + $0x160] sm:$0xff] %v788
        %853 = vst [vmem:[#allocation2 + $0x168] sm:$0xff] %v789
        %854 = vst [vmem:[#allocation2 + $0x170] sm:$0xff] %v790
        %855 = vst [vmem:[#allocation2 + $0x178] sm:$0xff] %v791
        %856 = vst [vmem:[#allocation2 + $0x180] sm:$0xff] %v792
        %857 = vst [vmem:[#allocation2 + $0x188] sm:$0xff] %v793
        %858 = vst [vmem:[#allocation2 + $0x190] sm:$0xff] %v794
        %859 = vst [vmem:[#allocation2 + $0x198] sm:$0xff] %v795
        %860 = vst [vmem:[#allocation2 + $0x1a0] sm:$0xff] %v796
        %861 = vst [vmem:[#allocation2 + $0x1a8] sm:$0xff] %v797
        %862 = vst [vmem:[#allocation2 + $0x1b0] sm:$0xff] %v798
        %863 = vst [vmem:[#allocation2 + $0x1b8] sm:$0xff] %v799
        %864 = vst [vmem:[#allocation2 + $0x1c0] sm:$0xff] %v800
        %865 = vst [vmem:[#allocation2 + $0x1c8] sm:$0xff] %v801
        %866 = vst [vmem:[#allocation2 + $0x1d0] sm:$0xff] %v802
        %867 = vst [vmem:[#allocation2 + $0x1d8] sm:$0xff] %v803
        %868 = vst [vmem:[#allocation2 + $0x1e0] sm:$0xff] %v804
        %869 = vst [vmem:[#allocation2 + $0x1e8] sm:$0xff] %v805
        %870 = vst [vmem:[#allocation2 + $0x1f0] sm:$0xff] %v806
        %871 = vst [vmem:[#allocation2 + $0x1f8] sm:$0xff] %v807
        // Predicated region
        $region33: #{attention_forward.5} parent=27 // pred_check
          %p872 = pneg %p227
        $region34: #{attention_forward.5} parent=27 // pred_check_branch
          %874 = sbr.rel (%p872) target = $region36
        $region35: #{attention_forward.5} parent=27 // pred_region
          %v875 = vld [vmem:[#allocation2] sm:$0xff]
          %v876 = vld [vmem:[#allocation2 + $0x8] sm:$0xff]
          %v877 = vld [vmem:[#allocation2 + $0x10] sm:$0xff]
          %v878 = vld [vmem:[#allocation2 + $0x18] sm:$0xff]
          %v879 = vld [vmem:[#allocation2 + $0x20] sm:$0xff]
          %v880 = vld [vmem:[#allocation2 + $0x28] sm:$0xff]
          %v881 = vld [vmem:[#allocation2 + $0x30] sm:$0xff]
          %v882 = vld [vmem:[#allocation2 + $0x38] sm:$0xff]
          %v883 = vld [vmem:[#allocation2 + $0x40] sm:$0xff]
          %v884 = vld [vmem:[#allocation2 + $0x48] sm:$0xff]
          %v885 = vld [vmem:[#allocation2 + $0x50] sm:$0xff]
          %v886 = vld [vmem:[#allocation2 + $0x58] sm:$0xff]
          %v887 = vld [vmem:[#allocation2 + $0x60] sm:$0xff]
          %v888 = vld [vmem:[#allocation2 + $0x68] sm:$0xff]
          %v889 = vld [vmem:[#allocation2 + $0x70] sm:$0xff]
          %v890 = vld [vmem:[#allocation2 + $0x78] sm:$0xff]
          %v891 = vld [vmem:[#allocation2 + $0x80] sm:$0xff]
          %v892 = vld [vmem:[#allocation2 + $0x88] sm:$0xff]
          %v893 = vld [vmem:[#allocation2 + $0x90] sm:$0xff]
          %v894 = vld [vmem:[#allocation2 + $0x98] sm:$0xff]
          %v895 = vld [vmem:[#allocation2 + $0xa0] sm:$0xff]
          %v896 = vld [vmem:[#allocation2 + $0xa8] sm:$0xff]
          %v897 = vld [vmem:[#allocation2 + $0xb0] sm:$0xff]
          %v898 = vld [vmem:[#allocation2 + $0xb8] sm:$0xff]
          %v899 = vld [vmem:[#allocation2 + $0xc0] sm:$0xff]
          %v900 = vld [vmem:[#allocation2 + $0xc8] sm:$0xff]
          %v901 = vld [vmem:[#allocation2 + $0xd0] sm:$0xff]
          %v902 = vld [vmem:[#allocation2 + $0xd8] sm:$0xff]
          %v903 = vld [vmem:[#allocation2 + $0xe0] sm:$0xff]
          %v904 = vld [vmem:[#allocation2 + $0xe8] sm:$0xff]
          %v905 = vld [vmem:[#allocation2 + $0xf0] sm:$0xff]
          %v906 = vld [vmem:[#allocation2 + $0xf8] sm:$0xff]
          %v907 = vld [vmem:[#allocation2 + $0x100] sm:$0xff]
          %v908 = vld [vmem:[#allocation2 + $0x108] sm:$0xff]
          %v909 = vld [vmem:[#allocation2 + $0x110] sm:$0xff]
          %v910 = vld [vmem:[#allocation2 + $0x118] sm:$0xff]
          %v911 = vld [vmem:[#allocation2 + $0x120] sm:$0xff]
          %v912 = vld [vmem:[#allocation2 + $0x128] sm:$0xff]
          %v913 = vld [vmem:[#allocation2 + $0x130] sm:$0xff]
          %v914 = vld [vmem:[#allocation2 + $0x138] sm:$0xff]
          %v915 = vld [vmem:[#allocation2 + $0x140] sm:$0xff]
          %v916 = vld [vmem:[#allocation2 + $0x148] sm:$0xff]
          %v917 = vld [vmem:[#allocation2 + $0x150] sm:$0xff]
          %v918 = vld [vmem:[#allocation2 + $0x158] sm:$0xff]
          %v919 = vld [vmem:[#allocation2 + $0x160] sm:$0xff]
          %v920 = vld [vmem:[#allocation2 + $0x168] sm:$0xff]
          %v921 = vld [vmem:[#allocation2 + $0x170] sm:$0xff]
          %v922 = vld [vmem:[#allocation2 + $0x178] sm:$0xff]
          %v923 = vld [vmem:[#allocation2 + $0x180] sm:$0xff]
          %v924 = vld [vmem:[#allocation2 + $0x188] sm:$0xff]
          %v925 = vld [vmem:[#allocation2 + $0x190] sm:$0xff]
          %v926 = vld [vmem:[#allocation2 + $0x198] sm:$0xff]
          %v927 = vld [vmem:[#allocation2 + $0x1a0] sm:$0xff]
          %v928 = vld [vmem:[#allocation2 + $0x1a8] sm:$0xff]
          %v929 = vld [vmem:[#allocation2 + $0x1b0] sm:$0xff]
          %v930 = vld [vmem:[#allocation2 + $0x1b8] sm:$0xff]
          %v931 = vld [vmem:[#allocation2 + $0x1c0] sm:$0xff]
          %v932 = vld [vmem:[#allocation2 + $0x1c8] sm:$0xff]
          %v933 = vld [vmem:[#allocation2 + $0x1d0] sm:$0xff]
          %v934 = vld [vmem:[#allocation2 + $0x1d8] sm:$0xff]
          %v935 = vld [vmem:[#allocation2 + $0x1e0] sm:$0xff]
          %v936 = vld [vmem:[#allocation2 + $0x1e8] sm:$0xff]
          %v937 = vld [vmem:[#allocation2 + $0x1f0] sm:$0xff]
          %v938 = vld [vmem:[#allocation2 + $0x1f8] sm:$0xff]
          %939 = vst [vmem:[%s200] sm:$0xff] %v875
          %940 = vst [vmem:[%s200 + $0x8] sm:$0xff] %v876
          %941 = vst [vmem:[%s200 + $0x10] sm:$0xff] %v877
          %942 = vst [vmem:[%s200 + $0x18] sm:$0xff] %v878
          %943 = vst [vmem:[%s200 + $0x20] sm:$0xff] %v879
          %944 = vst [vmem:[%s200 + $0x28] sm:$0xff] %v880
          %945 = vst [vmem:[%s200 + $0x30] sm:$0xff] %v881
          %946 = vst [vmem:[%s200 + $0x38] sm:$0xff] %v882
          %947 = vst [vmem:[%s200 + $0x40] sm:$0xff] %v883
          %948 = vst [vmem:[%s200 + $0x48] sm:$0xff] %v884
          %949 = vst [vmem:[%s200 + $0x50] sm:$0xff] %v885
          %950 = vst [vmem:[%s200 + $0x58] sm:$0xff] %v886
          %951 = vst [vmem:[%s200 + $0x60] sm:$0xff] %v887
          %952 = vst [vmem:[%s200 + $0x68] sm:$0xff] %v888
          %953 = vst [vmem:[%s200 + $0x70] sm:$0xff] %v889
          %954 = vst [vmem:[%s200 + $0x78] sm:$0xff] %v890
          %955 = vst [vmem:[%s200 + $0x80] sm:$0xff] %v891
          %956 = vst [vmem:[%s200 + $0x88] sm:$0xff] %v892
          %957 = vst [vmem:[%s200 + $0x90] sm:$0xff] %v893
          %958 = vst [vmem:[%s200 + $0x98] sm:$0xff] %v894
          %959 = vst [vmem:[%s200 + $0xa0] sm:$0xff] %v895
          %960 = vst [vmem:[%s200 + $0xa8] sm:$0xff] %v896
          %961 = vst [vmem:[%s200 + $0xb0] sm:$0xff] %v897
          %962 = vst [vmem:[%s200 + $0xb8] sm:$0xff] %v898
          %963 = vst [vmem:[%s200 + $0xc0] sm:$0xff] %v899
          %964 = vst [vmem:[%s200 + $0xc8] sm:$0xff] %v900
          %965 = vst [vmem:[%s200 + $0xd0] sm:$0xff] %v901
          %966 = vst [vmem:[%s200 + $0xd8] sm:$0xff] %v902
          %967 = vst [vmem:[%s200 + $0xe0] sm:$0xff] %v903
          %968 = vst [vmem:[%s200 + $0xe8] sm:$0xff] %v904
          %969 = vst [vmem:[%s200 + $0xf0] sm:$0xff] %v905
          %970 = vst [vmem:[%s200 + $0xf8] sm:$0xff] %v906
          %971 = vst [vmem:[%s200 + $0x100] sm:$0xff] %v907
          %972 = vst [vmem:[%s200 + $0x108] sm:$0xff] %v908
          %973 = vst [vmem:[%s200 + $0x110] sm:$0xff] %v909
          %974 = vst [vmem:[%s200 + $0x118] sm:$0xff] %v910
          %975 = vst [vmem:[%s200 + $0x120] sm:$0xff] %v911
          %976 = vst [vmem:[%s200 + $0x128] sm:$0xff] %v912
          %977 = vst [vmem:[%s200 + $0x130] sm:$0xff] %v913
          %978 = vst [vmem:[%s200 + $0x138] sm:$0xff] %v914
          %979 = vst [vmem:[%s200 + $0x140] sm:$0xff] %v915
          %980 = vst [vmem:[%s200 + $0x148] sm:$0xff] %v916
          %981 = vst [vmem:[%s200 + $0x150] sm:$0xff] %v917
          %982 = vst [vmem:[%s200 + $0x158] sm:$0xff] %v918
          %983 = vst [vmem:[%s200 + $0x160] sm:$0xff] %v919
          %984 = vst [vmem:[%s200 + $0x168] sm:$0xff] %v920
          %985 = vst [vmem:[%s200 + $0x170] sm:$0xff] %v921
          %986 = vst [vmem:[%s200 + $0x178] sm:$0xff] %v922
          %987 = vst [vmem:[%s200 + $0x180] sm:$0xff] %v923
          %988 = vst [vmem:[%s200 + $0x188] sm:$0xff] %v924
          %989 = vst [vmem:[%s200 + $0x190] sm:$0xff] %v925
          %990 = vst [vmem:[%s200 + $0x198] sm:$0xff] %v926
          %991 = vst [vmem:[%s200 + $0x1a0] sm:$0xff] %v927
          %992 = vst [vmem:[%s200 + $0x1a8] sm:$0xff] %v928
          %993 = vst [vmem:[%s200 + $0x1b0] sm:$0xff] %v929
          %994 = vst [vmem:[%s200 + $0x1b8] sm:$0xff] %v930
          %995 = vst [vmem:[%s200 + $0x1c0] sm:$0xff] %v931
          %996 = vst [vmem:[%s200 + $0x1c8] sm:$0xff] %v932
          %997 = vst [vmem:[%s200 + $0x1d0] sm:$0xff] %v933
          %998 = vst [vmem:[%s200 + $0x1d8] sm:$0xff] %v934
          %999 = vst [vmem:[%s200 + $0x1e0] sm:$0xff] %v935
          %1000 = vst [vmem:[%s200 + $0x1e8] sm:$0xff] %v936
          %1001 = vst [vmem:[%s200 + $0x1f0] sm:$0xff] %v937
          %1002 = vst [vmem:[%s200 + $0x1f8] sm:$0xff] %v938
        $region36: #{attention_forward.5} parent=27 // pred_fallthru
          _
        %s1003 = sand.u32 %s101, 1
        %s1004 = scalar_lea.sflag [#allocation4], %s1003
        %s1005 = sand.u32 %s101, 1
        %s1006 = smul.addr %s1005, 512
        %s1007 = scalar_lea.vmem [#allocation3], %s1006
        // Predicated region
        $region37: #{attention_forward.5} parent=27 // pred_check
          %p1008 = pneg %p111
        $region38: #{attention_forward.5} parent=27 // pred_check_branch
          %1010 = sbr.rel (%p1008) target = $region40
        $region39: #{attention_forward.5} parent=27 // pred_region
          %s1011 = smul.u32 32, %s21
          %s1012 = smul.u32 2, %s22
          %s1014 = ssub.s32 8192, 8192
          %1015 = vsyncadd %s1004, %s1014
          %s1016 = smul.addr %s1011, 2
          %s1017 = sadd.s32 %s1012, %s1016
          %s1018 = smul.addr %s1017, 128
          %s1019 = scalar_lea.hbm %s2, %s1018
          %s1020 = sshll.u32 %s1007, 4
          %s1021 = int_to_ptr.vmem [resolvable:$true] %s1020
          %1026 = dma.vmem_to_hbm [thread:$0]  %s1021, 8192, %s1019, %s1004, 256, 256, 16
        $region40: #{attention_forward.5} parent=27 // pred_fallthru
          _
      $region28: #{attention_forward.5} parent=5 // pred_fallthru
        _
      %p1027 = scmp.le.s32.totalorder 2, %s11
      // Predicated region
      $region41: #{attention_forward.5} parent=5 // pred_check
        %p1028 = pneg %p1027
      $region42: #{attention_forward.5} parent=5 // pred_check_branch
        %1030 = sbr.rel (%p1028) target = $region44
      $region43: #{attention_forward.5} parent=5 // pred_region
        %s1031 = ssub.s32 %s11, 2
        // Predicated region
        $region45: #{attention_forward.5} parent=43 // pred_check
          %p1032 = pneg %p117
        $region46: #{attention_forward.5} parent=43 // pred_check_branch
          %1034 = sbr.rel (%p1032) target = $region48
        $region47: #{attention_forward.5} parent=43 // pred_region
          %s1035 = sand.u32 %s102, 1
          %s1036 = scalar_lea.sflag [#allocation4], %s1035
          %s1037 = sand.u32 %s102, 1
          %s1038 = smul.addr %s1037, 512
          %s1039 = scalar_lea.vmem [#allocation3], %s1038
          %1040 = dma.done %s1036, 8192
        $region48: #{attention_forward.5} parent=43 // pred_fallthru
          _
      $region44: #{attention_forward.5} parent=5 // pred_fallthru
        _
    $region6: #{attention_forward.5} parent=1 // loop_footer
      %s15 = sadd.s32 1, %s11
    $region7: #{attention_forward.5} parent=1 // loop_footer_branch
      %10 = sbr.rel target = $region3
    $region8: #{attention_forward.5} parent=1 // loop_exit
      _
    %1041 = vsyncpa [#allocation4], 1
    %s1042 = scalar_lea.sflag [#allocation4], 1
    %1043 = vsyncpa %s1042, 1

// kernel: attention_forward.4
$region0: #{attention_forward.4}
  #allocation0 [shape = 'u32[]', space=smem, size = 0x4, offset = 0x4, fixed_abs, tag = 'smem constant byte address 0x4 - core index']
  #allocation1 [shape = 'u32[144,128]{1,0:T(1,128)}', space=vmem, size = 0x12000, scoped, tag = 'internal scratch']
  #allocation2 [shape = 'f32[128,1]{1,0:T(8,128)}', space=vmem, size = 0x10000, scoped, tag = 'scratch operand']
  #allocation3 [shape = 'f32[128,1]{1,0:T(8,128)}', space=vmem, size = 0x10000, scoped, tag = 'scratch operand']
  #allocation4 [shape = 'f32[128,128]{1,0:T(8,128)}', space=vmem, size = 0x10000, scoped, tag = 'scratch operand']
  %s0 = inlined_call_operand.vmem [shape: f32[2,256,768], index: 0, kind: input, shape index: {}, may-alias: {0,1,2}]
  %s1 = inlined_call_operand.vmem [shape: f32[2,256,768], index: 1, kind: input, shape index: {}, may-alias: {0,1,2}]
  %s2 = inlined_call_operand.vmem [shape: f32[2,256,768], index: 2, kind: input, shape index: {}, may-alias: {0,1,2}]
  %s3 = inlined_call_operand.vmem [shape: f32[256,128], index: 3, kind: input, shape index: {}, may-alias: {3,5}]
  %s4 = inlined_call_operand.vmem [shape: f32[256,128], index: 4, kind: input, shape index: {}, may-alias: {4,6}]
  %s5 = inlined_call_operand.vmem [shape: f32[256,128], index: 5, kind: input, shape index: {}, may-alias: {3,5}]
  %s6 = inlined_call_operand.vmem [shape: f32[256,128], index: 6, kind: input, shape index: {}, may-alias: {4,6}]
  %s7 = inlined_call_operand.vmem [shape: f32[2,256,256], index: 7, kind: output, shape index: {}]
  %s8 = sld [smem:[#allocation0]]
  $region229: #{attention_forward.4} parent=0
    _
  %s10 = ssub.s32 1, %s8
  %s11 = scalar_select 0, %s10, %s8
  $region1: #{attention_forward.4} parent=0
    #allocation5 [shape = 'u8[131072]{0}', space=vmem, size = 0x20000, scoped, tag = 'input window, operand 0']
    #allocation6 [shape = 'u8[131072]{0}', space=vmem, size = 0x20000, scoped, tag = 'input window, operand 1']
    #allocation7 [shape = 'u8[131072]{0}', space=vmem, size = 0x20000, scoped, tag = 'input window, operand 2']
    #allocation8 [shape = 'u8[131072]{0}', space=vmem, size = 0x20000, scoped, tag = 'output window, operand 0']
    loop: start=0, step=1, limit=18
    $region2: #{attention_forward.4} parent=1 // loop_pre_header
      _
    $region3: #{attention_forward.4} parent=1 // loop_header
      %s13 = sphi 0, %s17
      %p14 = scmp.ge.s32.totalorder %s13, 18
      %s20 = sphi 0, %s46
      %s21 = sphi 0, %s42
      %s22 = sphi 0, %s38
      %s23 = sphi 0, %s34
      %s24 = sphi 0, %s20
      %s25 = sphi 0, %s21
      %s26 = sphi 0, %s22
      %s27 = sphi 0, %s23
      %s28 = sphi 0, %s24
      %s29 = sphi 0, %s25
      %s30 = sphi 0, %s26
      %s31 = sphi 0, %s27
      %s53 = sphi 0, %s55
      %s56 = sphi 0, %s53
      %s57 = sphi 0, %s56
      %s73 = sphi 0, %s57
      %s89 = sphi 0, %s91
      %s92 = sphi 0, %s89
      %s93 = sphi 0, %s92
      %s109 = sphi 0, %s93
      %s125 = sphi 0, %s127
      %s128 = sphi 0, %s125
      %s129 = sphi 0, %s128
      %s145 = sphi 0, %s129
      %s151 = sphi 0, %s153
      %s154 = sphi 0, %s151
      %s155 = sphi 0, %s154
      %s171 = sphi 0, %s155
      %s177 = sphi 0, %s179
      %s180 = sphi 0, %s177
      %s181 = sphi 0, %s180
      %s197 = sphi 0, %s181
      %s207 = sphi 0, %s209
      %s210 = sphi 0, %s207
      %s211 = sphi 0, %s210
      %s227 = sphi 0, %s211
      %s237 = sphi 0, %s239
      %s240 = sphi 0, %s237
      %s241 = sphi 0, %s240
      %s257 = sphi 0, %s241
      %s267 = sphi 0, %s269
      %s270 = sphi 0, %s267
      %s271 = sphi 0, %s270
      %s287 = sphi 0, %s271
    $region4: #{attention_forward.4} parent=1 // loop_header_branch
      %16 = sbr.rel (%p14) target = $region8
    $region5: #{attention_forward.4} parent=1 // loop_body
      %s18 = ssub.s32 %s13, 1
      %s19 = ssub.s32 %s13, 2
      %s32 = sadd.s32 1, %s23
      %p33 = scmp.ge.s32.totalorder %s32, 2
      %s34 = scalar_select %p33, 0, %s32
      %s35 = sadd.s32 1, %s22
      %s36 = scalar_select %p33, %s35, %s22
      %p37 = scmp.ge.s32.totalorder %s36, 2
      %s38 = scalar_select %p37, 0, %s36
      %s39 = sadd.s32 1, %s21
      %s40 = scalar_select %p37, %s39, %s21
      %p41 = scmp.ge.s32.totalorder %s40, 2
      %s42 = scalar_select %p41, 0, %s40
      %s43 = sadd.s32 1, %s20
      %s44 = scalar_select %p41, %s43, %s20
      %p45 = scmp.ge.s32.totalorder %s44, 2
      %s46 = scalar_select %p45, 0, %s44
      %s47 = ssub.s32 %s20, %s46
      %s48 = ssub.s32 %s22, %s38
      %s49 = sor.u32 %s47, %s48
      %s50 = ssub.s32 %s21, %s42
      %s51 = sor.u32 %s49, %s50
      %p52 = scmp.eq.s32.totalorder %s51, 0
      %s54 = sadd.s32 %s53, 1
      %s55 = scalar_select %p52, %s53, %s54
      %p58 = pneg %p52
      %p59 = scmp.eq.s32.totalorder %s13, 15
      %p60 = por %p58, %p59
      %p61 = scmp.ne.s32.totalorder %s53, %s56
      %p62 = scmp.eq.s32.totalorder %s13, 0
      %p63 = por %p61, %p62
      %p64 = scmp.ne.s32.totalorder %s53, %s56
      %p65 = scmp.eq.s32.totalorder %s18, 15
      %p66 = por %p64, %p65
      %p67 = scmp.ne.s32.totalorder %s56, %s57
      %p68 = scmp.eq.s32.totalorder %s18, 0
      %p69 = por %p67, %p68
      %p70 = scmp.ne.s32.totalorder %s56, %s57
      %p71 = scmp.eq.s32.totalorder %s19, 15
      %p72 = por %p70, %p71
      %p74 = scmp.ne.s32.totalorder %s57, %s73
      %p75 = scmp.eq.s32.totalorder %s19, 0
      %p76 = por %p74, %p75
      %p77 = scmp.lt.s32.totalorder %s23, %s22
      %s78 = scalar_select %p77, %s23, %s22
      %s79 = sadd.s32 %s21, 2
      %p80 = scmp.lt.s32.totalorder %s34, %s38
      %s81 = scalar_select %p80, %s34, %s38
      %s82 = sadd.s32 %s42, 2
      %s83 = ssub.s32 %s20, %s46
      %s84 = ssub.s32 %s78, %s81
      %s85 = sor.u32 %s83, %s84
      %s86 = ssub.s32 %s79, %s82
      %s87 = sor.u32 %s85, %s86
      %p88 = scmp.eq.s32.totalorder %s87, 0
      %s90 = sadd.s32 %s89, 1
      %s91 = scalar_select %p88, %s89, %s90
      %p94 = pneg %p88
      %p95 = scmp.eq.s32.totalorder %s13, 15
      %p96 = por %p94, %p95
      %p97 = scmp.ne.s32.totalorder %s89, %s92
      %p98 = scmp.eq.s32.totalorder %s13, 0
      %p99 = por %p97, %p98
      %p100 = scmp.ne.s32.totalorder %s89, %s92
      %p101 = scmp.eq.s32.totalorder %s18, 15
      %p102 = por %p100, %p101
      %p103 = scmp.ne.s32.totalorder %s92, %s93
      %p104 = scmp.eq.s32.totalorder %s18, 0
      %p105 = por %p103, %p104
      %p106 = scmp.ne.s32.totalorder %s92, %s93
      %p107 = scmp.eq.s32.totalorder %s19, 15
      %p108 = por %p106, %p107
      %p110 = scmp.ne.s32.totalorder %s93, %s109
      %p111 = scmp.eq.s32.totalorder %s19, 0
      %p112 = por %p110, %p111
      %p113 = scmp.lt.s32.totalorder %s23, %s22
      %s114 = scalar_select %p113, %s23, %s22
      %s115 = sadd.s32 %s21, 4
      %p116 = scmp.lt.s32.totalorder %s34, %s38
      %s117 = scalar_select %p116, %s34, %s38
      %s118 = sadd.s32 %s42, 4
      %s119 = ssub.s32 %s20, %s46
      %s120 = ssub.s32 %s114, %s117
      %s121 = sor.u32 %s119, %s120
      %s122 = ssub.s32 %s115, %s118
      %s123 = sor.u32 %s121, %s122
      %p124 = scmp.eq.s32.totalorder %s123, 0
      %s126 = sadd.s32 %s125, 1
      %s127 = scalar_select %p124, %s125, %s126
      %p130 = pneg %p124
      %p131 = scmp.eq.s32.totalorder %s13, 15
      %p132 = por %p130, %p131
      %p133 = scmp.ne.s32.totalorder %s125, %s128
      %p134 = scmp.eq.s32.totalorder %s13, 0
      %p135 = por %p133, %p134
      %p136 = scmp.ne.s32.totalorder %s125, %s128
      %p137 = scmp.eq.s32.totalorder %s18, 15
      %p138 = por %p136, %p137
      %p139 = scmp.ne.s32.totalorder %s128, %s129
      %p140 = scmp.eq.s32.totalorder %s18, 0
      %p141 = por %p139, %p140
      %p142 = scmp.ne.s32.totalorder %s128, %s129
      %p143 = scmp.eq.s32.totalorder %s19, 15
      %p144 = por %p142, %p143
      %p146 = scmp.ne.s32.totalorder %s129, %s145
      %p147 = scmp.eq.s32.totalorder %s19, 0
      %p148 = por %p146, %p147
      %s149 = ssub.s32 %s22, %s38
      %p150 = scmp.eq.s32.totalorder %s149, 0
      %s152 = sadd.s32 %s151, 1
      %s153 = scalar_select %p150, %s151, %s152
      %p156 = pneg %p150
      %p157 = scmp.eq.s32.totalorder %s13, 15
      %p158 = por %p156, %p157
      %p159 = scmp.ne.s32.totalorder %s151, %s154
      %p160 = scmp.eq.s32.totalorder %s13, 0
      %p161 = por %p159, %p160
      %p162 = scmp.ne.s32.totalorder %s151, %s154
      %p163 = scmp.eq.s32.totalorder %s18, 15
      %p164 = por %p162, %p163
      %p165 = scmp.ne.s32.totalorder %s154, %s155
      %p166 = scmp.eq.s32.totalorder %s18, 0
      %p167 = por %p165, %p166
      %p168 = scmp.ne.s32.totalorder %s154, %s155
      %p169 = scmp.eq.s32.totalorder %s19, 15
      %p170 = por %p168, %p169
      %p172 = scmp.ne.s32.totalorder %s155, %s171
      %p173 = scmp.eq.s32.totalorder %s19, 0
      %p174 = por %p172, %p173
      %s175 = ssub.s32 %s22, %s38
      %p176 = scmp.eq.s32.totalorder %s175, 0
      %s178 = sadd.s32 %s177, 1
      %s179 = scalar_select %p176, %s177, %s178
      %p182 = pneg %p176
      %p183 = scmp.eq.s32.totalorder %s13, 15
      %p184 = por %p182, %p183
      %p185 = scmp.ne.s32.totalorder %s177, %s180
      %p186 = scmp.eq.s32.totalorder %s13, 0
      %p187 = por %p185, %p186
      %p188 = scmp.ne.s32.totalorder %s177, %s180
      %p189 = scmp.eq.s32.totalorder %s18, 15
      %p190 = por %p188, %p189
      %p191 = scmp.ne.s32.totalorder %s180, %s181
      %p192 = scmp.eq.s32.totalorder %s18, 0
      %p193 = por %p191, %p192
      %p194 = scmp.ne.s32.totalorder %s180, %s181
      %p195 = scmp.eq.s32.totalorder %s19, 15
      %p196 = por %p194, %p195
      %p198 = scmp.ne.s32.totalorder %s181, %s197
      %p199 = scmp.eq.s32.totalorder %s19, 0
      %p200 = por %p198, %p199
      %p201 = scmp.lt.s32.totalorder %s23, %s22
      %s202 = scalar_select %p201, %s23, %s22
      %p203 = scmp.lt.s32.totalorder %s34, %s38
      %s204 = scalar_select %p203, %s34, %s38
      %s205 = ssub.s32 %s202, %s204
      %p206 = scmp.eq.s32.totalorder %s205, 0
      %s208 = sadd.s32 %s207, 1
      %s209 = scalar_select %p206, %s207, %s208
      %p212 = pneg %p206
      %p213 = scmp.eq.s32.totalorder %s13, 15
      %p214 = por %p212, %p213
      %p215 = scmp.ne.s32.totalorder %s207, %s210
      %p216 = scmp.eq.s32.totalorder %s13, 0
      %p217 = por %p215, %p216
      %p218 = scmp.ne.s32.totalorder %s207, %s210
      %p219 = scmp.eq.s32.totalorder %s18, 15
      %p220 = por %p218, %p219
      %p221 = scmp.ne.s32.totalorder %s210, %s211
      %p222 = scmp.eq.s32.totalorder %s18, 0
      %p223 = por %p221, %p222
      %p224 = scmp.ne.s32.totalorder %s210, %s211
      %p225 = scmp.eq.s32.totalorder %s19, 15
      %p226 = por %p224, %p225
      %p228 = scmp.ne.s32.totalorder %s211, %s227
      %p229 = scmp.eq.s32.totalorder %s19, 0
      %p230 = por %p228, %p229
      %p231 = scmp.lt.s32.totalorder %s23, %s22
      %s232 = scalar_select %p231, %s23, %s22
      %p233 = scmp.lt.s32.totalorder %s34, %s38
      %s234 = scalar_select %p233, %s34, %s38
      %s235 = ssub.s32 %s232, %s234
      %p236 = scmp.eq.s32.totalorder %s235, 0
      %s238 = sadd.s32 %s237, 1
      %s239 = scalar_select %p236, %s237, %s238
      %p242 = pneg %p236
      %p243 = scmp.eq.s32.totalorder %s13, 15
      %p244 = por %p242, %p243
      %p245 = scmp.ne.s32.totalorder %s237, %s240
      %p246 = scmp.eq.s32.totalorder %s13, 0
      %p247 = por %p245, %p246
      %p248 = scmp.ne.s32.totalorder %s237, %s240
      %p249 = scmp.eq.s32.totalorder %s18, 15
      %p250 = por %p248, %p249
      %p251 = scmp.ne.s32.totalorder %s240, %s241
      %p252 = scmp.eq.s32.totalorder %s18, 0
      %p253 = por %p251, %p252
      %p254 = scmp.ne.s32.totalorder %s240, %s241
      %p255 = scmp.eq.s32.totalorder %s19, 15
      %p256 = por %p254, %p255
      %p258 = scmp.ne.s32.totalorder %s241, %s257
      %p259 = scmp.eq.s32.totalorder %s19, 0
      %p260 = por %p258, %p259
      %s261 = ssub.s32 %s20, %s46
      %s262 = ssub.s32 %s22, %s38
      %s263 = sor.u32 %s261, %s262
      %s264 = ssub.s32 %s21, %s42
      %s265 = sor.u32 %s263, %s264
      %p266 = scmp.eq.s32.totalorder %s265, 0
      %s268 = sadd.s32 %s267, 1
      %s269 = scalar_select %p266, %s267, %s268
      %p272 = pneg %p266
      %p273 = scmp.eq.s32.totalorder %s13, 15
      %p274 = por %p272, %p273
      %p275 = scmp.ne.s32.totalorder %s267, %s270
      %p276 = scmp.eq.s32.totalorder %s13, 0
      %p277 = por %p275, %p276
      %p278 = scmp.ne.s32.totalorder %s267, %s270
      %p279 = scmp.eq.s32.totalorder %s18, 15
      %p280 = por %p278, %p279
      %p281 = scmp.ne.s32.totalorder %s270, %s271
      %p282 = scmp.eq.s32.totalorder %s18, 0
      %p283 = por %p281, %p282
      %p284 = scmp.ne.s32.totalorder %s270, %s271
      %p285 = scmp.eq.s32.totalorder %s19, 15
      %p286 = por %p284, %p285
      %p288 = scmp.ne.s32.totalorder %s271, %s287
      %p289 = scmp.eq.s32.totalorder %s19, 0
      %p290 = por %p288, %p289
      %p291 = scmp.le.s32.totalorder 1, %s13
      %p292 = scmp.lt.s32.totalorder %s13, 17
      %p293 = pnand %p291, %p292
      %p294 = pneg %p293
      // Predicated region
      $region9: #{attention_forward.4} parent=5 // pred_check
        _
      $region10: #{attention_forward.4} parent=5 // pred_check_branch
        %296 = sbr.rel (%p293) target = $region12
      $region11: #{attention_forward.4} parent=5 // pred_region
        %s297 = ssub.s32 %s13, 1
      $region12: #{attention_forward.4} parent=5 // pred_fallthru
        _
      %p298 = scmp.lt.s32.totalorder %s13, 16
      // Predicated region
      $region13: #{attention_forward.4} parent=5 // pred_check
        %p299 = pneg %p298
      $region14: #{attention_forward.4} parent=5 // pred_check_branch
        %301 = sbr.rel (%p299) target = $region16
      $region15: #{attention_forward.4} parent=5 // pred_region
        // Predicated region
        $region17: #{attention_forward.4} parent=15 // pred_check
          %p302 = pneg %p63
        $region18: #{attention_forward.4} parent=15 // pred_check_branch
          %304 = sbr.rel (%p302) target = $region20
        $region19: #{attention_forward.4} parent=15 // pred_region
          %s305 = sand.u32 %s53, 1
          %s306 = sand.u32 %s53, 1
          %s307 = smul.addr %s306, 128
          %s308 = scalar_lea.vmem [#allocation5], %s307
          %s309 = smul.u32 16, %s22
          %s310 = smul.addr %s309, 6
          %s311 = sadd.s32 %s21, %s310
          %s312 = smul.addr %s20, 192
          %s313 = sadd.s32 %s311, %s312
          %s314 = smul.addr %s313, 8
          %s315 = scalar_lea.vmem %s0, %s314
          // Predicated region
          $region21: #{attention_forward.4} parent=19 // pred_check
            _
          $region22: #{attention_forward.4} parent=19 // pred_check_branch
            %317 = sbr.rel (0) target = $region24
          $region23: #{attention_forward.4} parent=19 // pred_region
            // Predicated region
            $region25: #{attention_forward.4} parent=23 // pred_check
              _
            $region26: #{attention_forward.4} parent=23 // pred_check_branch
              %319 = sbr.rel (0) target = $region28
            $region27: #{attention_forward.4} parent=23 // pred_region
              // Predicated region
              $region40: #{attention_forward.4} parent=27 // pred_check
                _
              $region41: #{attention_forward.4} parent=27 // pred_check_branch
                %364 = sbr.rel (0) target = $region43
              $region42: #{attention_forward.4} parent=27 // pred_region
                loop: start=0, step=1, limit=1
                $region44: #{attention_forward.4} parent=42 // loop_pre_header
                  _
                $region45: #{attention_forward.4} parent=42 // loop_header
                  %s366 = sphi 0, %s370
                  %p367 = scmp.ge.s32.totalorder %s366, 1
                  %s371 = sphi %s315, %s315
                  %s372 = sphi %s308, %s308
                $region46: #{attention_forward.4} parent=42 // loop_header_branch
                  %369 = sbr.rel (%p367) target = $region50
                $region47: #{attention_forward.4} parent=42 // loop_body
                  %v373 = vld [vmem:[%s371] sm:$0xff]
                  %374 = vst [vmem:[%s372] sm:$0xff] %v373
                  %v375 = vld [vmem:[%s371 + $0x30] sm:$0xff]
                  %376 = vst [vmem:[%s372 + $0x8] sm:$0xff] %v375
                  %v377 = vld [vmem:[%s371 + $0x60] sm:$0xff]
                  %378 = vst [vmem:[%s372 + $0x10] sm:$0xff] %v377
                  %v379 = vld [vmem:[%s371 + $0x90] sm:$0xff]
                  %380 = vst [vmem:[%s372 + $0x18] sm:$0xff] %v379
                  %v381 = vld [vmem:[%s371 + $0xc0] sm:$0xff]
                  %382 = vst [vmem:[%s372 + $0x20] sm:$0xff] %v381
                  %v383 = vld [vmem:[%s371 + $0xf0] sm:$0xff]
                  %384 = vst [vmem:[%s372 + $0x28] sm:$0xff] %v383
                  %v385 = vld [vmem:[%s371 + $0x120] sm:$0xff]
                  %386 = vst [vmem:[%s372 + $0x30] sm:$0xff] %v385
                  %v387 = vld [vmem:[%s371 + $0x150] sm:$0xff]
                  %388 = vst [vmem:[%s372 + $0x38] sm:$0xff] %v387
                  %v389 = vld [vmem:[%s371 + $0x180] sm:$0xff]
                  %390 = vst [vmem:[%s372 + $0x40] sm:$0xff] %v389
                  %v391 = vld [vmem:[%s371 + $0x1b0] sm:$0xff]
                  %392 = vst [vmem:[%s372 + $0x48] sm:$0xff] %v391
                  %v393 = vld [vmem:[%s371 + $0x1e0] sm:$0xff]
                  %394 = vst [vmem:[%s372 + $0x50] sm:$0xff] %v393
                  %v395 = vld [vmem:[%s371 + $0x210] sm:$0xff]
                  %396 = vst [vmem:[%s372 + $0x58] sm:$0xff] %v395
                  %v397 = vld [vmem:[%s371 + $0x240] sm:$0xff]
                  %398 = vst [vmem:[%s372 + $0x60] sm:$0xff] %v397
                  %v399 = vld [vmem:[%s371 + $0x270] sm:$0xff]
                  %400 = vst [vmem:[%s372 + $0x68] sm:$0xff] %v399
                  %v401 = vld [vmem:[%s371 + $0x2a0] sm:$0xff]
                  %402 = vst [vmem:[%s372 + $0x70] sm:$0xff] %v401
                  %v403 = vld [vmem:[%s371 + $0x2d0] sm:$0xff]
                  %404 = vst [vmem:[%s372 + $0x78] sm:$0xff] %v403
                $region48: #{attention_forward.4} parent=42 // loop_footer
                  %s370 = sadd.s32 1, %s366
                $region49: #{attention_forward.4} parent=42 // loop_footer_branch
                  %365 = sbr.rel target = $region45
                $region50: #{attention_forward.4} parent=42 // loop_exit
                  _
              $region43: #{attention_forward.4} parent=27 // pred_fallthru
                _
              // Predicated region
              $region51: #{attention_forward.4} parent=27 // pred_check
                _
              $region52: #{attention_forward.4} parent=27 // pred_check_branch
                %406 = sbr.rel target = $region54
              $region53: #{attention_forward.4} parent=27 // pred_region
                _
              $region54: #{attention_forward.4} parent=27 // pred_fallthru
                _
            $region28: #{attention_forward.4} parent=23 // pred_fallthru
              _
            // Predicated region
            $region29: #{attention_forward.4} parent=23 // pred_check
              _
            $region30: #{attention_forward.4} parent=23 // pred_check_branch
              %321 = sbr.rel target = $region32
            $region31: #{attention_forward.4} parent=23 // pred_region
              loop: start=0, step=1, limit=1
              $region33: #{attention_forward.4} parent=31 // loop_pre_header
                _
              $region34: #{attention_forward.4} parent=31 // loop_header
                %s324 = sphi 0, %s328
                %p325 = scmp.ge.s32.totalorder %s324, 1
                %s329 = sphi %s315, %s315
                %s330 = sphi %s308, %s308
              $region35: #{attention_forward.4} parent=31 // loop_header_branch
                %327 = sbr.rel (%p325) target = $region39
              $region36: #{attention_forward.4} parent=31 // loop_body
                %v331 = vld [vmem:[%s329] sm:$0xff]
                %332 = vst [vmem:[%s330] sm:$0xff] %v331
                %v333 = vld [vmem:[%s329 + $0x30] sm:$0xff]
                %334 = vst [vmem:[%s330 + $0x8] sm:$0xff] %v333
                %v335 = vld [vmem:[%s329 + $0x60] sm:$0xff]
                %336 = vst [vmem:[%s330 + $0x10] sm:$0xff] %v335
                %v337 = vld [vmem:[%s329 + $0x90] sm:$0xff]
                %338 = vst [vmem:[%s330 + $0x18] sm:$0xff] %v337
                %v339 = vld [vmem:[%s329 + $0xc0] sm:$0xff]
                %340 = vst [vmem:[%s330 + $0x20] sm:$0xff] %v339
                %v341 = vld [vmem:[%s329 + $0xf0] sm:$0xff]
                %342 = vst [vmem:[%s330 + $0x28] sm:$0xff] %v341
                %v343 = vld [vmem:[%s329 + $0x120] sm:$0xff]
                %344 = vst [vmem:[%s330 + $0x30] sm:$0xff] %v343
                %v345 = vld [vmem:[%s329 + $0x150] sm:$0xff]
                %346 = vst [vmem:[%s330 + $0x38] sm:$0xff] %v345
                %v347 = vld [vmem:[%s329 + $0x180] sm:$0xff]
                %348 = vst [vmem:[%s330 + $0x40] sm:$0xff] %v347
                %v349 = vld [vmem:[%s329 + $0x1b0] sm:$0xff]
                %350 = vst [vmem:[%s330 + $0x48] sm:$0xff] %v349
                %v351 = vld [vmem:[%s329 + $0x1e0] sm:$0xff]
                %352 = vst [vmem:[%s330 + $0x50] sm:$0xff] %v351
                %v353 = vld [vmem:[%s329 + $0x210] sm:$0xff]
                %354 = vst [vmem:[%s330 + $0x58] sm:$0xff] %v353
                %v355 = vld [vmem:[%s329 + $0x240] sm:$0xff]
                %356 = vst [vmem:[%s330 + $0x60] sm:$0xff] %v355
                %v357 = vld [vmem:[%s329 + $0x270] sm:$0xff]
                %358 = vst [vmem:[%s330 + $0x68] sm:$0xff] %v357
                %v359 = vld [vmem:[%s329 + $0x2a0] sm:$0xff]
                %360 = vst [vmem:[%s330 + $0x70] sm:$0xff] %v359
                %v361 = vld [vmem:[%s329 + $0x2d0] sm:$0xff]
                %362 = vst [vmem:[%s330 + $0x78] sm:$0xff] %v361
              $region37: #{attention_forward.4} parent=31 // loop_footer
                %s328 = sadd.s32 1, %s324
              $region38: #{attention_forward.4} parent=31 // loop_footer_branch
                %323 = sbr.rel target = $region34
              $region39: #{attention_forward.4} parent=31 // loop_exit
                _
            $region32: #{attention_forward.4} parent=23 // pred_fallthru
              _
          $region24: #{attention_forward.4} parent=19 // pred_fallthru
            _
          %407 = vnop
        $region20: #{attention_forward.4} parent=15 // pred_fallthru
          _
        // Predicated region
        $region55: #{attention_forward.4} parent=15 // pred_check
          %p408 = pneg %p99
        $region56: #{attention_forward.4} parent=15 // pred_check_branch
          %410 = sbr.rel (%p408) target = $region58
        $region57: #{attention_forward.4} parent=15 // pred_region
          %s411 = sand.u32 %s89, 1
          %s412 = sand.u32 %s89, 1
          %s413 = smul.addr %s412, 128
          %s414 = scalar_lea.vmem [#allocation6], %s413
          %p415 = scmp.lt.s32.totalorder %s23, %s22
          %s416 = scalar_select %p415, %s23, %s22
          %s417 = sadd.s32 %s21, 2
          %s418 = smul.u32 16, %s416
          %s419 = smul.addr %s418, 6
          %s420 = sadd.s32 %s417, %s419
          %s421 = smul.addr %s20, 192
          %s422 = sadd.s32 %s420, %s421
          %s423 = smul.addr %s422, 8
          %s424 = scalar_lea.vmem %s1, %s423
          // Predicated region
          $region59: #{attention_forward.4} parent=57 // pred_check
            _
          $region60: #{attention_forward.4} parent=57 // pred_check_branch
            %426 = sbr.rel (0) target = $region62
          $region61: #{attention_forward.4} parent=57 // pred_region
            // Predicated region
            $region63: #{attention_forward.4} parent=61 // pred_check
              _
            $region64: #{attention_forward.4} parent=61 // pred_check_branch
              %428 = sbr.rel (0) target = $region66
            $region65: #{attention_forward.4} parent=61 // pred_region
              // Predicated region
              $region78: #{attention_forward.4} parent=65 // pred_check
                _
              $region79: #{attention_forward.4} parent=65 // pred_check_branch
                %473 = sbr.rel (0) target = $region81
              $region80: #{attention_forward.4} parent=65 // pred_region
                loop: start=0, step=1, limit=1
                $region82: #{attention_forward.4} parent=80 // loop_pre_header
                  _
                $region83: #{attention_forward.4} parent=80 // loop_header
                  %s475 = sphi 0, %s479
                  %p476 = scmp.ge.s32.totalorder %s475, 1
                  %s480 = sphi %s424, %s424
                  %s481 = sphi %s414, %s414
                $region84: #{attention_forward.4} parent=80 // loop_header_branch
                  %478 = sbr.rel (%p476) target = $region88
                $region85: #{attention_forward.4} parent=80 // loop_body
                  %v482 = vld [vmem:[%s480] sm:$0xff]
                  %483 = vst [vmem:[%s481] sm:$0xff] %v482
                  %v484 = vld [vmem:[%s480 + $0x30] sm:$0xff]
                  %485 = vst [vmem:[%s481 + $0x8] sm:$0xff] %v484
                  %v486 = vld [vmem:[%s480 + $0x60] sm:$0xff]
                  %487 = vst [vmem:[%s481 + $0x10] sm:$0xff] %v486
                  %v488 = vld [vmem:[%s480 + $0x90] sm:$0xff]
                  %489 = vst [vmem:[%s481 + $0x18] sm:$0xff] %v488
                  %v490 = vld [vmem:[%s480 + $0xc0] sm:$0xff]
                  %491 = vst [vmem:[%s481 + $0x20] sm:$0xff] %v490
                  %v492 = vld [vmem:[%s480 + $0xf0] sm:$0xff]
                  %493 = vst [vmem:[%s481 + $0x28] sm:$0xff] %v492
                  %v494 = vld [vmem:[%s480 + $0x120] sm:$0xff]
                  %495 = vst [vmem:[%s481 + $0x30] sm:$0xff] %v494
                  %v496 = vld [vmem:[%s480 + $0x150] sm:$0xff]
                  %497 = vst [vmem:[%s481 + $0x38] sm:$0xff] %v496
                  %v498 = vld [vmem:[%s480 + $0x180] sm:$0xff]
                  %499 = vst [vmem:[%s481 + $0x40] sm:$0xff] %v498
                  %v500 = vld [vmem:[%s480 + $0x1b0] sm:$0xff]
                  %501 = vst [vmem:[%s481 + $0x48] sm:$0xff] %v500
                  %v502 = vld [vmem:[%s480 + $0x1e0] sm:$0xff]
                  %503 = vst [vmem:[%s481 + $0x50] sm:$0xff] %v502
                  %v504 = vld [vmem:[%s480 + $0x210] sm:$0xff]
                  %505 = vst [vmem:[%s481 + $0x58] sm:$0xff] %v504
                  %v506 = vld [vmem:[%s480 + $0x240] sm:$0xff]
                  %507 = vst [vmem:[%s481 + $0x60] sm:$0xff] %v506
                  %v508 = vld [vmem:[%s480 + $0x270] sm:$0xff]
                  %509 = vst [vmem:[%s481 + $0x68] sm:$0xff] %v508
                  %v510 = vld [vmem:[%s480 + $0x2a0] sm:$0xff]
                  %511 = vst [vmem:[%s481 + $0x70] sm:$0xff] %v510
                  %v512 = vld [vmem:[%s480 + $0x2d0] sm:$0xff]
                  %513 = vst [vmem:[%s481 + $0x78] sm:$0xff] %v512
                $region86: #{attention_forward.4} parent=80 // loop_footer
                  %s479 = sadd.s32 1, %s475
                $region87: #{attention_forward.4} parent=80 // loop_footer_branch
                  %474 = sbr.rel target = $region83
                $region88: #{attention_forward.4} parent=80 // loop_exit
                  _
              $region81: #{attention_forward.4} parent=65 // pred_fallthru
                _
              // Predicated region
              $region89: #{attention_forward.4} parent=65 // pred_check
                _
              $region90: #{attention_forward.4} parent=65 // pred_check_branch
                %515 = sbr.rel target = $region92
              $region91: #{attention_forward.4} parent=65 // pred_region
                _
              $region92: #{attention_forward.4} parent=65 // pred_fallthru
                _
            $region66: #{attention_forward.4} parent=61 // pred_fallthru
              _
            // Predicated region
            $region67: #{attention_forward.4} parent=61 // pred_check
              _
            $region68: #{attention_forward.4} parent=61 // pred_check_branch
              %430 = sbr.rel target = $region70
            $region69: #{attention_forward.4} parent=61 // pred_region
              loop: start=0, step=1, limit=1
              $region71: #{attention_forward.4} parent=69 // loop_pre_header
                _
              $region72: #{attention_forward.4} parent=69 // loop_header
                %s433 = sphi 0, %s437
                %p434 = scmp.ge.s32.totalorder %s433, 1
                %s438 = sphi %s424, %s424
                %s439 = sphi %s414, %s414
              $region73: #{attention_forward.4} parent=69 // loop_header_branch
                %436 = sbr.rel (%p434) target = $region77
              $region74: #{attention_forward.4} parent=69 // loop_body
                %v440 = vld [vmem:[%s438] sm:$0xff]
                %441 = vst [vmem:[%s439] sm:$0xff] %v440
                %v442 = vld [vmem:[%s438 + $0x30] sm:$0xff]
                %443 = vst [vmem:[%s439 + $0x8] sm:$0xff] %v442
                %v444 = vld [vmem:[%s438 + $0x60] sm:$0xff]
                %445 = vst [vmem:[%s439 + $0x10] sm:$0xff] %v444
                %v446 = vld [vmem:[%s438 + $0x90] sm:$0xff]
                %447 = vst [vmem:[%s439 + $0x18] sm:$0xff] %v446
                %v448 = vld [vmem:[%s438 + $0xc0] sm:$0xff]
                %449 = vst [vmem:[%s439 + $0x20] sm:$0xff] %v448
                %v450 = vld [vmem:[%s438 + $0xf0] sm:$0xff]
                %451 = vst [vmem:[%s439 + $0x28] sm:$0xff] %v450
                %v452 = vld [vmem:[%s438 + $0x120] sm:$0xff]
                %453 = vst [vmem:[%s439 + $0x30] sm:$0xff] %v452
                %v454 = vld [vmem:[%s438 + $0x150] sm:$0xff]
                %455 = vst [vmem:[%s439 + $0x38] sm:$0xff] %v454
                %v456 = vld [vmem:[%s438 + $0x180] sm:$0xff]
                %457 = vst [vmem:[%s439 + $0x40] sm:$0xff] %v456
                %v458 = vld [vmem:[%s438 + $0x1b0] sm:$0xff]
                %459 = vst [vmem:[%s439 + $0x48] sm:$0xff] %v458
                %v460 = vld [vmem:[%s438 + $0x1e0] sm:$0xff]
                %461 = vst [vmem:[%s439 + $0x50] sm:$0xff] %v460
                %v462 = vld [vmem:[%s438 + $0x210] sm:$0xff]
                %463 = vst [vmem:[%s439 + $0x58] sm:$0xff] %v462
                %v464 = vld [vmem:[%s438 + $0x240] sm:$0xff]
                %465 = vst [vmem:[%s439 + $0x60] sm:$0xff] %v464
                %v466 = vld [vmem:[%s438 + $0x270] sm:$0xff]
                %467 = vst [vmem:[%s439 + $0x68] sm:$0xff] %v466
                %v468 = vld [vmem:[%s438 + $0x2a0] sm:$0xff]
                %469 = vst [vmem:[%s439 + $0x70] sm:$0xff] %v468
                %v470 = vld [vmem:[%s438 + $0x2d0] sm:$0xff]
                %471 = vst [vmem:[%s439 + $0x78] sm:$0xff] %v470
              $region75: #{attention_forward.4} parent=69 // loop_footer
                %s437 = sadd.s32 1, %s433
              $region76: #{attention_forward.4} parent=69 // loop_footer_branch
                %432 = sbr.rel target = $region72
              $region77: #{attention_forward.4} parent=69 // loop_exit
                _
            $region70: #{attention_forward.4} parent=61 // pred_fallthru
              _
          $region62: #{attention_forward.4} parent=57 // pred_fallthru
            _
          %516 = vnop
        $region58: #{attention_forward.4} parent=15 // pred_fallthru
          _
        // Predicated region
        $region93: #{attention_forward.4} parent=15 // pred_check
          %p517 = pneg %p135
        $region94: #{attention_forward.4} parent=15 // pred_check_branch
          %519 = sbr.rel (%p517) target = $region96
        $region95: #{attention_forward.4} parent=15 // pred_region
          %s520 = sand.u32 %s125, 1
          %s521 = sand.u32 %s125, 1
          %s522 = smul.addr %s521, 128
          %s523 = scalar_lea.vmem [#allocation7], %s522
          %p524 = scmp.lt.s32.totalorder %s23, %s22
          %s525 = scalar_select %p524, %s23, %s22
          %s526 = sadd.s32 %s21, 4
          %s527 = smul.u32 16, %s525
          %s528 = smul.addr %s527, 6
          %s529 = sadd.s32 %s526, %s528
          %s530 = smul.addr %s20, 192
          %s531 = sadd.s32 %s529, %s530
          %s532 = smul.addr %s531, 8
          %s533 = scalar_lea.vmem %s2, %s532
          // Predicated region
          $region97: #{attention_forward.4} parent=95 // pred_check
            _
          $region98: #{attention_forward.4} parent=95 // pred_check_branch
            %535 = sbr.rel (0) target = $region100
          $region99: #{attention_forward.4} parent=95 // pred_region
            // Predicated region
            $region101: #{attention_forward.4} parent=99 // pred_check
              _
            $region102: #{attention_forward.4} parent=99 // pred_check_branch
              %537 = sbr.rel (0) target = $region104
            $region103: #{attention_forward.4} parent=99 // pred_region
              // Predicated region
              $region116: #{attention_forward.4} parent=103 // pred_check
                _
              $region117: #{attention_forward.4} parent=103 // pred_check_branch
                %582 = sbr.rel (0) target = $region119
              $region118: #{attention_forward.4} parent=103 // pred_region
                loop: start=0, step=1, limit=1
                $region120: #{attention_forward.4} parent=118 // loop_pre_header
                  _
                $region121: #{attention_forward.4} parent=118 // loop_header
                  %s584 = sphi 0, %s588
                  %p585 = scmp.ge.s32.totalorder %s584, 1
                  %s589 = sphi %s533, %s533
                  %s590 = sphi %s523, %s523
                $region122: #{attention_forward.4} parent=118 // loop_header_branch
                  %587 = sbr.rel (%p585) target = $region126
                $region123: #{attention_forward.4} parent=118 // loop_body
                  %v591 = vld [vmem:[%s589] sm:$0xff]
                  %592 = vst [vmem:[%s590] sm:$0xff] %v591
                  %v593 = vld [vmem:[%s589 + $0x30] sm:$0xff]
                  %594 = vst [vmem:[%s590 + $0x8] sm:$0xff] %v593
                  %v595 = vld [vmem:[%s589 + $0x60] sm:$0xff]
                  %596 = vst [vmem:[%s590 + $0x10] sm:$0xff] %v595
                  %v597 = vld [vmem:[%s589 + $0x90] sm:$0xff]
                  %598 = vst [vmem:[%s590 + $0x18] sm:$0xff] %v597
                  %v599 = vld [vmem:[%s589 + $0xc0] sm:$0xff]
                  %600 = vst [vmem:[%s590 + $0x20] sm:$0xff] %v599
                  %v601 = vld [vmem:[%s589 + $0xf0] sm:$0xff]
                  %602 = vst [vmem:[%s590 + $0x28] sm:$0xff] %v601
                  %v603 = vld [vmem:[%s589 + $0x120] sm:$0xff]
                  %604 = vst [vmem:[%s590 + $0x30] sm:$0xff] %v603
                  %v605 = vld [vmem:[%s589 + $0x150] sm:$0xff]
                  %606 = vst [vmem:[%s590 + $0x38] sm:$0xff] %v605
                  %v607 = vld [vmem:[%s589 + $0x180] sm:$0xff]
                  %608 = vst [vmem:[%s590 + $0x40] sm:$0xff] %v607
                  %v609 = vld [vmem:[%s589 + $0x1b0] sm:$0xff]
                  %610 = vst [vmem:[%s590 + $0x48] sm:$0xff] %v609
                  %v611 = vld [vmem:[%s589 + $0x1e0] sm:$0xff]
                  %612 = vst [vmem:[%s590 + $0x50] sm:$0xff] %v611
                  %v613 = vld [vmem:[%s589 + $0x210] sm:$0xff]
                  %614 = vst [vmem:[%s590 + $0x58] sm:$0xff] %v613
                  %v615 = vld [vmem:[%s589 + $0x240] sm:$0xff]
                  %616 = vst [vmem:[%s590 + $0x60] sm:$0xff] %v615
                  %v617 = vld [vmem:[%s589 + $0x270] sm:$0xff]
                  %618 = vst [vmem:[%s590 + $0x68] sm:$0xff] %v617
                  %v619 = vld [vmem:[%s589 + $0x2a0] sm:$0xff]
                  %620 = vst [vmem:[%s590 + $0x70] sm:$0xff] %v619
                  %v621 = vld [vmem:[%s589 + $0x2d0] sm:$0xff]
                  %622 = vst [vmem:[%s590 + $0x78] sm:$0xff] %v621
                $region124: #{attention_forward.4} parent=118 // loop_footer
                  %s588 = sadd.s32 1, %s584
                $region125: #{attention_forward.4} parent=118 // loop_footer_branch
                  %583 = sbr.rel target = $region121
                $region126: #{attention_forward.4} parent=118 // loop_exit
                  _
              $region119: #{attention_forward.4} parent=103 // pred_fallthru
                _
              // Predicated region
              $region127: #{attention_forward.4} parent=103 // pred_check
                _
              $region128: #{attention_forward.4} parent=103 // pred_check_branch
                %624 = sbr.rel target = $region130
              $region129: #{attention_forward.4} parent=103 // pred_region
                _
              $region130: #{attention_forward.4} parent=103 // pred_fallthru
                _
            $region104: #{attention_forward.4} parent=99 // pred_fallthru
              _
            // Predicated region
            $region105: #{attention_forward.4} parent=99 // pred_check
              _
            $region106: #{attention_forward.4} parent=99 // pred_check_branch
              %539 = sbr.rel target = $region108
            $region107: #{attention_forward.4} parent=99 // pred_region
              loop: start=0, step=1, limit=1
              $region109: #{attention_forward.4} parent=107 // loop_pre_header
                _
              $region110: #{attention_forward.4} parent=107 // loop_header
                %s542 = sphi 0, %s546
                %p543 = scmp.ge.s32.totalorder %s542, 1
                %s547 = sphi %s533, %s533
                %s548 = sphi %s523, %s523
              $region111: #{attention_forward.4} parent=107 // loop_header_branch
                %545 = sbr.rel (%p543) target = $region115
              $region112: #{attention_forward.4} parent=107 // loop_body
                %v549 = vld [vmem:[%s547] sm:$0xff]
                %550 = vst [vmem:[%s548] sm:$0xff] %v549
                %v551 = vld [vmem:[%s547 + $0x30] sm:$0xff]
                %552 = vst [vmem:[%s548 + $0x8] sm:$0xff] %v551
                %v553 = vld [vmem:[%s547 + $0x60] sm:$0xff]
                %554 = vst [vmem:[%s548 + $0x10] sm:$0xff] %v553
                %v555 = vld [vmem:[%s547 + $0x90] sm:$0xff]
                %556 = vst [vmem:[%s548 + $0x18] sm:$0xff] %v555
                %v557 = vld [vmem:[%s547 + $0xc0] sm:$0xff]
                %558 = vst [vmem:[%s548 + $0x20] sm:$0xff] %v557
                %v559 = vld [vmem:[%s547 + $0xf0] sm:$0xff]
                %560 = vst [vmem:[%s548 + $0x28] sm:$0xff] %v559
                %v561 = vld [vmem:[%s547 + $0x120] sm:$0xff]
                %562 = vst [vmem:[%s548 + $0x30] sm:$0xff] %v561
                %v563 = vld [vmem:[%s547 + $0x150] sm:$0xff]
                %564 = vst [vmem:[%s548 + $0x38] sm:$0xff] %v563
                %v565 = vld [vmem:[%s547 + $0x180] sm:$0xff]
                %566 = vst [vmem:[%s548 + $0x40] sm:$0xff] %v565
                %v567 = vld [vmem:[%s547 + $0x1b0] sm:$0xff]
                %568 = vst [vmem:[%s548 + $0x48] sm:$0xff] %v567
                %v569 = vld [vmem:[%s547 + $0x1e0] sm:$0xff]
                %570 = vst [vmem:[%s548 + $0x50] sm:$0xff] %v569
                %v571 = vld [vmem:[%s547 + $0x210] sm:$0xff]
                %572 = vst [vmem:[%s548 + $0x58] sm:$0xff] %v571
                %v573 = vld [vmem:[%s547 + $0x240] sm:$0xff]
                %574 = vst [vmem:[%s548 + $0x60] sm:$0xff] %v573
                %v575 = vld [vmem:[%s547 + $0x270] sm:$0xff]
                %576 = vst [vmem:[%s548 + $0x68] sm:$0xff] %v575
                %v577 = vld [vmem:[%s547 + $0x2a0] sm:$0xff]
                %578 = vst [vmem:[%s548 + $0x70] sm:$0xff] %v577
                %v579 = vld [vmem:[%s547 + $0x2d0] sm:$0xff]
                %580 = vst [vmem:[%s548 + $0x78] sm:$0xff] %v579
              $region113: #{attention_forward.4} parent=107 // loop_footer
                %s546 = sadd.s32 1, %s542
              $region114: #{attention_forward.4} parent=107 // loop_footer_branch
                %541 = sbr.rel target = $region110
              $region115: #{attention_forward.4} parent=107 // loop_exit
                _
            $region108: #{attention_forward.4} parent=99 // pred_fallthru
              _
          $region100: #{attention_forward.4} parent=95 // pred_fallthru
            _
          %625 = vnop
        $region96: #{attention_forward.4} parent=15 // pred_fallthru
          _
        // Predicated region
        $region131: #{attention_forward.4} parent=15 // pred_check
          %p626 = pneg %p161
        $region132: #{attention_forward.4} parent=15 // pred_check_branch
          %628 = sbr.rel (%p626) target = $region134
        $region133: #{attention_forward.4} parent=15 // pred_region
          %s629 = smul.u32 16, %s22
          %p630 = scmp.lt.s32.totalorder %s629, 31
          %s631 = scalar_select %p630, %s629, 31
          %s632 = smul.addr %s631, 8
          %s633 = scalar_lea.vmem %s3, %s632
          %s634 = smul.u32 16, %s22
        $region134: #{attention_forward.4} parent=15 // pred_fallthru
          _
        // Predicated region
        $region135: #{attention_forward.4} parent=15 // pred_check
          %p635 = pneg %p187
        $region136: #{attention_forward.4} parent=15 // pred_check_branch
          %637 = sbr.rel (%p635) target = $region138
        $region137: #{attention_forward.4} parent=15 // pred_region
          %s638 = smul.u32 16, %s22
          %p639 = scmp.lt.s32.totalorder %s638, 31
          %s640 = scalar_select %p639, %s638, 31
          %s641 = smul.addr %s640, 8
          %s642 = scalar_lea.vmem %s4, %s641
          %s643 = smul.u32 16, %s22
        $region138: #{attention_forward.4} parent=15 // pred_fallthru
          _
        // Predicated region
        $region139: #{attention_forward.4} parent=15 // pred_check
          %p644 = pneg %p217
        $region140: #{attention_forward.4} parent=15 // pred_check_branch
          %646 = sbr.rel (%p644) target = $region142
        $region141: #{attention_forward.4} parent=15 // pred_region
          %p647 = scmp.lt.s32.totalorder %s23, %s22
          %s648 = scalar_select %p647, %s23, %s22
          %s649 = smul.u32 16, %s648
          %p650 = scmp.lt.s32.totalorder %s649, 31
          %s651 = scalar_select %p650, %s649, 31
          %s652 = smul.addr %s651, 8
          %s653 = scalar_lea.vmem %s5, %s652
          %p654 = scmp.lt.s32.totalorder %s23, %s22
          %s655 = scalar_select %p654, %s23, %s22
          %s656 = smul.u32 16, %s655
        $region142: #{attention_forward.4} parent=15 // pred_fallthru
          _
        // Predicated region
        $region143: #{attention_forward.4} parent=15 // pred_check
          %p657 = pneg %p247
        $region144: #{attention_forward.4} parent=15 // pred_check_branch
          %659 = sbr.rel (%p657) target = $region146
        $region145: #{attention_forward.4} parent=15 // pred_region
          %p660 = scmp.lt.s32.totalorder %s23, %s22
          %s661 = scalar_select %p660, %s23, %s22
          %s662 = smul.u32 16, %s661
          %p663 = scmp.lt.s32.totalorder %s662, 31
          %s664 = scalar_select %p663, %s662, 31
          %s665 = smul.addr %s664, 8
          %s666 = scalar_lea.vmem %s6, %s665
          %p667 = scmp.lt.s32.totalorder %s23, %s22
          %s668 = scalar_select %p667, %s23, %s22
          %s669 = smul.u32 16, %s668
        $region146: #{attention_forward.4} parent=15 // pred_fallthru
          _
      $region16: #{attention_forward.4} parent=5 // pred_fallthru
        _
      %p670 = scmp.le.s32.totalorder 1, %s13
      %p671 = scmp.lt.s32.totalorder %s13, 17
      %p672 = pnand %p670, %p671
      %p673 = pneg %p672
      // Predicated region
      $region147: #{attention_forward.4} parent=5 // pred_check
        _
      $region148: #{attention_forward.4} parent=5 // pred_check_branch
        %675 = sbr.rel (%p672) target = $region150
      $region149: #{attention_forward.4} parent=5 // pred_region
        %s676 = ssub.s32 %s13, 1
        %s677 = sand.u32 %s56, 1
        %s678 = sand.u32 %s56, 1
        %s679 = smul.addr %s678, 128
        %s680 = scalar_lea.vmem [#allocation5], %s679
        // Predicated region
        $region151: #{attention_forward.4} parent=149 // pred_check
          %p681 = pneg %p69
        $region152: #{attention_forward.4} parent=149 // pred_check_branch
          %683 = sbr.rel (%p681) target = $region154
        $region153: #{attention_forward.4} parent=149 // pred_region
          _
        $region154: #{attention_forward.4} parent=149 // pred_fallthru
          _
        %s684 = sand.u32 %s92, 1
        %s685 = sand.u32 %s92, 1
        %s686 = smul.addr %s685, 128
        %s687 = scalar_lea.vmem [#allocation6], %s686
        // Predicated region
        $region155: #{attention_forward.4} parent=149 // pred_check
          %p688 = pneg %p105
        $region156: #{attention_forward.4} parent=149 // pred_check_branch
          %690 = sbr.rel (%p688) target = $region158
        $region157: #{attention_forward.4} parent=149 // pred_region
          _
        $region158: #{attention_forward.4} parent=149 // pred_fallthru
          _
        %s691 = sand.u32 %s128, 1
        %s692 = sand.u32 %s128, 1
        %s693 = smul.addr %s692, 128
        %s694 = scalar_lea.vmem [#allocation7], %s693
        // Predicated region
        $region159: #{attention_forward.4} parent=149 // pred_check
          %p695 = pneg %p141
        $region160: #{attention_forward.4} parent=149 // pred_check_branch
          %697 = sbr.rel (%p695) target = $region162
        $region161: #{attention_forward.4} parent=149 // pred_region
          _
        $region162: #{attention_forward.4} parent=149 // pred_fallthru
          _
        %s698 = sand.u32 %s56, 1
        %s699 = sand.u32 %s56, 1
        %s700 = smul.addr %s699, 128
        %s701 = scalar_lea.vmem [#allocation5], %s700
        %p702 = pneg %p69
        %p703 = pneg %p66
        %s704 = sand.u32 %s92, 1
        %s705 = sand.u32 %s92, 1
        %s706 = smul.addr %s705, 128
        %s707 = scalar_lea.vmem [#allocation6], %s706
        %p708 = pneg %p105
        %p709 = pneg %p102
        %s710 = sand.u32 %s128, 1
        %s711 = sand.u32 %s128, 1
        %s712 = smul.addr %s711, 128
        %s713 = scalar_lea.vmem [#allocation7], %s712
        %p714 = pneg %p141
        %p715 = pneg %p138
        %s716 = smul.u32 16, %s26
        %p717 = scmp.lt.s32.totalorder %s716, 31
        %s718 = scalar_select %p717, %s716, 31
        %s719 = smul.addr %s718, 8
        %s720 = scalar_lea.vmem %s3, %s719
        %p721 = pneg %p167
        %p722 = pneg %p164
        %s723 = smul.u32 16, %s26
        %p724 = scmp.lt.s32.totalorder %s723, 31
        %s725 = scalar_select %p724, %s723, 31
        %s726 = smul.addr %s725, 8
        %s727 = scalar_lea.vmem %s4, %s726
        %p728 = pneg %p193
        %p729 = pneg %p190
        %p730 = scmp.lt.s32.totalorder %s27, %s26
        %s731 = scalar_select %p730, %s27, %s26
        %s732 = smul.u32 16, %s731
        %p733 = scmp.lt.s32.totalorder %s732, 31
        %s734 = scalar_select %p733, %s732, 31
        %s735 = smul.addr %s734, 8
        %s736 = scalar_lea.vmem %s5, %s735
        %p737 = pneg %p223
        %p738 = pneg %p220
        %p739 = scmp.lt.s32.totalorder %s27, %s26
        %s740 = scalar_select %p739, %s27, %s26
        %s741 = smul.u32 16, %s740
        %p742 = scmp.lt.s32.totalorder %s741, 31
        %s743 = scalar_select %p742, %s741, 31
        %s744 = smul.addr %s743, 8
        %s745 = scalar_lea.vmem %s6, %s744
        %p746 = pneg %p253
        %p747 = pneg %p250
        %p748 = pneg %p283
        %p749 = pneg %p280
        %s750 = sand.u32 %s270, 1
        %s751 = sand.u32 %s270, 1
        %s752 = smul.addr %s751, 128
        %s753 = scalar_lea.vmem [#allocation8], %s752
        %s754 = smul.u32 16, %s26
        %p755 = scmp.lt.s32.totalorder %s27, %s26
        %s756 = scalar_select %p755, %s27, %s26
        %s757 = sadd.s32 %s25, 2
        %s758 = smul.u32 16, %s756
        %p759 = scmp.lt.s32.totalorder %s27, %s26
        %s760 = scalar_select %p759, %s27, %s26
        %s761 = sadd.s32 %s25, 4
        %s762 = smul.u32 16, %s760
        %s763 = smul.u32 16, %s26
        %p764 = scmp.lt.s32.totalorder %s763, 31
        %s765 = scalar_select %p764, %s763, 31
        %s766 = smul.addr %s765, 8
        %s767 = scalar_lea.vmem %s3, %s766
        %s768 = smul.u32 16, %s26
        %s769 = smul.u32 16, %s26
        %p770 = scmp.lt.s32.totalorder %s769, 31
        %s771 = scalar_select %p770, %s769, 31
        %s772 = smul.addr %s771, 8
        %s773 = scalar_lea.vmem %s4, %s772
        %s774 = smul.u32 16, %s26
        %p775 = scmp.lt.s32.totalorder %s27, %s26
        %s776 = scalar_select %p775, %s27, %s26
        %s777 = smul.u32 16, %s776
        %p778 = scmp.lt.s32.totalorder %s777, 31
        %s779 = scalar_select %p778, %s777, 31
        %s780 = smul.addr %s779, 8
        %s781 = scalar_lea.vmem %s5, %s780
        %p782 = scmp.lt.s32.totalorder %s27, %s26
        %s783 = scalar_select %p782, %s27, %s26
        %s784 = smul.u32 16, %s783
        %p785 = scmp.lt.s32.totalorder %s27, %s26
        %s786 = scalar_select %p785, %s27, %s26
        %s787 = smul.u32 16, %s786
        %p788 = scmp.lt.s32.totalorder %s787, 31
        %s789 = scalar_select %p788, %s787, 31
        %s790 = smul.addr %s789, 8
        %s791 = scalar_lea.vmem %s6, %s790
        %p792 = scmp.lt.s32.totalorder %s27, %s26
        %s793 = scalar_select %p792, %s27, %s26
        %s794 = smul.u32 16, %s793
        %s795 = smul.u32 16, %s26
        %p796 = scmp.eq.s32.totalorder %s27, 0
        // Predicated region
        $region163: #{attention_forward.4} parent=149 // pred_check
          %p797 = pneg %p796
        $region164: #{attention_forward.4} parent=149 // pred_check_branch
          %799 = sbr.rel (%p797) target = $region166
        $region165: #{attention_forward.4} parent=149 // pred_region
          %vm800 = vcmask 7168
          %801 = vst.msk [vmem:[#allocation2] sm:$0xff] %vm800, -inf
          %802 = vst.msk [vmem:[#allocation2 + $0x8] sm:$0xff] %vm800, -inf
          %803 = vst.msk [vmem:[#allocation2 + $0x10] sm:$0xff] %vm800, -inf
          %804 = vst.msk [vmem:[#allocation2 + $0x18] sm:$0xff] %vm800, -inf
          %805 = vst.msk [vmem:[#allocation2 + $0x20] sm:$0xff] %vm800, -inf
          %806 = vst.msk [vmem:[#allocation2 + $0x28] sm:$0xff] %vm800, -inf
          %807 = vst.msk [vmem:[#allocation2 + $0x30] sm:$0xff] %vm800, -inf
          %808 = vst.msk [vmem:[#allocation2 + $0x38] sm:$0xff] %vm800, -inf
          %809 = vst.msk [vmem:[#allocation2 + $0x40] sm:$0xff] %vm800, -inf
          %810 = vst.msk [vmem:[#allocation2 + $0x48] sm:$0xff] %vm800, -inf
          %811 = vst.msk [vmem:[#allocation2 + $0x50] sm:$0xff] %vm800, -inf
          %812 = vst.msk [vmem:[#allocation2 + $0x58] sm:$0xff] %vm800, -inf
          %813 = vst.msk [vmem:[#allocation2 + $0x60] sm:$0xff] %vm800, -inf
          %814 = vst.msk [vmem:[#allocation2 + $0x68] sm:$0xff] %vm800, -inf
          %815 = vst.msk [vmem:[#allocation2 + $0x70] sm:$0xff] %vm800, -inf
          %816 = vst.msk [vmem:[#allocation2 + $0x78] sm:$0xff] %vm800, -inf
          %817 = vst.msk [vmem:[#allocation3] sm:$0xff] %vm800, 0.0
          %818 = vst.msk [vmem:[#allocation3 + $0x8] sm:$0xff] %vm800, 0.0
          %819 = vst.msk [vmem:[#allocation3 + $0x10] sm:$0xff] %vm800, 0.0
          %820 = vst.msk [vmem:[#allocation3 + $0x18] sm:$0xff] %vm800, 0.0
          %821 = vst.msk [vmem:[#allocation3 + $0x20] sm:$0xff] %vm800, 0.0
          %822 = vst.msk [vmem:[#allocation3 + $0x28] sm:$0xff] %vm800, 0.0
          %823 = vst.msk [vmem:[#allocation3 + $0x30] sm:$0xff] %vm800, 0.0
          %824 = vst.msk [vmem:[#allocation3 + $0x38] sm:$0xff] %vm800, 0.0
          %825 = vst.msk [vmem:[#allocation3 + $0x40] sm:$0xff] %vm800, 0.0
          %826 = vst.msk [vmem:[#allocation3 + $0x48] sm:$0xff] %vm800, 0.0
          %827 = vst.msk [vmem:[#allocation3 + $0x50] sm:$0xff] %vm800, 0.0
          %828 = vst.msk [vmem:[#allocation3 + $0x58] sm:$0xff] %vm800, 0.0
          %829 = vst.msk [vmem:[#allocation3 + $0x60] sm:$0xff] %vm800, 0.0
          %830 = vst.msk [vmem:[#allocation3 + $0x68] sm:$0xff] %vm800, 0.0
          %831 = vst.msk [vmem:[#allocation3 + $0x70] sm:$0xff] %vm800, 0.0
          %832 = vst.msk [vmem:[#allocation3 + $0x78] sm:$0xff] %vm800, 0.0
          %833 = vst [vmem:[#allocation4] sm:$0xff] 0.0
          %834 = vst [vmem:[#allocation4 + $0x8] sm:$0xff] 0.0
          %835 = vst [vmem:[#allocation4 + $0x10] sm:$0xff] 0.0
          %836 = vst [vmem:[#allocation4 + $0x18] sm:$0xff] 0.0
          %837 = vst [vmem:[#allocation4 + $0x20] sm:$0xff] 0.0
          %838 = vst [vmem:[#allocation4 + $0x28] sm:$0xff] 0.0
          %839 = vst [vmem:[#allocation4 + $0x30] sm:$0xff] 0.0
          %840 = vst [vmem:[#allocation4 + $0x38] sm:$0xff] 0.0
          %841 = vst [vmem:[#allocation4 + $0x40] sm:$0xff] 0.0
          %842 = vst [vmem:[#allocation4 + $0x48] sm:$0xff] 0.0
          %843 = vst [vmem:[#allocation4 + $0x50] sm:$0xff] 0.0
          %844 = vst [vmem:[#allocation4 + $0x58] sm:$0xff] 0.0
          %845 = vst [vmem:[#allocation4 + $0x60] sm:$0xff] 0.0
          %846 = vst [vmem:[#allocation4 + $0x68] sm:$0xff] 0.0
          %847 = vst [vmem:[#allocation4 + $0x70] sm:$0xff] 0.0
          %848 = vst [vmem:[#allocation4 + $0x78] sm:$0xff] 0.0
        $region166: #{attention_forward.4} parent=149 // pred_fallthru
          _
        %p849 = scmp.le.s32.totalorder %s27, %s26
        // Predicated region
        $region167: #{attention_forward.4} parent=149 // pred_check
          %p850 = pneg %p849
        $region168: #{attention_forward.4} parent=149 // pred_check_branch
          %852 = sbr.rel (%p850) target = $region170
        $region169: #{attention_forward.4} parent=149 // pred_region
          %v853 = vld [vmem:[%s680] sm:$0xff]
          %v854 = vld [vmem:[%s680 + $0x8] sm:$0xff]
          %v855 = vld [vmem:[%s680 + $0x10] sm:$0xff]
          %v856 = vld [vmem:[%s680 + $0x18] sm:$0xff]
          %v857 = vld [vmem:[%s680 + $0x20] sm:$0xff]
          %v858 = vld [vmem:[%s680 + $0x28] sm:$0xff]
          %v859 = vld [vmem:[%s680 + $0x30] sm:$0xff]
          %v860 = vld [vmem:[%s680 + $0x38] sm:$0xff]
          %v861 = vld [vmem:[%s680 + $0x40] sm:$0xff]
          %v862 = vld [vmem:[%s680 + $0x48] sm:$0xff]
          %v863 = vld [vmem:[%s680 + $0x50] sm:$0xff]
          %v864 = vld [vmem:[%s680 + $0x58] sm:$0xff]
          %v865 = vld [vmem:[%s680 + $0x60] sm:$0xff]
          %v866 = vld [vmem:[%s680 + $0x68] sm:$0xff]
          %v867 = vld [vmem:[%s680 + $0x70] sm:$0xff]
          %v868 = vld [vmem:[%s680 + $0x78] sm:$0xff]
          %v869 = vld [vmem:[%s687] sm:$0xff]
          %v870 = vld [vmem:[%s687 + $0x8] sm:$0xff]
          %v871 = vld [vmem:[%s687 + $0x10] sm:$0xff]
          %v872 = vld [vmem:[%s687 + $0x18] sm:$0xff]
          %v873 = vld [vmem:[%s687 + $0x20] sm:$0xff]
          %v874 = vld [vmem:[%s687 + $0x28] sm:$0xff]
          %v875 = vld [vmem:[%s687 + $0x30] sm:$0xff]
          %v876 = vld [vmem:[%s687 + $0x38] sm:$0xff]
          %v877 = vld [vmem:[%s687 + $0x40] sm:$0xff]
          %v878 = vld [vmem:[%s687 + $0x48] sm:$0xff]
          %v879 = vld [vmem:[%s687 + $0x50] sm:$0xff]
          %v880 = vld [vmem:[%s687 + $0x58] sm:$0xff]
          %v881 = vld [vmem:[%s687 + $0x60] sm:$0xff]
          %v882 = vld [vmem:[%s687 + $0x68] sm:$0xff]
          %v883 = vld [vmem:[%s687 + $0x70] sm:$0xff]
          %v884 = vld [vmem:[%s687 + $0x78] sm:$0xff]
          %v885 = vld [vmem:[%s767] sm:$0xff]
          %v886 = vld [vmem:[%s767 + $0x8] sm:$0xff]
          %v887 = vld [vmem:[%s767 + $0x10] sm:$0xff]
          %v888 = vld [vmem:[%s767 + $0x18] sm:$0xff]
          %v889 = vld [vmem:[%s767 + $0x20] sm:$0xff]
          %v890 = vld [vmem:[%s767 + $0x28] sm:$0xff]
          %v891 = vld [vmem:[%s767 + $0x30] sm:$0xff]
          %v892 = vld [vmem:[%s767 + $0x38] sm:$0xff]
          %v893 = vld [vmem:[%s767 + $0x40] sm:$0xff]
          %v894 = vld [vmem:[%s767 + $0x48] sm:$0xff]
          %v895 = vld [vmem:[%s767 + $0x50] sm:$0xff]
          %v896 = vld [vmem:[%s767 + $0x58] sm:$0xff]
          %v897 = vld [vmem:[%s767 + $0x60] sm:$0xff]
          %v898 = vld [vmem:[%s767 + $0x68] sm:$0xff]
          %v899 = vld [vmem:[%s767 + $0x70] sm:$0xff]
          %v900 = vld [vmem:[%s767 + $0x78] sm:$0xff]
          %v901 = vmul.f32 %v853, %v885
          %v902 = vmul.f32 %v854, %v886
          %v903 = vmul.f32 %v855, %v887
          %v904 = vmul.f32 %v856, %v888
          %v905 = vmul.f32 %v857, %v889
          %v906 = vmul.f32 %v858, %v890
          %v907 = vmul.f32 %v859, %v891
          %v908 = vmul.f32 %v860, %v892
          %v909 = vmul.f32 %v861, %v893
          %v910 = vmul.f32 %v862, %v894
          %v911 = vmul.f32 %v863, %v895
          %v912 = vmul.f32 %v864, %v896
          %v913 = vmul.f32 %v865, %v897
          %v914 = vmul.f32 %v866, %v898
          %v915 = vmul.f32 %v867, %v899
          %v916 = vmul.f32 %v868, %v900
          %917 = vrot.lane.b32.xlu0 %v853, 64
          %v918 = vpop.permute.xlu0 %917
          %919 = vrot.lane.b32.xlu0 %v854, 64
          %v920 = vpop.permute.xlu0 %919
          %921 = vrot.lane.b32.xlu0 %v855, 64
          %v922 = vpop.permute.xlu0 %921
          %923 = vrot.lane.b32.xlu0 %v856, 64
          %v924 = vpop.permute.xlu0 %923
          %925 = vrot.lane.b32.xlu0 %v857, 64
          %v926 = vpop.permute.xlu0 %925
          %927 = vrot.lane.b32.xlu0 %v858, 64
          %v928 = vpop.permute.xlu0 %927
          %929 = vrot.lane.b32.xlu0 %v859, 64
          %v930 = vpop.permute.xlu0 %929
          %931 = vrot.lane.b32.xlu0 %v860, 64
          %v932 = vpop.permute.xlu0 %931
          %933 = vrot.lane.b32.xlu0 %v861, 64
          %v934 = vpop.permute.xlu0 %933
          %935 = vrot.lane.b32.xlu0 %v862, 64
          %v936 = vpop.permute.xlu0 %935
          %937 = vrot.lane.b32.xlu0 %v863, 64
          %v938 = vpop.permute.xlu0 %937
          %939 = vrot.lane.b32.xlu0 %v864, 64
          %v940 = vpop.permute.xlu0 %939
          %941 = vrot.lane.b32.xlu0 %v865, 64
          %v942 = vpop.permute.xlu0 %941
          %943 = vrot.lane.b32.xlu0 %v866, 64
          %v944 = vpop.permute.xlu0 %943
          %945 = vrot.lane.b32.xlu0 %v867, 64
          %v946 = vpop.permute.xlu0 %945
          %947 = vrot.lane.b32.xlu0 %v868, 64
          %v948 = vpop.permute.xlu0 %947
          %v949 = vld [vmem:[%s773] sm:$0xff]
          %v950 = vld [vmem:[%s773 + $0x8] sm:$0xff]
          %v951 = vld [vmem:[%s773 + $0x10] sm:$0xff]
          %v952 = vld [vmem:[%s773 + $0x18] sm:$0xff]
          %v953 = vld [vmem:[%s773 + $0x20] sm:$0xff]
          %v954 = vld [vmem:[%s773 + $0x28] sm:$0xff]
          %v955 = vld [vmem:[%s773 + $0x30] sm:$0xff]
          %v956 = vld [vmem:[%s773 + $0x38] sm:$0xff]
          %v957 = vld [vmem:[%s773 + $0x40] sm:$0xff]
          %v958 = vld [vmem:[%s773 + $0x48] sm:$0xff]
          %v959 = vld [vmem:[%s773 + $0x50] sm:$0xff]
          %v960 = vld [vmem:[%s773 + $0x58] sm:$0xff]
          %v961 = vld [vmem:[%s773 + $0x60] sm:$0xff]
          %v962 = vld [vmem:[%s773 + $0x68] sm:$0xff]
          %v963 = vld [vmem:[%s773 + $0x70] sm:$0xff]
          %v964 = vld [vmem:[%s773 + $0x78] sm:$0xff]
          %v965 = vmul.f32 %v918, %v949
          %v966 = vmul.f32 %v920, %v950
          %v967 = vmul.f32 %v922, %v951
          %v968 = vmul.f32 %v924, %v952
          %v969 = vmul.f32 %v926, %v953
          %v970 = vmul.f32 %v928, %v954
          %v971 = vmul.f32 %v930, %v955
          %v972 = vmul.f32 %v932, %v956
          %v973 = vmul.f32 %v934, %v957
          %v974 = vmul.f32 %v936, %v958
          %v975 = vmul.f32 %v938, %v959
          %v976 = vmul.f32 %v940, %v960
          %v977 = vmul.f32 %v942, %v961
          %v978 = vmul.f32 %v944, %v962
          %v979 = vmul.f32 %v946, %v963
          %v980 = vmul.f32 %v948, %v964
          %v981 = vadd.f32 %v901, %v965
          %v982 = vadd.f32 %v902, %v966
          %v983 = vadd.f32 %v903, %v967
          %v984 = vadd.f32 %v904, %v968
          %v985 = vadd.f32 %v905, %v969
          %v986 = vadd.f32 %v906, %v970
          %v987 = vadd.f32 %v907, %v971
          %v988 = vadd.f32 %v908, %v972
          %v989 = vadd.f32 %v909, %v973
          %v990 = vadd.f32 %v910, %v974
          %v991 = vadd.f32 %v911, %v975
          %v992 = vadd.f32 %v912, %v976
          %v993 = vadd.f32 %v913, %v977
          %v994 = vadd.f32 %v914, %v978
          %v995 = vadd.f32 %v915, %v979
          %v996 = vadd.f32 %v916, %v980
          %v997 = vld [vmem:[%s781] sm:$0xff]
          %v998 = vld [vmem:[%s781 + $0x8] sm:$0xff]
          %v999 = vld [vmem:[%s781 + $0x10] sm:$0xff]
          %v1000 = vld [vmem:[%s781 + $0x18] sm:$0xff]
          %v1001 = vld [vmem:[%s781 + $0x20] sm:$0xff]
          %v1002 = vld [vmem:[%s781 + $0x28] sm:$0xff]
          %v1003 = vld [vmem:[%s781 + $0x30] sm:$0xff]
          %v1004 = vld [vmem:[%s781 + $0x38] sm:$0xff]
          %v1005 = vld [vmem:[%s781 + $0x40] sm:$0xff]
          %v1006 = vld [vmem:[%s781 + $0x48] sm:$0xff]
          %v1007 = vld [vmem:[%s781 + $0x50] sm:$0xff]
          %v1008 = vld [vmem:[%s781 + $0x58] sm:$0xff]
          %v1009 = vld [vmem:[%s781 + $0x60] sm:$0xff]
          %v1010 = vld [vmem:[%s781 + $0x68] sm:$0xff]
          %v1011 = vld [vmem:[%s781 + $0x70] sm:$0xff]
          %v1012 = vld [vmem:[%s781 + $0x78] sm:$0xff]
          %v1013 = vmul.f32 %v869, %v997
          %v1014 = vmul.f32 %v870, %v998
          %v1015 = vmul.f32 %v871, %v999
          %v1016 = vmul.f32 %v872, %v1000
          %v1017 = vmul.f32 %v873, %v1001
          %v1018 = vmul.f32 %v874, %v1002
          %v1019 = vmul.f32 %v875, %v1003
          %v1020 = vmul.f32 %v876, %v1004
          %v1021 = vmul.f32 %v877, %v1005
          %v1022 = vmul.f32 %v878, %v1006
          %v1023 = vmul.f32 %v879, %v1007
          %v1024 = vmul.f32 %v880, %v1008
          %v1025 = vmul.f32 %v881, %v1009
          %v1026 = vmul.f32 %v882, %v1010
          %v1027 = vmul.f32 %v883, %v1011
          %v1028 = vmul.f32 %v884, %v1012
          %1029 = vrot.lane.b32.xlu0 %v869, 64
          %v1030 = vpop.permute.xlu0 %1029
          %1031 = vrot.lane.b32.xlu0 %v870, 64
          %v1032 = vpop.permute.xlu0 %1031
          %1033 = vrot.lane.b32.xlu0 %v871, 64
          %v1034 = vpop.permute.xlu0 %1033
          %1035 = vrot.lane.b32.xlu0 %v872, 64
          %v1036 = vpop.permute.xlu0 %1035
          %1037 = vrot.lane.b32.xlu0 %v873, 64
          %v1038 = vpop.permute.xlu0 %1037
          %1039 = vrot.lane.b32.xlu0 %v874, 64
          %v1040 = vpop.permute.xlu0 %1039
          %1041 = vrot.lane.b32.xlu0 %v875, 64
          %v1042 = vpop.permute.xlu0 %1041
          %1043 = vrot.lane.b32.xlu0 %v876, 64
          %v1044 = vpop.permute.xlu0 %1043
          %1045 = vrot.lane.b32.xlu0 %v877, 64
          %v1046 = vpop.permute.xlu0 %1045
          %1047 = vrot.lane.b32.xlu0 %v878, 64
          %v1048 = vpop.permute.xlu0 %1047
          %1049 = vrot.lane.b32.xlu0 %v879, 64
          %v1050 = vpop.permute.xlu0 %1049
          %1051 = vrot.lane.b32.xlu0 %v880, 64
          %v1052 = vpop.permute.xlu0 %1051
          %1053 = vrot.lane.b32.xlu0 %v881, 64
          %v1054 = vpop.permute.xlu0 %1053
          %1055 = vrot.lane.b32.xlu0 %v882, 64
          %v1056 = vpop.permute.xlu0 %1055
          %1057 = vrot.lane.b32.xlu0 %v883, 64
          %v1058 = vpop.permute.xlu0 %1057
          %1059 = vrot.lane.b32.xlu0 %v884, 64
          %v1060 = vpop.permute.xlu0 %1059
          %v1061 = vld [vmem:[%s791] sm:$0xff]
          %v1062 = vld [vmem:[%s791 + $0x8] sm:$0xff]
          %v1063 = vld [vmem:[%s791 + $0x10] sm:$0xff]
          %v1064 = vld [vmem:[%s791 + $0x18] sm:$0xff]
          %v1065 = vld [vmem:[%s791 + $0x20] sm:$0xff]
          %v1066 = vld [vmem:[%s791 + $0x28] sm:$0xff]
          %v1067 = vld [vmem:[%s791 + $0x30] sm:$0xff]
          %v1068 = vld [vmem:[%s791 + $0x38] sm:$0xff]
          %v1069 = vld [vmem:[%s791 + $0x40] sm:$0xff]
          %v1070 = vld [vmem:[%s791 + $0x48] sm:$0xff]
          %v1071 = vld [vmem:[%s791 + $0x50] sm:$0xff]
          %v1072 = vld [vmem:[%s791 + $0x58] sm:$0xff]
          %v1073 = vld [vmem:[%s791 + $0x60] sm:$0xff]
          %v1074 = vld [vmem:[%s791 + $0x68] sm:$0xff]
          %v1075 = vld [vmem:[%s791 + $0x70] sm:$0xff]
          %v1076 = vld [vmem:[%s791 + $0x78] sm:$0xff]
          %v1077 = vmul.f32 %v1030, %v1061
          %v1078 = vmul.f32 %v1032, %v1062
          %v1079 = vmul.f32 %v1034, %v1063
          %v1080 = vmul.f32 %v1036, %v1064
          %v1081 = vmul.f32 %v1038, %v1065
          %v1082 = vmul.f32 %v1040, %v1066
          %v1083 = vmul.f32 %v1042, %v1067
          %v1084 = vmul.f32 %v1044, %v1068
          %v1085 = vmul.f32 %v1046, %v1069
          %v1086 = vmul.f32 %v1048, %v1070
          %v1087 = vmul.f32 %v1050, %v1071
          %v1088 = vmul.f32 %v1052, %v1072
          %v1089 = vmul.f32 %v1054, %v1073
          %v1090 = vmul.f32 %v1056, %v1074
          %v1091 = vmul.f32 %v1058, %v1075
          %v1092 = vmul.f32 %v1060, %v1076
          %v1093 = vadd.f32 %v1013, %v1077
          %v1094 = vadd.f32 %v1014, %v1078
          %v1095 = vadd.f32 %v1015, %v1079
          %v1096 = vadd.f32 %v1016, %v1080
          %v1097 = vadd.f32 %v1017, %v1081
          %v1098 = vadd.f32 %v1018, %v1082
          %v1099 = vadd.f32 %v1019, %v1083
          %v1100 = vadd.f32 %v1020, %v1084
          %v1101 = vadd.f32 %v1021, %v1085
          %v1102 = vadd.f32 %v1022, %v1086
          %v1103 = vadd.f32 %v1023, %v1087
          %v1104 = vadd.f32 %v1024, %v1088
          %v1105 = vadd.f32 %v1025, %v1089
          %v1106 = vadd.f32 %v1026, %v1090
          %v1107 = vadd.f32 %v1027, %v1091
          %v1108 = vadd.f32 %v1028, %v1092
          %1109 = vmatprep.subr.mxu0 0.0
          %1110 = vmatpush1.xpose.msra.mxu0 %v1093
          %1111 = vmatprep.subr.mxu0 0.0
          %1112 = vmatpush1.xpose.msra.mxu0 %v1094
          %1113 = vmatprep.subr.mxu0 0.0
          %1114 = vmatpush1.xpose.msra.mxu0 %v1095
          %1115 = vmatprep.subr.mxu0 0.0
          %1116 = vmatpush1.xpose.msra.mxu0 %v1096
          %1117 = vmatprep.subr.mxu0 0.0
          %1118 = vmatpush1.xpose.msra.mxu0 %v1097
          %1119 = vmatprep.subr.mxu0 0.0
          %1120 = vmatpush1.xpose.msra.mxu0 %v1098
          %1121 = vmatprep.subr.mxu0 0.0
          %1122 = vmatpush1.xpose.msra.mxu0 %v1099
          %1123 = vmatprep.subr.mxu0 0.0
          %1124 = vmatpush1.xpose.msra.mxu0 %v1100
          %1125 = vmatprep.subr.mxu0 0.0
          %1126 = vmatpush1.xpose.msra.mxu0 %v1101
          %1127 = vmatprep.subr.mxu0 0.0
          %1128 = vmatpush1.xpose.msra.mxu0 %v1102
          %1129 = vmatprep.subr.mxu0 0.0
          %1130 = vmatpush1.xpose.msra.mxu0 %v1103
          %1131 = vmatprep.subr.mxu0 0.0
          %1132 = vmatpush1.xpose.msra.mxu0 %v1104
          %1133 = vmatprep.subr.mxu0 0.0
          %1134 = vmatpush1.xpose.msra.mxu0 %v1105
          %1135 = vmatprep.subr.mxu0 0.0
          %1136 = vmatpush1.xpose.msra.mxu0 %v1106
          %1137 = vmatprep.subr.mxu0 0.0
          %1138 = vmatpush1.xpose.msra.mxu0 %v1107
          %1139 = vmatprep.subr.mxu0 0.0
          %1140 = vmatpush1.xpose.msra.mxu0 %v1108
          %1141 = vmatprep.subr.mxu0 0.0
          %1142 = vmatpush1.xpose.msra.mxu0 0.0
          %1143 = vmatprep.subr.mxu0 0.0
          %1144 = vmatpush1.xpose.msra.mxu0 0.0
          %1145 = vmatprep.subr.mxu0 0.0
          %1146 = vmatpush1.xpose.msra.mxu0 0.0
          %1147 = vmatprep.subr.mxu0 0.0
          %1148 = vmatpush1.xpose.msra.mxu0 0.0
          %1149 = vmatprep.subr.mxu0 0.0
          %1150 = vmatpush1.xpose.msra.mxu0 0.0
          %1151 = vmatprep.subr.mxu0 0.0
          %1152 = vmatpush1.xpose.msra.mxu0 0.0
          %1153 = vmatprep.subr.mxu0 0.0
          %1154 = vmatpush1.xpose.msra.mxu0 0.0
          %1155 = vmatprep.subr.mxu0 0.0
          %1156 = vmatpush1.xpose.msra.mxu0 0.0
          %1157 = vmatprep.subr.mxu0 0.0
          %1158 = vmatpush1.xpose.msra.mxu0 0.0
          %1159 = vmatprep.subr.mxu0 0.0
          %1160 = vmatpush1.xpose.msra.mxu0 0.0
          %1161 = vmatprep.subr.mxu0 0.0
          %1162 = vmatpush1.xpose.msra.mxu0 0.0
          %1163 = vmatprep.subr.mxu0 0.0
          %1164 = vmatpush1.xpose.msra.mxu0 0.0
          %1165 = vmatprep.subr.mxu0 0.0
          %1166 = vmatpush1.xpose.msra.mxu0 0.0
          %1167 = vmatprep.subr.mxu0 0.0
          %1168 = vmatpush1.xpose.msra.mxu0 0.0
          %1169 = vmatprep.subr.mxu0 0.0
          %1170 = vmatpush1.xpose.msra.mxu0 0.0
          %1171 = vmatprep.subr.mxu0 0.0
          %1172 = vmatpush1.xpose.msra.mxu0 0.0
          %1173 = vmatprep.mubr.f32.mxu0 0.0
          %1174 = vmatmul.mubr.f32.gmra.mrb[0].mxu0 %v981
          %v1175 = vpop.f32.mrb[0].mxu0
          %v1176 = vadd.f32 0.0, %v1175
          %v1177 = vpop.f32.mrb[0].mxu0
          %1178 = vmatprep.mubr.f32.mxu0 0.0
          %1179 = vmatmul.mubr.f32.gmra.mrb[0].mxu0 %v982
          %v1180 = vpop.f32.mrb[0].mxu0
          %v1181 = vadd.f32 0.0, %v1180
          %v1182 = vpop.f32.mrb[0].mxu0
          %1183 = vmatprep.mubr.f32.mxu0 0.0
          %1184 = vmatmul.mubr.f32.gmra.mrb[0].mxu0 %v983
          %v1185 = vpop.f32.mrb[0].mxu0
          %v1186 = vadd.f32 0.0, %v1185
          %v1187 = vpop.f32.mrb[0].mxu0
          %1188 = vmatprep.mubr.f32.mxu0 0.0
          %1189 = vmatmul.mubr.f32.gmra.mrb[0].mxu0 %v984
          %v1190 = vpop.f32.mrb[0].mxu0
          %v1191 = vadd.f32 0.0, %v1190
          %v1192 = vpop.f32.mrb[0].mxu0
          %1193 = vmatprep.mubr.f32.mxu0 0.0
          %1194 = vmatmul.mubr.f32.gmra.mrb[0].mxu0 %v985
          %v1195 = vpop.f32.mrb[0].mxu0
          %v1196 = vadd.f32 0.0, %v1195
          %v1197 = vpop.f32.mrb[0].mxu0
          %1198 = vmatprep.mubr.f32.mxu0 0.0
          %1199 = vmatmul.mubr.f32.gmra.mrb[0].mxu0 %v986
          %v1200 = vpop.f32.mrb[0].mxu0
          %v1201 = vadd.f32 0.0, %v1200
          %v1202 = vpop.f32.mrb[0].mxu0
          %1203 = vmatprep.mubr.f32.mxu0 0.0
          %1204 = vmatmul.mubr.f32.gmra.mrb[0].mxu0 %v987
          %v1205 = vpop.f32.mrb[0].mxu0
          %v1206 = vadd.f32 0.0, %v1205
          %v1207 = vpop.f32.mrb[0].mxu0
          %1208 = vmatprep.mubr.f32.mxu0 0.0
          %1209 = vmatmul.mubr.f32.gmra.mrb[0].mxu0 %v988
          %v1210 = vpop.f32.mrb[0].mxu0
          %v1211 = vadd.f32 0.0, %v1210
          %v1212 = vpop.f32.mrb[0].mxu0
          %1213 = vmatprep.mubr.f32.mxu0 0.0
          %1214 = vmatmul.mubr.f32.gmra.mrb[0].mxu0 %v989
          %v1215 = vpop.f32.mrb[0].mxu0
          %v1216 = vadd.f32 0.0, %v1215
          %v1217 = vpop.f32.mrb[0].mxu0
          %1218 = vmatprep.mubr.f32.mxu0 0.0
          %1219 = vmatmul.mubr.f32.gmra.mrb[0].mxu0 %v990
          %v1220 = vpop.f32.mrb[0].mxu0
          %v1221 = vadd.f32 0.0, %v1220
          %v1222 = vpop.f32.mrb[0].mxu0
          %1223 = vmatprep.mubr.f32.mxu0 0.0
          %1224 = vmatmul.mubr.f32.gmra.mrb[0].mxu0 %v991
          %v1225 = vpop.f32.mrb[0].mxu0
          %v1226 = vadd.f32 0.0, %v1225
          %v1227 = vpop.f32.mrb[0].mxu0
          %1228 = vmatprep.mubr.f32.mxu0 0.0
          %1229 = vmatmul.mubr.f32.gmra.mrb[0].mxu0 %v992
          %v1230 = vpop.f32.mrb[0].mxu0
          %v1231 = vadd.f32 0.0, %v1230
          %v1232 = vpop.f32.mrb[0].mxu0
          %1233 = vmatprep.mubr.f32.mxu0 0.0
          %1234 = vmatmul.mubr.f32.gmra.mrb[0].mxu0 %v993
          %v1235 = vpop.f32.mrb[0].mxu0
          %v1236 = vadd.f32 0.0, %v1235
          %v1237 = vpop.f32.mrb[0].mxu0
          %1238 = vmatprep.mubr.f32.mxu0 0.0
          %1239 = vmatmul.mubr.f32.gmra.mrb[0].mxu0 %v994
          %v1240 = vpop.f32.mrb[0].mxu0
          %v1241 = vadd.f32 0.0, %v1240
          %v1242 = vpop.f32.mrb[0].mxu0
          %1243 = vmatprep.mubr.f32.mxu0 0.0
          %1244 = vmatmul.mubr.f32.gmra.mrb[0].mxu0 %v995
          %v1245 = vpop.f32.mrb[0].mxu0
          %v1246 = vadd.f32 0.0, %v1245
          %v1247 = vpop.f32.mrb[0].mxu0
          %1248 = vmatprep.mubr.f32.mxu0 0.0
          %1249 = vmatmul.mubr.f32.gmra.mrb[0].mxu0 %v996
          %v1250 = vpop.f32.mrb[0].mxu0
          %v1251 = vadd.f32 0.0, %v1250
          %v1252 = vpop.f32.mrb[0].mxu0
          %1253 = vdwg.mxu0
          %v1254 = vmul.f32 %v1176, 0.088388346
          %v1255 = vmul.f32 %v1181, 0.088388346
          %v1256 = vmul.f32 %v1186, 0.088388346
          %v1257 = vmul.f32 %v1191, 0.088388346
          %v1258 = vmul.f32 %v1196, 0.088388346
          %v1259 = vmul.f32 %v1201, 0.088388346
          %v1260 = vmul.f32 %v1206, 0.088388346
          %v1261 = vmul.f32 %v1211, 0.088388346
          %v1262 = vmul.f32 %v1216, 0.088388346
          %v1263 = vmul.f32 %v1221, 0.088388346
          %v1264 = vmul.f32 %v1226, 0.088388346
          %v1265 = vmul.f32 %v1231, 0.088388346
          %v1266 = vmul.f32 %v1236, 0.088388346
          %v1267 = vmul.f32 %v1241, 0.088388346
          %v1268 = vmul.f32 %v1246, 0.088388346
          %v1269 = vmul.f32 %v1251, 0.088388346
          %p1270 = scmp.eq.s32.totalorder %s27, %s26
          // Predicated region
          $region171: #{attention_forward.4} parent=169 // pred_check
            %p1271 = pneg %p1270
          $region172: #{attention_forward.4} parent=169 // pred_check_branch
            %1273 = sbr.rel (%p1271) target = $region174
          $region173: #{attention_forward.4} parent=169 // pred_region
            %v1274 = vlaneseq
            %v1275 = vshrl.u32 %v1274, 7
            %v1276 = vadd.s32 %v1275, 8
            %v1277 = vadd.s32 %v1275, 16
            %v1278 = vadd.s32 %v1275, 24
            %v1279 = vadd.s32 %v1275, 32
            %v1280 = vadd.s32 %v1275, 40
            %v1281 = vadd.s32 %v1275, 48
            %v1282 = vadd.s32 %v1275, 56
            %v1283 = vadd.s32 %v1275, 64
            %v1284 = vadd.s32 %v1275, 72
            %v1285 = vadd.s32 %v1275, 80
            %v1286 = vadd.s32 %v1275, 88
            %v1287 = vadd.s32 %v1275, 96
            %v1288 = vadd.s32 %v1275, 104
            %v1289 = vadd.s32 %v1275, 112
            %v1290 = vadd.s32 %v1275, 120
            %v1291 = vlaneseq
            %v1292 = vand.u32 %v1291, 127
            %vm1293 = vcmp.le.s32.totalorder %v1292, %v1275
            %vm1294 = vcmp.le.s32.totalorder %v1292, %v1276
            %vm1295 = vcmp.le.s32.totalorder %v1292, %v1277
            %vm1296 = vcmp.le.s32.totalorder %v1292, %v1278
            %vm1297 = vcmp.le.s32.totalorder %v1292, %v1279
            %vm1298 = vcmp.le.s32.totalorder %v1292, %v1280
            %vm1299 = vcmp.le.s32.totalorder %v1292, %v1281
            %vm1300 = vcmp.le.s32.totalorder %v1292, %v1282
            %vm1301 = vcmp.le.s32.totalorder %v1292, %v1283
            %vm1302 = vcmp.le.s32.totalorder %v1292, %v1284
            %vm1303 = vcmp.le.s32.totalorder %v1292, %v1285
            %vm1304 = vcmp.le.s32.totalorder %v1292, %v1286
            %vm1305 = vcmp.le.s32.totalorder %v1292, %v1287
            %vm1306 = vcmp.le.s32.totalorder %v1292, %v1288
            %vm1307 = vcmp.le.s32.totalorder %v1292, %v1289
            %vm1308 = vcmp.le.s32.totalorder %v1292, %v1290
            %v1309 = vsel %vm1293, %v1254, -1e+30
            %v1310 = vsel %vm1294, %v1255, -1e+30
            %v1311 = vsel %vm1295, %v1256, -1e+30
            %v1312 = vsel %vm1296, %v1257, -1e+30
            %v1313 = vsel %vm1297, %v1258, -1e+30
            %v1314 = vsel %vm1298, %v1259, -1e+30
            %v1315 = vsel %vm1299, %v1260, -1e+30
            %v1316 = vsel %vm1300, %v1261, -1e+30
            %v1317 = vsel %vm1301, %v1262, -1e+30
            %v1318 = vsel %vm1302, %v1263, -1e+30
            %v1319 = vsel %vm1303, %v1264, -1e+30
            %v1320 = vsel %vm1304, %v1265, -1e+30
            %v1321 = vsel %vm1305, %v1266, -1e+30
            %v1322 = vsel %vm1306, %v1267, -1e+30
            %v1323 = vsel %vm1307, %v1268, -1e+30
            %v1324 = vsel %vm1308, %v1269, -1e+30
            %v1325 = vld [vmem:[#allocation2] sm:$0xff]
            %v1326 = vld [vmem:[#allocation2 + $0x8] sm:$0xff]
            %v1327 = vld [vmem:[#allocation2 + $0x10] sm:$0xff]
            %v1328 = vld [vmem:[#allocation2 + $0x18] sm:$0xff]
            %v1329 = vld [vmem:[#allocation2 + $0x20] sm:$0xff]
            %v1330 = vld [vmem:[#allocation2 + $0x28] sm:$0xff]
            %v1331 = vld [vmem:[#allocation2 + $0x30] sm:$0xff]
            %v1332 = vld [vmem:[#allocation2 + $0x38] sm:$0xff]
            %v1333 = vld [vmem:[#allocation2 + $0x40] sm:$0xff]
            %v1334 = vld [vmem:[#allocation2 + $0x48] sm:$0xff]
            %v1335 = vld [vmem:[#allocation2 + $0x50] sm:$0xff]
            %v1336 = vld [vmem:[#allocation2 + $0x58] sm:$0xff]
            %v1337 = vld [vmem:[#allocation2 + $0x60] sm:$0xff]
            %v1338 = vld [vmem:[#allocation2 + $0x68] sm:$0xff]
            %v1339 = vld [vmem:[#allocation2 + $0x70] sm:$0xff]
            %v1340 = vld [vmem:[#allocation2 + $0x78] sm:$0xff]
            %1341 = vmax.xlane.f32.xlu0 %v1309
            %v1342 = vpop.xlane.xlu0 %1341
            %1343 = vmax.xlane.f32.xlu0 %v1310
            %v1344 = vpop.xlane.xlu0 %1343
            %1345 = vmax.xlane.f32.xlu0 %v1311
            %v1346 = vpop.xlane.xlu0 %1345
            %1347 = vmax.xlane.f32.xlu0 %v1312
            %v1348 = vpop.xlane.xlu0 %1347
            %1349 = vmax.xlane.f32.xlu0 %v1313
            %v1350 = vpop.xlane.xlu0 %1349
            %1351 = vmax.xlane.f32.xlu0 %v1314
            %v1352 = vpop.xlane.xlu0 %1351
            %1353 = vmax.xlane.f32.xlu0 %v1315
            %v1354 = vpop.xlane.xlu0 %1353
            %1355 = vmax.xlane.f32.xlu0 %v1316
            %v1356 = vpop.xlane.xlu0 %1355
            %1357 = vmax.xlane.f32.xlu0 %v1317
            %v1358 = vpop.xlane.xlu0 %1357
            %1359 = vmax.xlane.f32.xlu0 %v1318
            %v1360 = vpop.xlane.xlu0 %1359
            %1361 = vmax.xlane.f32.xlu0 %v1319
            %v1362 = vpop.xlane.xlu0 %1361
            %1363 = vmax.xlane.f32.xlu0 %v1320
            %v1364 = vpop.xlane.xlu0 %1363
            %1365 = vmax.xlane.f32.xlu0 %v1321
            %v1366 = vpop.xlane.xlu0 %1365
            %1367 = vmax.xlane.f32.xlu0 %v1322
            %v1368 = vpop.xlane.xlu0 %1367
            %1369 = vmax.xlane.f32.xlu0 %v1323
            %v1370 = vpop.xlane.xlu0 %1369
            %1371 = vmax.xlane.f32.xlu0 %v1324
            %v1372 = vpop.xlane.xlu0 %1371
            %v1373 = vmax.f32 %v1325, %v1342
            %v1374 = vmax.f32 %v1326, %v1344
            %v1375 = vmax.f32 %v1327, %v1346
            %v1376 = vmax.f32 %v1328, %v1348
            %v1377 = vmax.f32 %v1329, %v1350
            %v1378 = vmax.f32 %v1330, %v1352
            %v1379 = vmax.f32 %v1331, %v1354
            %v1380 = vmax.f32 %v1332, %v1356
            %v1381 = vmax.f32 %v1333, %v1358
            %v1382 = vmax.f32 %v1334, %v1360
            %v1383 = vmax.f32 %v1335, %v1362
            %v1384 = vmax.f32 %v1336, %v1364
            %v1385 = vmax.f32 %v1337, %v1366
            %v1386 = vmax.f32 %v1338, %v1368
            %v1387 = vmax.f32 %v1339, %v1370
            %v1388 = vmax.f32 %v1340, %v1372
            %v1389 = vsub.f32 %v1325, %v1373
            %v1390 = vsub.f32 %v1326, %v1374
            %v1391 = vsub.f32 %v1327, %v1375
            %v1392 = vsub.f32 %v1328, %v1376
            %v1393 = vsub.f32 %v1329, %v1377
            %v1394 = vsub.f32 %v1330, %v1378
            %v1395 = vsub.f32 %v1331, %v1379
            %v1396 = vsub.f32 %v1332, %v1380
            %v1397 = vsub.f32 %v1333, %v1381
            %v1398 = vsub.f32 %v1334, %v1382
            %v1399 = vsub.f32 %v1335, %v1383
            %v1400 = vsub.f32 %v1336, %v1384
            %v1401 = vsub.f32 %v1337, %v1385
            %v1402 = vsub.f32 %v1338, %v1386
            %v1403 = vsub.f32 %v1339, %v1387
            %v1404 = vsub.f32 %v1340, %v1388
            %v1405 = vmul.f32 %v1389, 1.442695
            %v1406 = vpow.pop %v1405
            %v1407 = vmul.f32 %v1390, 1.442695
            %v1408 = vpow.pop %v1407
            %v1409 = vmul.f32 %v1391, 1.442695
            %v1410 = vpow.pop %v1409
            %v1411 = vmul.f32 %v1392, 1.442695
            %v1412 = vpow.pop %v1411
            %v1413 = vmul.f32 %v1393, 1.442695
            %v1414 = vpow.pop %v1413
            %v1415 = vmul.f32 %v1394, 1.442695
            %v1416 = vpow.pop %v1415
            %v1417 = vmul.f32 %v1395, 1.442695
            %v1418 = vpow.pop %v1417
            %v1419 = vmul.f32 %v1396, 1.442695
            %v1420 = vpow.pop %v1419
            %v1421 = vmul.f32 %v1397, 1.442695
            %v1422 = vpow.pop %v1421
            %v1423 = vmul.f32 %v1398, 1.442695
            %v1424 = vpow.pop %v1423
            %v1425 = vmul.f32 %v1399, 1.442695
            %v1426 = vpow.pop %v1425
            %v1427 = vmul.f32 %v1400, 1.442695
            %v1428 = vpow.pop %v1427
            %v1429 = vmul.f32 %v1401, 1.442695
            %v1430 = vpow.pop %v1429
            %v1431 = vmul.f32 %v1402, 1.442695
            %v1432 = vpow.pop %v1431
            %v1433 = vmul.f32 %v1403, 1.442695
            %v1434 = vpow.pop %v1433
            %v1435 = vmul.f32 %v1404, 1.442695
            %v1436 = vpow.pop %v1435
            %1438 = vset.pattern.permute.xlu0 0
            %1439 = vperm.xlu0 %1438, %v1373
            %v1440 = vpop.permute.xlu0 %1439
            %1443 = vset.pattern.permute.xlu0 0
            %1444 = vperm.xlu0 %1443, %v1374
            %v1445 = vpop.permute.xlu0 %1444
            %1448 = vset.pattern.permute.xlu0 0
            %1449 = vperm.xlu0 %1448, %v1375
            %v1450 = vpop.permute.xlu0 %1449
            %1453 = vset.pattern.permute.xlu0 0
            %1454 = vperm.xlu0 %1453, %v1376
            %v1455 = vpop.permute.xlu0 %1454
            %1458 = vset.pattern.permute.xlu0 0
            %1459 = vperm.xlu0 %1458, %v1377
            %v1460 = vpop.permute.xlu0 %1459
            %1463 = vset.pattern.permute.xlu0 0
            %1464 = vperm.xlu0 %1463, %v1378
            %v1465 = vpop.permute.xlu0 %1464
            %1468 = vset.pattern.permute.xlu0 0
            %1469 = vperm.xlu0 %1468, %v1379
            %v1470 = vpop.permute.xlu0 %1469
            %1473 = vset.pattern.permute.xlu0 0
            %1474 = vperm.xlu0 %1473, %v1380
            %v1475 = vpop.permute.xlu0 %1474
            %1478 = vset.pattern.permute.xlu0 0
            %1479 = vperm.xlu0 %1478, %v1381
            %v1480 = vpop.permute.xlu0 %1479
            %1483 = vset.pattern.permute.xlu0 0
            %1484 = vperm.xlu0 %1483, %v1382
            %v1485 = vpop.permute.xlu0 %1484
            %1488 = vset.pattern.permute.xlu0 0
            %1489 = vperm.xlu0 %1488, %v1383
            %v1490 = vpop.permute.xlu0 %1489
            %1493 = vset.pattern.permute.xlu0 0
            %1494 = vperm.xlu0 %1493, %v1384
            %v1495 = vpop.permute.xlu0 %1494
            %1498 = vset.pattern.permute.xlu0 0
            %1499 = vperm.xlu0 %1498, %v1385
            %v1500 = vpop.permute.xlu0 %1499
            %1503 = vset.pattern.permute.xlu0 0
            %1504 = vperm.xlu0 %1503, %v1386
            %v1505 = vpop.permute.xlu0 %1504
            %1508 = vset.pattern.permute.xlu0 0
            %1509 = vperm.xlu0 %1508, %v1387
            %v1510 = vpop.permute.xlu0 %1509
            %1513 = vset.pattern.permute.xlu0 0
            %1514 = vperm.xlu0 %1513, %v1388
            %v1515 = vpop.permute.xlu0 %1514
            %v1517 = vsub.f32 %v1309, %v1440
            %v1518 = vsub.f32 %v1310, %v1445
            %v1519 = vsub.f32 %v1311, %v1450
            %v1520 = vsub.f32 %v1312, %v1455
            %v1521 = vsub.f32 %v1313, %v1460
            %v1522 = vsub.f32 %v1314, %v1465
            %v1523 = vsub.f32 %v1315, %v1470
            %v1524 = vsub.f32 %v1316, %v1475
            %v1525 = vsub.f32 %v1317, %v1480
            %v1526 = vsub.f32 %v1318, %v1485
            %v1527 = vsub.f32 %v1319, %v1490
            %v1528 = vsub.f32 %v1320, %v1495
            %v1529 = vsub.f32 %v1321, %v1500
            %v1530 = vsub.f32 %v1322, %v1505
            %v1531 = vsub.f32 %v1323, %v1510
            %v1532 = vsub.f32 %v1324, %v1515
            %v1533 = vmul.f32 %v1517, 1.442695
            %v1534 = vpow.pop %v1533
            %v1535 = vmul.f32 %v1518, 1.442695
            %v1536 = vpow.pop %v1535
            %v1537 = vmul.f32 %v1519, 1.442695
            %v1538 = vpow.pop %v1537
            %v1539 = vmul.f32 %v1520, 1.442695
            %v1540 = vpow.pop %v1539
            %v1541 = vmul.f32 %v1521, 1.442695
            %v1542 = vpow.pop %v1541
            %v1543 = vmul.f32 %v1522, 1.442695
            %v1544 = vpow.pop %v1543
            %v1545 = vmul.f32 %v1523, 1.442695
            %v1546 = vpow.pop %v1545
            %v1547 = vmul.f32 %v1524, 1.442695
            %v1548 = vpow.pop %v1547
            %v1549 = vmul.f32 %v1525, 1.442695
            %v1550 = vpow.pop %v1549
            %v1551 = vmul.f32 %v1526, 1.442695
            %v1552 = vpow.pop %v1551
            %v1553 = vmul.f32 %v1527, 1.442695
            %v1554 = vpow.pop %v1553
            %v1555 = vmul.f32 %v1528, 1.442695
            %v1556 = vpow.pop %v1555
            %v1557 = vmul.f32 %v1529, 1.442695
            %v1558 = vpow.pop %v1557
            %v1559 = vmul.f32 %v1530, 1.442695
            %v1560 = vpow.pop %v1559
            %v1561 = vmul.f32 %v1531, 1.442695
            %v1562 = vpow.pop %v1561
            %v1563 = vmul.f32 %v1532, 1.442695
            %v1564 = vpow.pop %v1563
            %v1565 = vld [vmem:[#allocation3] sm:$0xff]
            %v1566 = vld [vmem:[#allocation3 + $0x8] sm:$0xff]
            %v1567 = vld [vmem:[#allocation3 + $0x10] sm:$0xff]
            %v1568 = vld [vmem:[#allocation3 + $0x18] sm:$0xff]
            %v1569 = vld [vmem:[#allocation3 + $0x20] sm:$0xff]
            %v1570 = vld [vmem:[#allocation3 + $0x28] sm:$0xff]
            %v1571 = vld [vmem:[#allocation3 + $0x30] sm:$0xff]
            %v1572 = vld [vmem:[#allocation3 + $0x38] sm:$0xff]
            %v1573 = vld [vmem:[#allocation3 + $0x40] sm:$0xff]
            %v1574 = vld [vmem:[#allocation3 + $0x48] sm:$0xff]
            %v1575 = vld [vmem:[#allocation3 + $0x50] sm:$0xff]
            %v1576 = vld [vmem:[#allocation3 + $0x58] sm:$0xff]
            %v1577 = vld [vmem:[#allocation3 + $0x60] sm:$0xff]
            %v1578 = vld [vmem:[#allocation3 + $0x68] sm:$0xff]
            %v1579 = vld [vmem:[#allocation3 + $0x70] sm:$0xff]
            %v1580 = vld [vmem:[#allocation3 + $0x78] sm:$0xff]
            %v1581 = vmul.f32 %v1406, %v1565
            %v1582 = vmul.f32 %v1408, %v1566
            %v1583 = vmul.f32 %v1410, %v1567
            %v1584 = vmul.f32 %v1412, %v1568
            %v1585 = vmul.f32 %v1414, %v1569
            %v1586 = vmul.f32 %v1416, %v1570
            %v1587 = vmul.f32 %v1418, %v1571
            %v1588 = vmul.f32 %v1420, %v1572
            %v1589 = vmul.f32 %v1422, %v1573
            %v1590 = vmul.f32 %v1424, %v1574
            %v1591 = vmul.f32 %v1426, %v1575
            %v1592 = vmul.f32 %v1428, %v1576
            %v1593 = vmul.f32 %v1430, %v1577
            %v1594 = vmul.f32 %v1432, %v1578
            %v1595 = vmul.f32 %v1434, %v1579
            %v1596 = vmul.f32 %v1436, %v1580
            %1597 = vadd.xlane.f32.xlu0 %v1534
            %v1598 = vpop.xlane.xlu0 %1597
            %1599 = vadd.xlane.f32.xlu0 %v1536
            %v1600 = vpop.xlane.xlu0 %1599
            %1601 = vadd.xlane.f32.xlu0 %v1538
            %v1602 = vpop.xlane.xlu0 %1601
            %1603 = vadd.xlane.f32.xlu0 %v1540
            %v1604 = vpop.xlane.xlu0 %1603
            %1605 = vadd.xlane.f32.xlu0 %v1542
            %v1606 = vpop.xlane.xlu0 %1605
            %1607 = vadd.xlane.f32.xlu0 %v1544
            %v1608 = vpop.xlane.xlu0 %1607
            %1609 = vadd.xlane.f32.xlu0 %v1546
            %v1610 = vpop.xlane.xlu0 %1609
            %1611 = vadd.xlane.f32.xlu0 %v1548
            %v1612 = vpop.xlane.xlu0 %1611
            %1613 = vadd.xlane.f32.xlu0 %v1550
            %v1614 = vpop.xlane.xlu0 %1613
            %1615 = vadd.xlane.f32.xlu0 %v1552
            %v1616 = vpop.xlane.xlu0 %1615
            %1617 = vadd.xlane.f32.xlu0 %v1554
            %v1618 = vpop.xlane.xlu0 %1617
            %1619 = vadd.xlane.f32.xlu0 %v1556
            %v1620 = vpop.xlane.xlu0 %1619
            %1621 = vadd.xlane.f32.xlu0 %v1558
            %v1622 = vpop.xlane.xlu0 %1621
            %1623 = vadd.xlane.f32.xlu0 %v1560
            %v1624 = vpop.xlane.xlu0 %1623
            %1625 = vadd.xlane.f32.xlu0 %v1562
            %v1626 = vpop.xlane.xlu0 %1625
            %1627 = vadd.xlane.f32.xlu0 %v1564
            %v1628 = vpop.xlane.xlu0 %1627
            %v1629 = vadd.f32 %v1581, %v1598
            %v1630 = vadd.f32 %v1582, %v1600
            %v1631 = vadd.f32 %v1583, %v1602
            %v1632 = vadd.f32 %v1584, %v1604
            %v1633 = vadd.f32 %v1585, %v1606
            %v1634 = vadd.f32 %v1586, %v1608
            %v1635 = vadd.f32 %v1587, %v1610
            %v1636 = vadd.f32 %v1588, %v1612
            %v1637 = vadd.f32 %v1589, %v1614
            %v1638 = vadd.f32 %v1590, %v1616
            %v1639 = vadd.f32 %v1591, %v1618
            %v1640 = vadd.f32 %v1592, %v1620
            %v1641 = vadd.f32 %v1593, %v1622
            %v1642 = vadd.f32 %v1594, %v1624
            %v1643 = vadd.f32 %v1595, %v1626
            %v1644 = vadd.f32 %v1596, %v1628
            %vm1645 = vcmask 7168
            %1646 = vst.msk [vmem:[#allocation3] sm:$0xff] %vm1645, %v1629
            %1647 = vst.msk [vmem:[#allocation3 + $0x8] sm:$0xff] %vm1645, %v1630
            %1648 = vst.msk [vmem:[#allocation3 + $0x10] sm:$0xff] %vm1645, %v1631
            %1649 = vst.msk [vmem:[#allocation3 + $0x18] sm:$0xff] %vm1645, %v1632
            %1650 = vst.msk [vmem:[#allocation3 + $0x20] sm:$0xff] %vm1645, %v1633
            %1651 = vst.msk [vmem:[#allocation3 + $0x28] sm:$0xff] %vm1645, %v1634
            %1652 = vst.msk [vmem:[#allocation3 + $0x30] sm:$0xff] %vm1645, %v1635
            %1653 = vst.msk [vmem:[#allocation3 + $0x38] sm:$0xff] %vm1645, %v1636
            %1654 = vst.msk [vmem:[#allocation3 + $0x40] sm:$0xff] %vm1645, %v1637
            %1655 = vst.msk [vmem:[#allocation3 + $0x48] sm:$0xff] %vm1645, %v1638
            %1656 = vst.msk [vmem:[#allocation3 + $0x50] sm:$0xff] %vm1645, %v1639
            %1657 = vst.msk [vmem:[#allocation3 + $0x58] sm:$0xff] %vm1645, %v1640
            %1658 = vst.msk [vmem:[#allocation3 + $0x60] sm:$0xff] %vm1645, %v1641
            %1659 = vst.msk [vmem:[#allocation3 + $0x68] sm:$0xff] %vm1645, %v1642
            %1660 = vst.msk [vmem:[#allocation3 + $0x70] sm:$0xff] %vm1645, %v1643
            %1661 = vst.msk [vmem:[#allocation3 + $0x78] sm:$0xff] %vm1645, %v1644
            %v1662 = vld [vmem:[%s694] sm:$0xff]
            %v1663 = vld [vmem:[%s694 + $0x8] sm:$0xff]
            %v1664 = vld [vmem:[%s694 + $0x10] sm:$0xff]
            %v1665 = vld [vmem:[%s694 + $0x18] sm:$0xff]
            %v1666 = vld [vmem:[%s694 + $0x20] sm:$0xff]
            %v1667 = vld [vmem:[%s694 + $0x28] sm:$0xff]
            %v1668 = vld [vmem:[%s694 + $0x30] sm:$0xff]
            %v1669 = vld [vmem:[%s694 + $0x38] sm:$0xff]
            %v1670 = vld [vmem:[%s694 + $0x40] sm:$0xff]
            %v1671 = vld [vmem:[%s694 + $0x48] sm:$0xff]
            %v1672 = vld [vmem:[%s694 + $0x50] sm:$0xff]
            %v1673 = vld [vmem:[%s694 + $0x58] sm:$0xff]
            %v1674 = vld [vmem:[%s694 + $0x60] sm:$0xff]
            %v1675 = vld [vmem:[%s694 + $0x68] sm:$0xff]
            %v1676 = vld [vmem:[%s694 + $0x70] sm:$0xff]
            %v1677 = vld [vmem:[%s694 + $0x78] sm:$0xff]
            %1678 = vmatprep.subr.mxu0 0.0
            %1679 = vmatpush1.msra.mxu0 %v1662
            %1680 = vmatprep.subr.mxu0 0.0
            %1681 = vmatpush1.msra.mxu0 %v1663
            %1682 = vmatprep.subr.mxu0 0.0
            %1683 = vmatpush1.msra.mxu0 %v1664
            %1684 = vmatprep.subr.mxu0 0.0
            %1685 = vmatpush1.msra.mxu0 %v1665
            %1686 = vmatprep.subr.mxu0 0.0
            %1687 = vmatpush1.msra.mxu0 %v1666
            %1688 = vmatprep.subr.mxu0 0.0
            %1689 = vmatpush1.msra.mxu0 %v1667
            %1690 = vmatprep.subr.mxu0 0.0
            %1691 = vmatpush1.msra.mxu0 %v1668
            %1692 = vmatprep.subr.mxu0 0.0
            %1693 = vmatpush1.msra.mxu0 %v1669
            %1694 = vmatprep.subr.mxu0 0.0
            %1695 = vmatpush1.msra.mxu0 %v1670
            %1696 = vmatprep.subr.mxu0 0.0
            %1697 = vmatpush1.msra.mxu0 %v1671
            %1698 = vmatprep.subr.mxu0 0.0
            %1699 = vmatpush1.msra.mxu0 %v1672
            %1700 = vmatprep.subr.mxu0 0.0
            %1701 = vmatpush1.msra.mxu0 %v1673
            %1702 = vmatprep.subr.mxu0 0.0
            %1703 = vmatpush1.msra.mxu0 %v1674
            %1704 = vmatprep.subr.mxu0 0.0
            %1705 = vmatpush1.msra.mxu0 %v1675
            %1706 = vmatprep.subr.mxu0 0.0
            %1707 = vmatpush1.msra.mxu0 %v1676
            %1708 = vmatprep.subr.mxu0 0.0
            %1709 = vmatpush1.msra.mxu0 %v1677
            %1710 = vmatprep.subr.mxu0 0.0
            %1711 = vmatpush1.msra.mxu0 0.0
            %1712 = vmatprep.subr.mxu0 0.0
            %1713 = vmatpush1.msra.mxu0 0.0
            %1714 = vmatprep.subr.mxu0 0.0
            %1715 = vmatpush1.msra.mxu0 0.0
            %1716 = vmatprep.subr.mxu0 0.0
            %1717 = vmatpush1.msra.mxu0 0.0
            %1718 = vmatprep.subr.mxu0 0.0
            %1719 = vmatpush1.msra.mxu0 0.0
            %1720 = vmatprep.subr.mxu0 0.0
            %1721 = vmatpush1.msra.mxu0 0.0
            %1722 = vmatprep.subr.mxu0 0.0
            %1723 = vmatpush1.msra.mxu0 0.0
            %1724 = vmatprep.subr.mxu0 0.0
            %1725 = vmatpush1.msra.mxu0 0.0
            %1726 = vmatprep.subr.mxu0 0.0
            %1727 = vmatpush1.msra.mxu0 0.0
            %1728 = vmatprep.subr.mxu0 0.0
            %1729 = vmatpush1.msra.mxu0 0.0
            %1730 = vmatprep.subr.mxu0 0.0
            %1731 = vmatpush1.msra.mxu0 0.0
            %1732 = vmatprep.subr.mxu0 0.0
            %1733 = vmatpush1.msra.mxu0 0.0
            %1734 = vmatprep.subr.mxu0 0.0
            %1735 = vmatpush1.msra.mxu0 0.0
            %1736 = vmatprep.subr.mxu0 0.0
            %1737 = vmatpush1.msra.mxu0 0.0
            %1738 = vmatprep.subr.mxu0 0.0
            %1739 = vmatpush1.msra.mxu0 0.0
            %1740 = vmatprep.subr.mxu0 0.0
            %1741 = vmatpush1.msra.mxu0 0.0
            %1742 = vmatprep.mubr.f32.mxu0 0.0
            %1743 = vmatmul.mubr.f32.gmra.mrb[0].mxu0 %v1534
            %v1744 = vpop.f32.mrb[0].mxu0
            %v1745 = vadd.f32 0.0, %v1744
            %v1746 = vpop.f32.mrb[0].mxu0
            %1747 = vmatprep.mubr.f32.mxu0 0.0
            %1748 = vmatmul.mubr.f32.gmra.mrb[0].mxu0 %v1536
            %v1749 = vpop.f32.mrb[0].mxu0
            %v1750 = vadd.f32 0.0, %v1749
            %v1751 = vpop.f32.mrb[0].mxu0
            %1752 = vmatprep.mubr.f32.mxu0 0.0
            %1753 = vmatmul.mubr.f32.gmra.mrb[0].mxu0 %v1538
            %v1754 = vpop.f32.mrb[0].mxu0
            %v1755 = vadd.f32 0.0, %v1754
            %v1756 = vpop.f32.mrb[0].mxu0
            %1757 = vmatprep.mubr.f32.mxu0 0.0
            %1758 = vmatmul.mubr.f32.gmra.mrb[0].mxu0 %v1540
            %v1759 = vpop.f32.mrb[0].mxu0
            %v1760 = vadd.f32 0.0, %v1759
            %v1761 = vpop.f32.mrb[0].mxu0
            %1762 = vmatprep.mubr.f32.mxu0 0.0
            %1763 = vmatmul.mubr.f32.gmra.mrb[0].mxu0 %v1542
            %v1764 = vpop.f32.mrb[0].mxu0
            %v1765 = vadd.f32 0.0, %v1764
            %v1766 = vpop.f32.mrb[0].mxu0
            %1767 = vmatprep.mubr.f32.mxu0 0.0
            %1768 = vmatmul.mubr.f32.gmra.mrb[0].mxu0 %v1544
            %v1769 = vpop.f32.mrb[0].mxu0
            %v1770 = vadd.f32 0.0, %v1769
            %v1771 = vpop.f32.mrb[0].mxu0
            %1772 = vmatprep.mubr.f32.mxu0 0.0
            %1773 = vmatmul.mubr.f32.gmra.mrb[0].mxu0 %v1546
            %v1774 = vpop.f32.mrb[0].mxu0
            %v1775 = vadd.f32 0.0, %v1774
            %v1776 = vpop.f32.mrb[0].mxu0
            %1777 = vmatprep.mubr.f32.mxu0 0.0
            %1778 = vmatmul.mubr.f32.gmra.mrb[0].mxu0 %v1548
            %v1779 = vpop.f32.mrb[0].mxu0
            %v1780 = vadd.f32 0.0, %v1779
            %v1781 = vpop.f32.mrb[0].mxu0
            %1782 = vmatprep.mubr.f32.mxu0 0.0
            %1783 = vmatmul.mubr.f32.gmra.mrb[0].mxu0 %v1550
            %v1784 = vpop.f32.mrb[0].mxu0
            %v1785 = vadd.f32 0.0, %v1784
            %v1786 = vpop.f32.mrb[0].mxu0
            %1787 = vmatprep.mubr.f32.mxu0 0.0
            %1788 = vmatmul.mubr.f32.gmra.mrb[0].mxu0 %v1552
            %v1789 = vpop.f32.mrb[0].mxu0
            %v1790 = vadd.f32 0.0, %v1789
            %v1791 = vpop.f32.mrb[0].mxu0
            %1792 = vmatprep.mubr.f32.mxu0 0.0
            %1793 = vmatmul.mubr.f32.gmra.mrb[0].mxu0 %v1554
            %v1794 = vpop.f32.mrb[0].mxu0
            %v1795 = vadd.f32 0.0, %v1794
            %v1796 = vpop.f32.mrb[0].mxu0
            %1797 = vmatprep.mubr.f32.mxu0 0.0
            %1798 = vmatmul.mubr.f32.gmra.mrb[0].mxu0 %v1556
            %v1799 = vpop.f32.mrb[0].mxu0
            %v1800 = vadd.f32 0.0, %v1799
            %v1801 = vpop.f32.mrb[0].mxu0
            %1802 = vmatprep.mubr.f32.mxu0 0.0
            %1803 = vmatmul.mubr.f32.gmra.mrb[0].mxu0 %v1558
            %v1804 = vpop.f32.mrb[0].mxu0
            %v1805 = vadd.f32 0.0, %v1804
            %v1806 = vpop.f32.mrb[0].mxu0
            %1807 = vmatprep.mubr.f32.mxu0 0.0
            %1808 = vmatmul.mubr.f32.gmra.mrb[0].mxu0 %v1560
            %v1809 = vpop.f32.mrb[0].mxu0
            %v1810 = vadd.f32 0.0, %v1809
            %v1811 = vpop.f32.mrb[0].mxu0
            %1812 = vmatprep.mubr.f32.mxu0 0.0
            %1813 = vmatmul.mubr.f32.gmra.mrb[0].mxu0 %v1562
            %v1814 = vpop.f32.mrb[0].mxu0
            %v1815 = vadd.f32 0.0, %v1814
            %v1816 = vpop.f32.mrb[0].mxu0
            %1817 = vmatprep.mubr.f32.mxu0 0.0
            %1818 = vmatmul.mubr.f32.gmra.mrb[0].mxu0 %v1564
            %v1819 = vpop.f32.mrb[0].mxu0
            %v1820 = vadd.f32 0.0, %v1819
            %v1821 = vpop.f32.mrb[0].mxu0
            %1822 = vdwg.mxu0
            %v1823 = vld [vmem:[#allocation4] sm:$0xff]
            %v1824 = vld [vmem:[#allocation4 + $0x8] sm:$0xff]
            %v1825 = vld [vmem:[#allocation4 + $0x10] sm:$0xff]
            %v1826 = vld [vmem:[#allocation4 + $0x18] sm:$0xff]
            %v1827 = vld [vmem:[#allocation4 + $0x20] sm:$0xff]
            %v1828 = vld [vmem:[#allocation4 + $0x28] sm:$0xff]
            %v1829 = vld [vmem:[#allocation4 + $0x30] sm:$0xff]
            %v1830 = vld [vmem:[#allocation4 + $0x38] sm:$0xff]
            %v1831 = vld [vmem:[#allocation4 + $0x40] sm:$0xff]
            %v1832 = vld [vmem:[#allocation4 + $0x48] sm:$0xff]
            %v1833 = vld [vmem:[#allocation4 + $0x50] sm:$0xff]
            %v1834 = vld [vmem:[#allocation4 + $0x58] sm:$0xff]
            %v1835 = vld [vmem:[#allocation4 + $0x60] sm:$0xff]
            %v1836 = vld [vmem:[#allocation4 + $0x68] sm:$0xff]
            %v1837 = vld [vmem:[#allocation4 + $0x70] sm:$0xff]
            %v1838 = vld [vmem:[#allocation4 + $0x78] sm:$0xff]
            %1840 = vset.pattern.permute.xlu0 0
            %1841 = vperm.xlu0 %1840, %v1406
            %v1842 = vpop.permute.xlu0 %1841
            %1845 = vset.pattern.permute.xlu0 0
            %1846 = vperm.xlu0 %1845, %v1408
            %v1847 = vpop.permute.xlu0 %1846
            %1850 = vset.pattern.permute.xlu0 0
            %1851 = vperm.xlu0 %1850, %v1410
            %v1852 = vpop.permute.xlu0 %1851
            %1855 = vset.pattern.permute.xlu0 0
            %1856 = vperm.xlu0 %1855, %v1412
            %v1857 = vpop.permute.xlu0 %1856
            %1860 = vset.pattern.permute.xlu0 0
            %1861 = vperm.xlu0 %1860, %v1414
            %v1862 = vpop.permute.xlu0 %1861
            %1865 = vset.pattern.permute.xlu0 0
            %1866 = vperm.xlu0 %1865, %v1416
            %v1867 = vpop.permute.xlu0 %1866
            %1870 = vset.pattern.permute.xlu0 0
            %1871 = vperm.xlu0 %1870, %v1418
            %v1872 = vpop.permute.xlu0 %1871
            %1875 = vset.pattern.permute.xlu0 0
            %1876 = vperm.xlu0 %1875, %v1420
            %v1877 = vpop.permute.xlu0 %1876
            %1880 = vset.pattern.permute.xlu0 0
            %1881 = vperm.xlu0 %1880, %v1422
            %v1882 = vpop.permute.xlu0 %1881
            %1885 = vset.pattern.permute.xlu0 0
            %1886 = vperm.xlu0 %1885, %v1424
            %v1887 = vpop.permute.xlu0 %1886
            %1890 = vset.pattern.permute.xlu0 0
            %1891 = vperm.xlu0 %1890, %v1426
            %v1892 = vpop.permute.xlu0 %1891
            %1895 = vset.pattern.permute.xlu0 0
            %1896 = vperm.xlu0 %1895, %v1428
            %v1897 = vpop.permute.xlu0 %1896
            %1900 = vset.pattern.permute.xlu0 0
            %1901 = vperm.xlu0 %1900, %v1430
            %v1902 = vpop.permute.xlu0 %1901
            %1905 = vset.pattern.permute.xlu0 0
            %1906 = vperm.xlu0 %1905, %v1432
            %v1907 = vpop.permute.xlu0 %1906
            %1910 = vset.pattern.permute.xlu0 0
            %1911 = vperm.xlu0 %1910, %v1434
            %v1912 = vpop.permute.xlu0 %1911
            %1915 = vset.pattern.permute.xlu0 0
            %1916 = vperm.xlu0 %1915, %v1436
            %v1917 = vpop.permute.xlu0 %1916
            %v1919 = vmul.f32 %v1842, %v1823
            %v1920 = vmul.f32 %v1847, %v1824
            %v1921 = vmul.f32 %v1852, %v1825
            %v1922 = vmul.f32 %v1857, %v1826
            %v1923 = vmul.f32 %v1862, %v1827
            %v1924 = vmul.f32 %v1867, %v1828
            %v1925 = vmul.f32 %v1872, %v1829
            %v1926 = vmul.f32 %v1877, %v1830
            %v1927 = vmul.f32 %v1882, %v1831
            %v1928 = vmul.f32 %v1887, %v1832
            %v1929 = vmul.f32 %v1892, %v1833
            %v1930 = vmul.f32 %v1897, %v1834
            %v1931 = vmul.f32 %v1902, %v1835
            %v1932 = vmul.f32 %v1907, %v1836
            %v1933 = vmul.f32 %v1912, %v1837
            %v1934 = vmul.f32 %v1917, %v1838
            %v1935 = vadd.f32 %v1919, %v1745
            %v1936 = vadd.f32 %v1920, %v1750
            %v1937 = vadd.f32 %v1921, %v1755
            %v1938 = vadd.f32 %v1922, %v1760
            %v1939 = vadd.f32 %v1923, %v1765
            %v1940 = vadd.f32 %v1924, %v1770
            %v1941 = vadd.f32 %v1925, %v1775
            %v1942 = vadd.f32 %v1926, %v1780
            %v1943 = vadd.f32 %v1927, %v1785
            %v1944 = vadd.f32 %v1928, %v1790
            %v1945 = vadd.f32 %v1929, %v1795
            %v1946 = vadd.f32 %v1930, %v1800
            %v1947 = vadd.f32 %v1931, %v1805
            %v1948 = vadd.f32 %v1932, %v1810
            %v1949 = vadd.f32 %v1933, %v1815
            %v1950 = vadd.f32 %v1934, %v1820
            %1951 = vst [vmem:[#allocation4] sm:$0xff] %v1935
            %1952 = vst [vmem:[#allocation4 + $0x8] sm:$0xff] %v1936
            %1953 = vst [vmem:[#allocation4 + $0x10] sm:$0xff] %v1937
            %1954 = vst [vmem:[#allocation4 + $0x18] sm:$0xff] %v1938
            %1955 = vst [vmem:[#allocation4 + $0x20] sm:$0xff] %v1939
            %1956 = vst [vmem:[#allocation4 + $0x28] sm:$0xff] %v1940
            %1957 = vst [vmem:[#allocation4 + $0x30] sm:$0xff] %v1941
            %1958 = vst [vmem:[#allocation4 + $0x38] sm:$0xff] %v1942
            %1959 = vst [vmem:[#allocation4 + $0x40] sm:$0xff] %v1943
            %1960 = vst [vmem:[#allocation4 + $0x48] sm:$0xff] %v1944
            %1961 = vst [vmem:[#allocation4 + $0x50] sm:$0xff] %v1945
            %1962 = vst [vmem:[#allocation4 + $0x58] sm:$0xff] %v1946
            %1963 = vst [vmem:[#allocation4 + $0x60] sm:$0xff] %v1947
            %1964 = vst [vmem:[#allocation4 + $0x68] sm:$0xff] %v1948
            %1965 = vst [vmem:[#allocation4 + $0x70] sm:$0xff] %v1949
            %1966 = vst [vmem:[#allocation4 + $0x78] sm:$0xff] %v1950
            %1967 = vst.msk [vmem:[#allocation2] sm:$0xff] %vm1645, %v1373
            %1968 = vst.msk [vmem:[#allocation2 + $0x8] sm:$0xff] %vm1645, %v1374
            %1969 = vst.msk [vmem:[#allocation2 + $0x10] sm:$0xff] %vm1645, %v1375
            %1970 = vst.msk [vmem:[#allocation2 + $0x18] sm:$0xff] %vm1645, %v1376
            %1971 = vst.msk [vmem:[#allocation2 + $0x20] sm:$0xff] %vm1645, %v1377
            %1972 = vst.msk [vmem:[#allocation2 + $0x28] sm:$0xff] %vm1645, %v1378
            %1973 = vst.msk [vmem:[#allocation2 + $0x30] sm:$0xff] %vm1645, %v1379
            %1974 = vst.msk [vmem:[#allocation2 + $0x38] sm:$0xff] %vm1645, %v1380
            %1975 = vst.msk [vmem:[#allocation2 + $0x40] sm:$0xff] %vm1645, %v1381
            %1976 = vst.msk [vmem:[#allocation2 + $0x48] sm:$0xff] %vm1645, %v1382
            %1977 = vst.msk [vmem:[#allocation2 + $0x50] sm:$0xff] %vm1645, %v1383
            %1978 = vst.msk [vmem:[#allocation2 + $0x58] sm:$0xff] %vm1645, %v1384
            %1979 = vst.msk [vmem:[#allocation2 + $0x60] sm:$0xff] %vm1645, %v1385
            %1980 = vst.msk [vmem:[#allocation2 + $0x68] sm:$0xff] %vm1645, %v1386
            %1981 = vst.msk [vmem:[#allocation2 + $0x70] sm:$0xff] %vm1645, %v1387
            %1982 = vst.msk [vmem:[#allocation2 + $0x78] sm:$0xff] %vm1645, %v1388
          $region174: #{attention_forward.4} parent=169 // pred_fallthru
            _
          %p1983 = scmp.lt.s32.totalorder %s27, %s26
          // Predicated region
          $region175: #{attention_forward.4} parent=169 // pred_check
            %p1984 = pneg %p1983
          $region176: #{attention_forward.4} parent=169 // pred_check_branch
            %1986 = sbr.rel (%p1984) target = $region178
          $region177: #{attention_forward.4} parent=169 // pred_region
            %v1987 = vld [vmem:[#allocation2] sm:$0xff]
            %v1988 = vld [vmem:[#allocation2 + $0x8] sm:$0xff]
            %v1989 = vld [vmem:[#allocation2 + $0x10] sm:$0xff]
            %v1990 = vld [vmem:[#allocation2 + $0x18] sm:$0xff]
            %v1991 = vld [vmem:[#allocation2 + $0x20] sm:$0xff]
            %v1992 = vld [vmem:[#allocation2 + $0x28] sm:$0xff]
            %v1993 = vld [vmem:[#allocation2 + $0x30] sm:$0xff]
            %v1994 = vld [vmem:[#allocation2 + $0x38] sm:$0xff]
            %v1995 = vld [vmem:[#allocation2 + $0x40] sm:$0xff]
            %v1996 = vld [vmem:[#allocation2 + $0x48] sm:$0xff]
            %v1997 = vld [vmem:[#allocation2 + $0x50] sm:$0xff]
            %v1998 = vld [vmem:[#allocation2 + $0x58] sm:$0xff]
            %v1999 = vld [vmem:[#allocation2 + $0x60] sm:$0xff]
            %v2000 = vld [vmem:[#allocation2 + $0x68] sm:$0xff]
            %v2001 = vld [vmem:[#allocation2 + $0x70] sm:$0xff]
            %v2002 = vld [vmem:[#allocation2 + $0x78] sm:$0xff]
            %2003 = vmax.xlane.f32.xlu0 %v1254
            %v2004 = vpop.xlane.xlu0 %2003
            %2005 = vmax.xlane.f32.xlu0 %v1255
            %v2006 = vpop.xlane.xlu0 %2005
            %2007 = vmax.xlane.f32.xlu0 %v1256
            %v2008 = vpop.xlane.xlu0 %2007
            %2009 = vmax.xlane.f32.xlu0 %v1257
            %v2010 = vpop.xlane.xlu0 %2009
            %2011 = vmax.xlane.f32.xlu0 %v1258
            %v2012 = vpop.xlane.xlu0 %2011
            %2013 = vmax.xlane.f32.xlu0 %v1259
            %v2014 = vpop.xlane.xlu0 %2013
            %2015 = vmax.xlane.f32.xlu0 %v1260
            %v2016 = vpop.xlane.xlu0 %2015
            %2017 = vmax.xlane.f32.xlu0 %v1261
            %v2018 = vpop.xlane.xlu0 %2017
            %2019 = vmax.xlane.f32.xlu0 %v1262
            %v2020 = vpop.xlane.xlu0 %2019
            %2021 = vmax.xlane.f32.xlu0 %v1263
            %v2022 = vpop.xlane.xlu0 %2021
            %2023 = vmax.xlane.f32.xlu0 %v1264
            %v2024 = vpop.xlane.xlu0 %2023
            %2025 = vmax.xlane.f32.xlu0 %v1265
            %v2026 = vpop.xlane.xlu0 %2025
            %2027 = vmax.xlane.f32.xlu0 %v1266
            %v2028 = vpop.xlane.xlu0 %2027
            %2029 = vmax.xlane.f32.xlu0 %v1267
            %v2030 = vpop.xlane.xlu0 %2029
            %2031 = vmax.xlane.f32.xlu0 %v1268
            %v2032 = vpop.xlane.xlu0 %2031
            %2033 = vmax.xlane.f32.xlu0 %v1269
            %v2034 = vpop.xlane.xlu0 %2033
            %v2035 = vmax.f32 %v1987, %v2004
            %v2036 = vmax.f32 %v1988, %v2006
            %v2037 = vmax.f32 %v1989, %v2008
            %v2038 = vmax.f32 %v1990, %v2010
            %v2039 = vmax.f32 %v1991, %v2012
            %v2040 = vmax.f32 %v1992, %v2014
            %v2041 = vmax.f32 %v1993, %v2016
            %v2042 = vmax.f32 %v1994, %v2018
            %v2043 = vmax.f32 %v1995, %v2020
            %v2044 = vmax.f32 %v1996, %v2022
            %v2045 = vmax.f32 %v1997, %v2024
            %v2046 = vmax.f32 %v1998, %v2026
            %v2047 = vmax.f32 %v1999, %v2028
            %v2048 = vmax.f32 %v2000, %v2030
            %v2049 = vmax.f32 %v2001, %v2032
            %v2050 = vmax.f32 %v2002, %v2034
            %v2051 = vsub.f32 %v1987, %v2035
            %v2052 = vsub.f32 %v1988, %v2036
            %v2053 = vsub.f32 %v1989, %v2037
            %v2054 = vsub.f32 %v1990, %v2038
            %v2055 = vsub.f32 %v1991, %v2039
            %v2056 = vsub.f32 %v1992, %v2040
            %v2057 = vsub.f32 %v1993, %v2041
            %v2058 = vsub.f32 %v1994, %v2042
            %v2059 = vsub.f32 %v1995, %v2043
            %v2060 = vsub.f32 %v1996, %v2044
            %v2061 = vsub.f32 %v1997, %v2045
            %v2062 = vsub.f32 %v1998, %v2046
            %v2063 = vsub.f32 %v1999, %v2047
            %v2064 = vsub.f32 %v2000, %v2048
            %v2065 = vsub.f32 %v2001, %v2049
            %v2066 = vsub.f32 %v2002, %v2050
            %v2067 = vmul.f32 %v2051, 1.442695
            %v2068 = vpow.pop %v2067
            %v2069 = vmul.f32 %v2052, 1.442695
            %v2070 = vpow.pop %v2069
            %v2071 = vmul.f32 %v2053, 1.442695
            %v2072 = vpow.pop %v2071
            %v2073 = vmul.f32 %v2054, 1.442695
            %v2074 = vpow.pop %v2073
            %v2075 = vmul.f32 %v2055, 1.442695
            %v2076 = vpow.pop %v2075
            %v2077 = vmul.f32 %v2056, 1.442695
            %v2078 = vpow.pop %v2077
            %v2079 = vmul.f32 %v2057, 1.442695
            %v2080 = vpow.pop %v2079
            %v2081 = vmul.f32 %v2058, 1.442695
            %v2082 = vpow.pop %v2081
            %v2083 = vmul.f32 %v2059, 1.442695
            %v2084 = vpow.pop %v2083
            %v2085 = vmul.f32 %v2060, 1.442695
            %v2086 = vpow.pop %v2085
            %v2087 = vmul.f32 %v2061, 1.442695
            %v2088 = vpow.pop %v2087
            %v2089 = vmul.f32 %v2062, 1.442695
            %v2090 = vpow.pop %v2089
            %v2091 = vmul.f32 %v2063, 1.442695
            %v2092 = vpow.pop %v2091
            %v2093 = vmul.f32 %v2064, 1.442695
            %v2094 = vpow.pop %v2093
            %v2095 = vmul.f32 %v2065, 1.442695
            %v2096 = vpow.pop %v2095
            %v2097 = vmul.f32 %v2066, 1.442695
            %v2098 = vpow.pop %v2097
            %2100 = vset.pattern.permute.xlu0 0
            %2101 = vperm.xlu0 %2100, %v2035
            %v2102 = vpop.permute.xlu0 %2101
            %2105 = vset.pattern.permute.xlu0 0
            %2106 = vperm.xlu0 %2105, %v2036
            %v2107 = vpop.permute.xlu0 %2106
            %2110 = vset.pattern.permute.xlu0 0
            %2111 = vperm.xlu0 %2110, %v2037
            %v2112 = vpop.permute.xlu0 %2111
            %2115 = vset.pattern.permute.xlu0 0
            %2116 = vperm.xlu0 %2115, %v2038
            %v2117 = vpop.permute.xlu0 %2116
            %2120 = vset.pattern.permute.xlu0 0
            %2121 = vperm.xlu0 %2120, %v2039
            %v2122 = vpop.permute.xlu0 %2121
            %2125 = vset.pattern.permute.xlu0 0
            %2126 = vperm.xlu0 %2125, %v2040
            %v2127 = vpop.permute.xlu0 %2126
            %2130 = vset.pattern.permute.xlu0 0
            %2131 = vperm.xlu0 %2130, %v2041
            %v2132 = vpop.permute.xlu0 %2131
            %2135 = vset.pattern.permute.xlu0 0
            %2136 = vperm.xlu0 %2135, %v2042
            %v2137 = vpop.permute.xlu0 %2136
            %2140 = vset.pattern.permute.xlu0 0
            %2141 = vperm.xlu0 %2140, %v2043
            %v2142 = vpop.permute.xlu0 %2141
            %2145 = vset.pattern.permute.xlu0 0
            %2146 = vperm.xlu0 %2145, %v2044
            %v2147 = vpop.permute.xlu0 %2146
            %2150 = vset.pattern.permute.xlu0 0
            %2151 = vperm.xlu0 %2150, %v2045
            %v2152 = vpop.permute.xlu0 %2151
            %2155 = vset.pattern.permute.xlu0 0
            %2156 = vperm.xlu0 %2155, %v2046
            %v2157 = vpop.permute.xlu0 %2156
            %2160 = vset.pattern.permute.xlu0 0
            %2161 = vperm.xlu0 %2160, %v2047
            %v2162 = vpop.permute.xlu0 %2161
            %2165 = vset.pattern.permute.xlu0 0
            %2166 = vperm.xlu0 %2165, %v2048
            %v2167 = vpop.permute.xlu0 %2166
            %2170 = vset.pattern.permute.xlu0 0
            %2171 = vperm.xlu0 %2170, %v2049
            %v2172 = vpop.permute.xlu0 %2171
            %2175 = vset.pattern.permute.xlu0 0
            %2176 = vperm.xlu0 %2175, %v2050
            %v2177 = vpop.permute.xlu0 %2176
            %v2179 = vsub.f32 %v1254, %v2102
            %v2180 = vsub.f32 %v1255, %v2107
            %v2181 = vsub.f32 %v1256, %v2112
            %v2182 = vsub.f32 %v1257, %v2117
            %v2183 = vsub.f32 %v1258, %v2122
            %v2184 = vsub.f32 %v1259, %v2127
            %v2185 = vsub.f32 %v1260, %v2132
            %v2186 = vsub.f32 %v1261, %v2137
            %v2187 = vsub.f32 %v1262, %v2142
            %v2188 = vsub.f32 %v1263, %v2147
            %v2189 = vsub.f32 %v1264, %v2152
            %v2190 = vsub.f32 %v1265, %v2157
            %v2191 = vsub.f32 %v1266, %v2162
            %v2192 = vsub.f32 %v1267, %v2167
            %v2193 = vsub.f32 %v1268, %v2172
            %v2194 = vsub.f32 %v1269, %v2177
            %v2195 = vmul.f32 %v2179, 1.442695
            %v2196 = vpow.pop %v2195
            %v2197 = vmul.f32 %v2180, 1.442695
            %v2198 = vpow.pop %v2197
            %v2199 = vmul.f32 %v2181, 1.442695
            %v2200 = vpow.pop %v2199
            %v2201 = vmul.f32 %v2182, 1.442695
            %v2202 = vpow.pop %v2201
            %v2203 = vmul.f32 %v2183, 1.442695
            %v2204 = vpow.pop %v2203
            %v2205 = vmul.f32 %v2184, 1.442695
            %v2206 = vpow.pop %v2205
            %v2207 = vmul.f32 %v2185, 1.442695
            %v2208 = vpow.pop %v2207
            %v2209 = vmul.f32 %v2186, 1.442695
            %v2210 = vpow.pop %v2209
            %v2211 = vmul.f32 %v2187, 1.442695
            %v2212 = vpow.pop %v2211
            %v2213 = vmul.f32 %v2188, 1.442695
            %v2214 = vpow.pop %v2213
            %v2215 = vmul.f32 %v2189, 1.442695
            %v2216 = vpow.pop %v2215
            %v2217 = vmul.f32 %v2190, 1.442695
            %v2218 = vpow.pop %v2217
            %v2219 = vmul.f32 %v2191, 1.442695
            %v2220 = vpow.pop %v2219
            %v2221 = vmul.f32 %v2192, 1.442695
            %v2222 = vpow.pop %v2221
            %v2223 = vmul.f32 %v2193, 1.442695
            %v2224 = vpow.pop %v2223
            %v2225 = vmul.f32 %v2194, 1.442695
            %v2226 = vpow.pop %v2225
            %v2227 = vld [vmem:[#allocation3] sm:$0xff]
            %v2228 = vld [vmem:[#allocation3 + $0x8] sm:$0xff]
            %v2229 = vld [vmem:[#allocation3 + $0x10] sm:$0xff]
            %v2230 = vld [vmem:[#allocation3 + $0x18] sm:$0xff]
            %v2231 = vld [vmem:[#allocation3 + $0x20] sm:$0xff]
            %v2232 = vld [vmem:[#allocation3 + $0x28] sm:$0xff]
            %v2233 = vld [vmem:[#allocation3 + $0x30] sm:$0xff]
            %v2234 = vld [vmem:[#allocation3 + $0x38] sm:$0xff]
            %v2235 = vld [vmem:[#allocation3 + $0x40] sm:$0xff]
            %v2236 = vld [vmem:[#allocation3 + $0x48] sm:$0xff]
            %v2237 = vld [vmem:[#allocation3 + $0x50] sm:$0xff]
            %v2238 = vld [vmem:[#allocation3 + $0x58] sm:$0xff]
            %v2239 = vld [vmem:[#allocation3 + $0x60] sm:$0xff]
            %v2240 = vld [vmem:[#allocation3 + $0x68] sm:$0xff]
            %v2241 = vld [vmem:[#allocation3 + $0x70] sm:$0xff]
            %v2242 = vld [vmem:[#allocation3 + $0x78] sm:$0xff]
            %v2243 = vmul.f32 %v2068, %v2227
            %v2244 = vmul.f32 %v2070, %v2228
            %v2245 = vmul.f32 %v2072, %v2229
            %v2246 = vmul.f32 %v2074, %v2230
            %v2247 = vmul.f32 %v2076, %v2231
            %v2248 = vmul.f32 %v2078, %v2232
            %v2249 = vmul.f32 %v2080, %v2233
            %v2250 = vmul.f32 %v2082, %v2234
            %v2251 = vmul.f32 %v2084, %v2235
            %v2252 = vmul.f32 %v2086, %v2236
            %v2253 = vmul.f32 %v2088, %v2237
            %v2254 = vmul.f32 %v2090, %v2238
            %v2255 = vmul.f32 %v2092, %v2239
            %v2256 = vmul.f32 %v2094, %v2240
            %v2257 = vmul.f32 %v2096, %v2241
            %v2258 = vmul.f32 %v2098, %v2242
            %2259 = vadd.xlane.f32.xlu0 %v2196
            %v2260 = vpop.xlane.xlu0 %2259
            %2261 = vadd.xlane.f32.xlu0 %v2198
            %v2262 = vpop.xlane.xlu0 %2261
            %2263 = vadd.xlane.f32.xlu0 %v2200
            %v2264 = vpop.xlane.xlu0 %2263
            %2265 = vadd.xlane.f32.xlu0 %v2202
            %v2266 = vpop.xlane.xlu0 %2265
            %2267 = vadd.xlane.f32.xlu0 %v2204
            %v2268 = vpop.xlane.xlu0 %2267
            %2269 = vadd.xlane.f32.xlu0 %v2206
            %v2270 = vpop.xlane.xlu0 %2269
            %2271 = vadd.xlane.f32.xlu0 %v2208
            %v2272 = vpop.xlane.xlu0 %2271
            %2273 = vadd.xlane.f32.xlu0 %v2210
            %v2274 = vpop.xlane.xlu0 %2273
            %2275 = vadd.xlane.f32.xlu0 %v2212
            %v2276 = vpop.xlane.xlu0 %2275
            %2277 = vadd.xlane.f32.xlu0 %v2214
            %v2278 = vpop.xlane.xlu0 %2277
            %2279 = vadd.xlane.f32.xlu0 %v2216
            %v2280 = vpop.xlane.xlu0 %2279
            %2281 = vadd.xlane.f32.xlu0 %v2218
            %v2282 = vpop.xlane.xlu0 %2281
            %2283 = vadd.xlane.f32.xlu0 %v2220
            %v2284 = vpop.xlane.xlu0 %2283
            %2285 = vadd.xlane.f32.xlu0 %v2222
            %v2286 = vpop.xlane.xlu0 %2285
            %2287 = vadd.xlane.f32.xlu0 %v2224
            %v2288 = vpop.xlane.xlu0 %2287
            %2289 = vadd.xlane.f32.xlu0 %v2226
            %v2290 = vpop.xlane.xlu0 %2289
            %v2291 = vadd.f32 %v2243, %v2260
            %v2292 = vadd.f32 %v2244, %v2262
            %v2293 = vadd.f32 %v2245, %v2264
            %v2294 = vadd.f32 %v2246, %v2266
            %v2295 = vadd.f32 %v2247, %v2268
            %v2296 = vadd.f32 %v2248, %v2270
            %v2297 = vadd.f32 %v2249, %v2272
            %v2298 = vadd.f32 %v2250, %v2274
            %v2299 = vadd.f32 %v2251, %v2276
            %v2300 = vadd.f32 %v2252, %v2278
            %v2301 = vadd.f32 %v2253, %v2280
            %v2302 = vadd.f32 %v2254, %v2282
            %v2303 = vadd.f32 %v2255, %v2284
            %v2304 = vadd.f32 %v2256, %v2286
            %v2305 = vadd.f32 %v2257, %v2288
            %v2306 = vadd.f32 %v2258, %v2290
            %vm2307 = vcmask 7168
            %2308 = vst.msk [vmem:[#allocation3] sm:$0xff] %vm2307, %v2291
            %2309 = vst.msk [vmem:[#allocation3 + $0x8] sm:$0xff] %vm2307, %v2292
            %2310 = vst.msk [vmem:[#allocation3 + $0x10] sm:$0xff] %vm2307, %v2293
            %2311 = vst.msk [vmem:[#allocation3 + $0x18] sm:$0xff] %vm2307, %v2294
            %2312 = vst.msk [vmem:[#allocation3 + $0x20] sm:$0xff] %vm2307, %v2295
            %2313 = vst.msk [vmem:[#allocation3 + $0x28] sm:$0xff] %vm2307, %v2296
            %2314 = vst.msk [vmem:[#allocation3 + $0x30] sm:$0xff] %vm2307, %v2297
            %2315 = vst.msk [vmem:[#allocation3 + $0x38] sm:$0xff] %vm2307, %v2298
            %2316 = vst.msk [vmem:[#allocation3 + $0x40] sm:$0xff] %vm2307, %v2299
            %2317 = vst.msk [vmem:[#allocation3 + $0x48] sm:$0xff] %vm2307, %v2300
            %2318 = vst.msk [vmem:[#allocation3 + $0x50] sm:$0xff] %vm2307, %v2301
            %2319 = vst.msk [vmem:[#allocation3 + $0x58] sm:$0xff] %vm2307, %v2302
            %2320 = vst.msk [vmem:[#allocation3 + $0x60] sm:$0xff] %vm2307, %v2303
            %2321 = vst.msk [vmem:[#allocation3 + $0x68] sm:$0xff] %vm2307, %v2304
            %2322 = vst.msk [vmem:[#allocation3 + $0x70] sm:$0xff] %vm2307, %v2305
            %2323 = vst.msk [vmem:[#allocation3 + $0x78] sm:$0xff] %vm2307, %v2306
            %v2324 = vld [vmem:[%s694] sm:$0xff]
            %v2325 = vld [vmem:[%s694 + $0x8] sm:$0xff]
            %v2326 = vld [vmem:[%s694 + $0x10] sm:$0xff]
            %v2327 = vld [vmem:[%s694 + $0x18] sm:$0xff]
            %v2328 = vld [vmem:[%s694 + $0x20] sm:$0xff]
            %v2329 = vld [vmem:[%s694 + $0x28] sm:$0xff]
            %v2330 = vld [vmem:[%s694 + $0x30] sm:$0xff]
            %v2331 = vld [vmem:[%s694 + $0x38] sm:$0xff]
            %v2332 = vld [vmem:[%s694 + $0x40] sm:$0xff]
            %v2333 = vld [vmem:[%s694 + $0x48] sm:$0xff]
            %v2334 = vld [vmem:[%s694 + $0x50] sm:$0xff]
            %v2335 = vld [vmem:[%s694 + $0x58] sm:$0xff]
            %v2336 = vld [vmem:[%s694 + $0x60] sm:$0xff]
            %v2337 = vld [vmem:[%s694 + $0x68] sm:$0xff]
            %v2338 = vld [vmem:[%s694 + $0x70] sm:$0xff]
            %v2339 = vld [vmem:[%s694 + $0x78] sm:$0xff]
            %2340 = vmatprep.subr.mxu0 0.0
            %2341 = vmatpush1.msra.mxu0 %v2324
            %2342 = vmatprep.subr.mxu0 0.0
            %2343 = vmatpush1.msra.mxu0 %v2325
            %2344 = vmatprep.subr.mxu0 0.0
            %2345 = vmatpush1.msra.mxu0 %v2326
            %2346 = vmatprep.subr.mxu0 0.0
            %2347 = vmatpush1.msra.mxu0 %v2327
            %2348 = vmatprep.subr.mxu0 0.0
            %2349 = vmatpush1.msra.mxu0 %v2328
            %2350 = vmatprep.subr.mxu0 0.0
            %2351 = vmatpush1.msra.mxu0 %v2329
            %2352 = vmatprep.subr.mxu0 0.0
            %2353 = vmatpush1.msra.mxu0 %v2330
            %2354 = vmatprep.subr.mxu0 0.0
            %2355 = vmatpush1.msra.mxu0 %v2331
            %2356 = vmatprep.subr.mxu0 0.0
            %2357 = vmatpush1.msra.mxu0 %v2332
            %2358 = vmatprep.subr.mxu0 0.0
            %2359 = vmatpush1.msra.mxu0 %v2333
            %2360 = vmatprep.subr.mxu0 0.0
            %2361 = vmatpush1.msra.mxu0 %v2334
            %2362 = vmatprep.subr.mxu0 0.0
            %2363 = vmatpush1.msra.mxu0 %v2335
            %2364 = vmatprep.subr.mxu0 0.0
            %2365 = vmatpush1.msra.mxu0 %v2336
            %2366 = vmatprep.subr.mxu0 0.0
            %2367 = vmatpush1.msra.mxu0 %v2337
            %2368 = vmatprep.subr.mxu0 0.0
            %2369 = vmatpush1.msra.mxu0 %v2338
            %2370 = vmatprep.subr.mxu0 0.0
            %2371 = vmatpush1.msra.mxu0 %v2339
            %2372 = vmatprep.subr.mxu0 0.0
            %2373 = vmatpush1.msra.mxu0 0.0
            %2374 = vmatprep.subr.mxu0 0.0
            %2375 = vmatpush1.msra.mxu0 0.0
            %2376 = vmatprep.subr.mxu0 0.0
            %2377 = vmatpush1.msra.mxu0 0.0
            %2378 = vmatprep.subr.mxu0 0.0
            %2379 = vmatpush1.msra.mxu0 0.0
            %2380 = vmatprep.subr.mxu0 0.0
            %2381 = vmatpush1.msra.mxu0 0.0
            %2382 = vmatprep.subr.mxu0 0.0
            %2383 = vmatpush1.msra.mxu0 0.0
            %2384 = vmatprep.subr.mxu0 0.0
            %2385 = vmatpush1.msra.mxu0 0.0
            %2386 = vmatprep.subr.mxu0 0.0
            %2387 = vmatpush1.msra.mxu0 0.0
            %2388 = vmatprep.subr.mxu0 0.0
            %2389 = vmatpush1.msra.mxu0 0.0
            %2390 = vmatprep.subr.mxu0 0.0
            %2391 = vmatpush1.msra.mxu0 0.0
            %2392 = vmatprep.subr.mxu0 0.0
            %2393 = vmatpush1.msra.mxu0 0.0
            %2394 = vmatprep.subr.mxu0 0.0
            %2395 = vmatpush1.msra.mxu0 0.0
            %2396 = vmatprep.subr.mxu0 0.0
            %2397 = vmatpush1.msra.mxu0 0.0
            %2398 = vmatprep.subr.mxu0 0.0
            %2399 = vmatpush1.msra.mxu0 0.0
            %2400 = vmatprep.subr.mxu0 0.0
            %2401 = vmatpush1.msra.mxu0 0.0
            %2402 = vmatprep.subr.mxu0 0.0
            %2403 = vmatpush1.msra.mxu0 0.0
            %2404 = vmatprep.mubr.f32.mxu0 0.0
            %2405 = vmatmul.mubr.f32.gmra.mrb[0].mxu0 %v2196
            %v2406 = vpop.f32.mrb[0].mxu0
            %v2407 = vadd.f32 0.0, %v2406
            %v2408 = vpop.f32.mrb[0].mxu0
            %2409 = vmatprep.mubr.f32.mxu0 0.0
            %2410 = vmatmul.mubr.f32.gmra.mrb[0].mxu0 %v2198
            %v2411 = vpop.f32.mrb[0].mxu0
            %v2412 = vadd.f32 0.0, %v2411
            %v2413 = vpop.f32.mrb[0].mxu0
            %2414 = vmatprep.mubr.f32.mxu0 0.0
            %2415 = vmatmul.mubr.f32.gmra.mrb[0].mxu0 %v2200
            %v2416 = vpop.f32.mrb[0].mxu0
            %v2417 = vadd.f32 0.0, %v2416
            %v2418 = vpop.f32.mrb[0].mxu0
            %2419 = vmatprep.mubr.f32.mxu0 0.0
            %2420 = vmatmul.mubr.f32.gmra.mrb[0].mxu0 %v2202
            %v2421 = vpop.f32.mrb[0].mxu0
            %v2422 = vadd.f32 0.0, %v2421
            %v2423 = vpop.f32.mrb[0].mxu0
            %2424 = vmatprep.mubr.f32.mxu0 0.0
            %2425 = vmatmul.mubr.f32.gmra.mrb[0].mxu0 %v2204
            %v2426 = vpop.f32.mrb[0].mxu0
            %v2427 = vadd.f32 0.0, %v2426
            %v2428 = vpop.f32.mrb[0].mxu0
            %2429 = vmatprep.mubr.f32.mxu0 0.0
            %2430 = vmatmul.mubr.f32.gmra.mrb[0].mxu0 %v2206
            %v2431 = vpop.f32.mrb[0].mxu0
            %v2432 = vadd.f32 0.0, %v2431
            %v2433 = vpop.f32.mrb[0].mxu0
            %2434 = vmatprep.mubr.f32.mxu0 0.0
            %2435 = vmatmul.mubr.f32.gmra.mrb[0].mxu0 %v2208
            %v2436 = vpop.f32.mrb[0].mxu0
            %v2437 = vadd.f32 0.0, %v2436
            %v2438 = vpop.f32.mrb[0].mxu0
            %2439 = vmatprep.mubr.f32.mxu0 0.0
            %2440 = vmatmul.mubr.f32.gmra.mrb[0].mxu0 %v2210
            %v2441 = vpop.f32.mrb[0].mxu0
            %v2442 = vadd.f32 0.0, %v2441
            %v2443 = vpop.f32.mrb[0].mxu0
            %2444 = vmatprep.mubr.f32.mxu0 0.0
            %2445 = vmatmul.mubr.f32.gmra.mrb[0].mxu0 %v2212
            %v2446 = vpop.f32.mrb[0].mxu0
            %v2447 = vadd.f32 0.0, %v2446
            %v2448 = vpop.f32.mrb[0].mxu0
            %2449 = vmatprep.mubr.f32.mxu0 0.0
            %2450 = vmatmul.mubr.f32.gmra.mrb[0].mxu0 %v2214
            %v2451 = vpop.f32.mrb[0].mxu0
            %v2452 = vadd.f32 0.0, %v2451
            %v2453 = vpop.f32.mrb[0].mxu0
            %2454 = vmatprep.mubr.f32.mxu0 0.0
            %2455 = vmatmul.mubr.f32.gmra.mrb[0].mxu0 %v2216
            %v2456 = vpop.f32.mrb[0].mxu0
            %v2457 = vadd.f32 0.0, %v2456
            %v2458 = vpop.f32.mrb[0].mxu0
            %2459 = vmatprep.mubr.f32.mxu0 0.0
            %2460 = vmatmul.mubr.f32.gmra.mrb[0].mxu0 %v2218
            %v2461 = vpop.f32.mrb[0].mxu0
            %v2462 = vadd.f32 0.0, %v2461
            %v2463 = vpop.f32.mrb[0].mxu0
            %2464 = vmatprep.mubr.f32.mxu0 0.0
            %2465 = vmatmul.mubr.f32.gmra.mrb[0].mxu0 %v2220
            %v2466 = vpop.f32.mrb[0].mxu0
            %v2467 = vadd.f32 0.0, %v2466
            %v2468 = vpop.f32.mrb[0].mxu0
            %2469 = vmatprep.mubr.f32.mxu0 0.0
            %2470 = vmatmul.mubr.f32.gmra.mrb[0].mxu0 %v2222
            %v2471 = vpop.f32.mrb[0].mxu0
            %v2472 = vadd.f32 0.0, %v2471
            %v2473 = vpop.f32.mrb[0].mxu0
            %2474 = vmatprep.mubr.f32.mxu0 0.0
            %2475 = vmatmul.mubr.f32.gmra.mrb[0].mxu0 %v2224
            %v2476 = vpop.f32.mrb[0].mxu0
            %v2477 = vadd.f32 0.0, %v2476
            %v2478 = vpop.f32.mrb[0].mxu0
            %2479 = vmatprep.mubr.f32.mxu0 0.0
            %2480 = vmatmul.mubr.f32.gmra.mrb[0].mxu0 %v2226
            %v2481 = vpop.f32.mrb[0].mxu0
            %v2482 = vadd.f32 0.0, %v2481
            %v2483 = vpop.f32.mrb[0].mxu0
            %2484 = vdwg.mxu0
            %v2485 = vld [vmem:[#allocation4] sm:$0xff]
            %v2486 = vld [vmem:[#allocation4 + $0x8] sm:$0xff]
            %v2487 = vld [vmem:[#allocation4 + $0x10] sm:$0xff]
            %v2488 = vld [vmem:[#allocation4 + $0x18] sm:$0xff]
            %v2489 = vld [vmem:[#allocation4 + $0x20] sm:$0xff]
            %v2490 = vld [vmem:[#allocation4 + $0x28] sm:$0xff]
            %v2491 = vld [vmem:[#allocation4 + $0x30] sm:$0xff]
            %v2492 = vld [vmem:[#allocation4 + $0x38] sm:$0xff]
            %v2493 = vld [vmem:[#allocation4 + $0x40] sm:$0xff]
            %v2494 = vld [vmem:[#allocation4 + $0x48] sm:$0xff]
            %v2495 = vld [vmem:[#allocation4 + $0x50] sm:$0xff]
            %v2496 = vld [vmem:[#allocation4 + $0x58] sm:$0xff]
            %v2497 = vld [vmem:[#allocation4 + $0x60] sm:$0xff]
            %v2498 = vld [vmem:[#allocation4 + $0x68] sm:$0xff]
            %v2499 = vld [vmem:[#allocation4 + $0x70] sm:$0xff]
            %v2500 = vld [vmem:[#allocation4 + $0x78] sm:$0xff]
            %2502 = vset.pattern.permute.xlu0 0
            %2503 = vperm.xlu0 %2502, %v2068
            %v2504 = vpop.permute.xlu0 %2503
            %2507 = vset.pattern.permute.xlu0 0
            %2508 = vperm.xlu0 %2507, %v2070
            %v2509 = vpop.permute.xlu0 %2508
            %2512 = vset.pattern.permute.xlu0 0
            %2513 = vperm.xlu0 %2512, %v2072
            %v2514 = vpop.permute.xlu0 %2513
            %2517 = vset.pattern.permute.xlu0 0
            %2518 = vperm.xlu0 %2517, %v2074
            %v2519 = vpop.permute.xlu0 %2518
            %2522 = vset.pattern.permute.xlu0 0
            %2523 = vperm.xlu0 %2522, %v2076
            %v2524 = vpop.permute.xlu0 %2523
            %2527 = vset.pattern.permute.xlu0 0
            %2528 = vperm.xlu0 %2527, %v2078
            %v2529 = vpop.permute.xlu0 %2528
            %2532 = vset.pattern.permute.xlu0 0
            %2533 = vperm.xlu0 %2532, %v2080
            %v2534 = vpop.permute.xlu0 %2533
            %2537 = vset.pattern.permute.xlu0 0
            %2538 = vperm.xlu0 %2537, %v2082
            %v2539 = vpop.permute.xlu0 %2538
            %2542 = vset.pattern.permute.xlu0 0
            %2543 = vperm.xlu0 %2542, %v2084
            %v2544 = vpop.permute.xlu0 %2543
            %2547 = vset.pattern.permute.xlu0 0
            %2548 = vperm.xlu0 %2547, %v2086
            %v2549 = vpop.permute.xlu0 %2548
            %2552 = vset.pattern.permute.xlu0 0
            %2553 = vperm.xlu0 %2552, %v2088
            %v2554 = vpop.permute.xlu0 %2553
            %2557 = vset.pattern.permute.xlu0 0
            %2558 = vperm.xlu0 %2557, %v2090
            %v2559 = vpop.permute.xlu0 %2558
            %2562 = vset.pattern.permute.xlu0 0
            %2563 = vperm.xlu0 %2562, %v2092
            %v2564 = vpop.permute.xlu0 %2563
            %2567 = vset.pattern.permute.xlu0 0
            %2568 = vperm.xlu0 %2567, %v2094
            %v2569 = vpop.permute.xlu0 %2568
            %2572 = vset.pattern.permute.xlu0 0
            %2573 = vperm.xlu0 %2572, %v2096
            %v2574 = vpop.permute.xlu0 %2573
            %2577 = vset.pattern.permute.xlu0 0
            %2578 = vperm.xlu0 %2577, %v2098
            %v2579 = vpop.permute.xlu0 %2578
            %v2581 = vmul.f32 %v2504, %v2485
            %v2582 = vmul.f32 %v2509, %v2486
            %v2583 = vmul.f32 %v2514, %v2487
            %v2584 = vmul.f32 %v2519, %v2488
            %v2585 = vmul.f32 %v2524, %v2489
            %v2586 = vmul.f32 %v2529, %v2490
            %v2587 = vmul.f32 %v2534, %v2491
            %v2588 = vmul.f32 %v2539, %v2492
            %v2589 = vmul.f32 %v2544, %v2493
            %v2590 = vmul.f32 %v2549, %v2494
            %v2591 = vmul.f32 %v2554, %v2495
            %v2592 = vmul.f32 %v2559, %v2496
            %v2593 = vmul.f32 %v2564, %v2497
            %v2594 = vmul.f32 %v2569, %v2498
            %v2595 = vmul.f32 %v2574, %v2499
            %v2596 = vmul.f32 %v2579, %v2500
            %v2597 = vadd.f32 %v2581, %v2407
            %v2598 = vadd.f32 %v2582, %v2412
            %v2599 = vadd.f32 %v2583, %v2417
            %v2600 = vadd.f32 %v2584, %v2422
            %v2601 = vadd.f32 %v2585, %v2427
            %v2602 = vadd.f32 %v2586, %v2432
            %v2603 = vadd.f32 %v2587, %v2437
            %v2604 = vadd.f32 %v2588, %v2442
            %v2605 = vadd.f32 %v2589, %v2447
            %v2606 = vadd.f32 %v2590, %v2452
            %v2607 = vadd.f32 %v2591, %v2457
            %v2608 = vadd.f32 %v2592, %v2462
            %v2609 = vadd.f32 %v2593, %v2467
            %v2610 = vadd.f32 %v2594, %v2472
            %v2611 = vadd.f32 %v2595, %v2477
            %v2612 = vadd.f32 %v2596, %v2482
            %2613 = vst [vmem:[#allocation4] sm:$0xff] %v2597
            %2614 = vst [vmem:[#allocation4 + $0x8] sm:$0xff] %v2598
            %2615 = vst [vmem:[#allocation4 + $0x10] sm:$0xff] %v2599
            %2616 = vst [vmem:[#allocation4 + $0x18] sm:$0xff] %v2600
            %2617 = vst [vmem:[#allocation4 + $0x20] sm:$0xff] %v2601
            %2618 = vst [vmem:[#allocation4 + $0x28] sm:$0xff] %v2602
            %2619 = vst [vmem:[#allocation4 + $0x30] sm:$0xff] %v2603
            %2620 = vst [vmem:[#allocation4 + $0x38] sm:$0xff] %v2604
            %2621 = vst [vmem:[#allocation4 + $0x40] sm:$0xff] %v2605
            %2622 = vst [vmem:[#allocation4 + $0x48] sm:$0xff] %v2606
            %2623 = vst [vmem:[#allocation4 + $0x50] sm:$0xff] %v2607
            %2624 = vst [vmem:[#allocation4 + $0x58] sm:$0xff] %v2608
            %2625 = vst [vmem:[#allocation4 + $0x60] sm:$0xff] %v2609
            %2626 = vst [vmem:[#allocation4 + $0x68] sm:$0xff] %v2610
            %2627 = vst [vmem:[#allocation4 + $0x70] sm:$0xff] %v2611
            %2628 = vst [vmem:[#allocation4 + $0x78] sm:$0xff] %v2612
            %2629 = vst.msk [vmem:[#allocation2] sm:$0xff] %vm2307, %v2035
            %2630 = vst.msk [vmem:[#allocation2 + $0x8] sm:$0xff] %vm2307, %v2036
            %2631 = vst.msk [vmem:[#allocation2 + $0x10] sm:$0xff] %vm2307, %v2037
            %2632 = vst.msk [vmem:[#allocation2 + $0x18] sm:$0xff] %vm2307, %v2038
            %2633 = vst.msk [vmem:[#allocation2 + $0x20] sm:$0xff] %vm2307, %v2039
            %2634 = vst.msk [vmem:[#allocation2 + $0x28] sm:$0xff] %vm2307, %v2040
            %2635 = vst.msk [vmem:[#allocation2 + $0x30] sm:$0xff] %vm2307, %v2041
            %2636 = vst.msk [vmem:[#allocation2 + $0x38] sm:$0xff] %vm2307, %v2042
            %2637 = vst.msk [vmem:[#allocation2 + $0x40] sm:$0xff] %vm2307, %v2043
            %2638 = vst.msk [vmem:[#allocation2 + $0x48] sm:$0xff] %vm2307, %v2044
            %2639 = vst.msk [vmem:[#allocation2 + $0x50] sm:$0xff] %vm2307, %v2045
            %2640 = vst.msk [vmem:[#allocation2 + $0x58] sm:$0xff] %vm2307, %v2046
            %2641 = vst.msk [vmem:[#allocation2 + $0x60] sm:$0xff] %vm2307, %v2047
            %2642 = vst.msk [vmem:[#allocation2 + $0x68] sm:$0xff] %vm2307, %v2048
            %2643 = vst.msk [vmem:[#allocation2 + $0x70] sm:$0xff] %vm2307, %v2049
            %2644 = vst.msk [vmem:[#allocation2 + $0x78] sm:$0xff] %vm2307, %v2050
          $region178: #{attention_forward.4} parent=169 // pred_fallthru
            _
        $region170: #{attention_forward.4} parent=149 // pred_fallthru
          _
        %p2645 = scmp.eq.s32.totalorder %s27, 1
        // Predicated region
        $region179: #{attention_forward.4} parent=149 // pred_check
          %p2646 = pneg %p2645
        $region180: #{attention_forward.4} parent=149 // pred_check_branch
          %2648 = sbr.rel (%p2646) target = $region182
        $region181: #{attention_forward.4} parent=149 // pred_region
          %v2649 = vld [vmem:[#allocation3] sm:$0xff]
          %v2650 = vld [vmem:[#allocation3 + $0x8] sm:$0xff]
          %v2651 = vld [vmem:[#allocation3 + $0x10] sm:$0xff]
          %v2652 = vld [vmem:[#allocation3 + $0x18] sm:$0xff]
          %v2653 = vld [vmem:[#allocation3 + $0x20] sm:$0xff]
          %v2654 = vld [vmem:[#allocation3 + $0x28] sm:$0xff]
          %v2655 = vld [vmem:[#allocation3 + $0x30] sm:$0xff]
          %v2656 = vld [vmem:[#allocation3 + $0x38] sm:$0xff]
          %v2657 = vld [vmem:[#allocation3 + $0x40] sm:$0xff]
          %v2658 = vld [vmem:[#allocation3 + $0x48] sm:$0xff]
          %v2659 = vld [vmem:[#allocation3 + $0x50] sm:$0xff]
          %v2660 = vld [vmem:[#allocation3 + $0x58] sm:$0xff]
          %v2661 = vld [vmem:[#allocation3 + $0x60] sm:$0xff]
          %v2662 = vld [vmem:[#allocation3 + $0x68] sm:$0xff]
          %v2663 = vld [vmem:[#allocation3 + $0x70] sm:$0xff]
          %v2664 = vld [vmem:[#allocation3 + $0x78] sm:$0xff]
          %v2665 = vrcp.pop %v2649
          %v2666 = vmul.f32 1.0, %v2665
          %v2667 = vrcp.pop %v2650
          %v2668 = vmul.f32 1.0, %v2667
          %v2669 = vrcp.pop %v2651
          %v2670 = vmul.f32 1.0, %v2669
          %v2671 = vrcp.pop %v2652
          %v2672 = vmul.f32 1.0, %v2671
          %v2673 = vrcp.pop %v2653
          %v2674 = vmul.f32 1.0, %v2673
          %v2675 = vrcp.pop %v2654
          %v2676 = vmul.f32 1.0, %v2675
          %v2677 = vrcp.pop %v2655
          %v2678 = vmul.f32 1.0, %v2677
          %v2679 = vrcp.pop %v2656
          %v2680 = vmul.f32 1.0, %v2679
          %v2681 = vrcp.pop %v2657
          %v2682 = vmul.f32 1.0, %v2681
          %v2683 = vrcp.pop %v2658
          %v2684 = vmul.f32 1.0, %v2683
          %v2685 = vrcp.pop %v2659
          %v2686 = vmul.f32 1.0, %v2685
          %v2687 = vrcp.pop %v2660
          %v2688 = vmul.f32 1.0, %v2687
          %v2689 = vrcp.pop %v2661
          %v2690 = vmul.f32 1.0, %v2689
          %v2691 = vrcp.pop %v2662
          %v2692 = vmul.f32 1.0, %v2691
          %v2693 = vrcp.pop %v2663
          %v2694 = vmul.f32 1.0, %v2693
          %v2695 = vrcp.pop %v2664
          %v2696 = vmul.f32 1.0, %v2695
          %v2697 = vld [vmem:[#allocation4] sm:$0xff]
          %v2698 = vld [vmem:[#allocation4 + $0x8] sm:$0xff]
          %v2699 = vld [vmem:[#allocation4 + $0x10] sm:$0xff]
          %v2700 = vld [vmem:[#allocation4 + $0x18] sm:$0xff]
          %v2701 = vld [vmem:[#allocation4 + $0x20] sm:$0xff]
          %v2702 = vld [vmem:[#allocation4 + $0x28] sm:$0xff]
          %v2703 = vld [vmem:[#allocation4 + $0x30] sm:$0xff]
          %v2704 = vld [vmem:[#allocation4 + $0x38] sm:$0xff]
          %v2705 = vld [vmem:[#allocation4 + $0x40] sm:$0xff]
          %v2706 = vld [vmem:[#allocation4 + $0x48] sm:$0xff]
          %v2707 = vld [vmem:[#allocation4 + $0x50] sm:$0xff]
          %v2708 = vld [vmem:[#allocation4 + $0x58] sm:$0xff]
          %v2709 = vld [vmem:[#allocation4 + $0x60] sm:$0xff]
          %v2710 = vld [vmem:[#allocation4 + $0x68] sm:$0xff]
          %v2711 = vld [vmem:[#allocation4 + $0x70] sm:$0xff]
          %v2712 = vld [vmem:[#allocation4 + $0x78] sm:$0xff]
          %2714 = vset.pattern.permute.xlu0 0
          %2715 = vperm.xlu0 %2714, %v2666
          %v2716 = vpop.permute.xlu0 %2715
          %2719 = vset.pattern.permute.xlu0 0
          %2720 = vperm.xlu0 %2719, %v2668
          %v2721 = vpop.permute.xlu0 %2720
          %2724 = vset.pattern.permute.xlu0 0
          %2725 = vperm.xlu0 %2724, %v2670
          %v2726 = vpop.permute.xlu0 %2725
          %2729 = vset.pattern.permute.xlu0 0
          %2730 = vperm.xlu0 %2729, %v2672
          %v2731 = vpop.permute.xlu0 %2730
          %2734 = vset.pattern.permute.xlu0 0
          %2735 = vperm.xlu0 %2734, %v2674
          %v2736 = vpop.permute.xlu0 %2735
          %2739 = vset.pattern.permute.xlu0 0
          %2740 = vperm.xlu0 %2739, %v2676
          %v2741 = vpop.permute.xlu0 %2740
          %2744 = vset.pattern.permute.xlu0 0
          %2745 = vperm.xlu0 %2744, %v2678
          %v2746 = vpop.permute.xlu0 %2745
          %2749 = vset.pattern.permute.xlu0 0
          %2750 = vperm.xlu0 %2749, %v2680
          %v2751 = vpop.permute.xlu0 %2750
          %2754 = vset.pattern.permute.xlu0 0
          %2755 = vperm.xlu0 %2754, %v2682
          %v2756 = vpop.permute.xlu0 %2755
          %2759 = vset.pattern.permute.xlu0 0
          %2760 = vperm.xlu0 %2759, %v2684
          %v2761 = vpop.permute.xlu0 %2760
          %2764 = vset.pattern.permute.xlu0 0
          %2765 = vperm.xlu0 %2764, %v2686
          %v2766 = vpop.permute.xlu0 %2765
          %2769 = vset.pattern.permute.xlu0 0
          %2770 = vperm.xlu0 %2769, %v2688
          %v2771 = vpop.permute.xlu0 %2770
          %2774 = vset.pattern.permute.xlu0 0
          %2775 = vperm.xlu0 %2774, %v2690
          %v2776 = vpop.permute.xlu0 %2775
          %2779 = vset.pattern.permute.xlu0 0
          %2780 = vperm.xlu0 %2779, %v2692
          %v2781 = vpop.permute.xlu0 %2780
          %2784 = vset.pattern.permute.xlu0 0
          %2785 = vperm.xlu0 %2784, %v2694
          %v2786 = vpop.permute.xlu0 %2785
          %2789 = vset.pattern.permute.xlu0 0
          %2790 = vperm.xlu0 %2789, %v2696
          %v2791 = vpop.permute.xlu0 %2790
          %v2793 = vmul.f32 %v2697, %v2716
          %v2794 = vmul.f32 %v2698, %v2721
          %v2795 = vmul.f32 %v2699, %v2726
          %v2796 = vmul.f32 %v2700, %v2731
          %v2797 = vmul.f32 %v2701, %v2736
          %v2798 = vmul.f32 %v2702, %v2741
          %v2799 = vmul.f32 %v2703, %v2746
          %v2800 = vmul.f32 %v2704, %v2751
          %v2801 = vmul.f32 %v2705, %v2756
          %v2802 = vmul.f32 %v2706, %v2761
          %v2803 = vmul.f32 %v2707, %v2766
          %v2804 = vmul.f32 %v2708, %v2771
          %v2805 = vmul.f32 %v2709, %v2776
          %v2806 = vmul.f32 %v2710, %v2781
          %v2807 = vmul.f32 %v2711, %v2786
          %v2808 = vmul.f32 %v2712, %v2791
          %2809 = vst [vmem:[%s753] sm:$0xff] %v2793
          %2810 = vst [vmem:[%s753 + $0x8] sm:$0xff] %v2794
          %2811 = vst [vmem:[%s753 + $0x10] sm:$0xff] %v2795
          %2812 = vst [vmem:[%s753 + $0x18] sm:$0xff] %v2796
          %2813 = vst [vmem:[%s753 + $0x20] sm:$0xff] %v2797
          %2814 = vst [vmem:[%s753 + $0x28] sm:$0xff] %v2798
          %2815 = vst [vmem:[%s753 + $0x30] sm:$0xff] %v2799
          %2816 = vst [vmem:[%s753 + $0x38] sm:$0xff] %v2800
          %2817 = vst [vmem:[%s753 + $0x40] sm:$0xff] %v2801
          %2818 = vst [vmem:[%s753 + $0x48] sm:$0xff] %v2802
          %2819 = vst [vmem:[%s753 + $0x50] sm:$0xff] %v2803
          %2820 = vst [vmem:[%s753 + $0x58] sm:$0xff] %v2804
          %2821 = vst [vmem:[%s753 + $0x60] sm:$0xff] %v2805
          %2822 = vst [vmem:[%s753 + $0x68] sm:$0xff] %v2806
          %2823 = vst [vmem:[%s753 + $0x70] sm:$0xff] %v2807
          %2824 = vst [vmem:[%s753 + $0x78] sm:$0xff] %v2808
        $region182: #{attention_forward.4} parent=149 // pred_fallthru
          _
        %s2825 = sand.u32 %s270, 1
        %s2826 = sand.u32 %s270, 1
        %s2827 = smul.addr %s2826, 128
        %s2828 = scalar_lea.vmem [#allocation8], %s2827
        // Predicated region
        $region183: #{attention_forward.4} parent=149 // pred_check
          %p2829 = pneg %p280
        $region184: #{attention_forward.4} parent=149 // pred_check_branch
          %2831 = sbr.rel (%p2829) target = $region186
        $region185: #{attention_forward.4} parent=149 // pred_region
          %s2832 = smul.u32 16, %s26
          %s2833 = smul.addr %s2832, 2
          %s2834 = sadd.s32 %s25, %s2833
          %s2835 = smul.addr %s24, 64
          %s2836 = sadd.s32 %s2834, %s2835
          %s2837 = smul.addr %s2836, 8
          %s2838 = scalar_lea.vmem %s7, %s2837
          // Predicated region
          $region187: #{attention_forward.4} parent=185 // pred_check
            _
          $region188: #{attention_forward.4} parent=185 // pred_check_branch
            %2840 = sbr.rel (0) target = $region190
          $region189: #{attention_forward.4} parent=185 // pred_region
            // Predicated region
            $region191: #{attention_forward.4} parent=189 // pred_check
              _
            $region192: #{attention_forward.4} parent=189 // pred_check_branch
              %2842 = sbr.rel (0) target = $region194
            $region193: #{attention_forward.4} parent=189 // pred_region
              // Predicated region
              $region206: #{attention_forward.4} parent=193 // pred_check
                _
              $region207: #{attention_forward.4} parent=193 // pred_check_branch
                %2887 = sbr.rel (0) target = $region209
              $region208: #{attention_forward.4} parent=193 // pred_region
                loop: start=0, step=1, limit=1
                $region210: #{attention_forward.4} parent=208 // loop_pre_header
                  _
                $region211: #{attention_forward.4} parent=208 // loop_header
                  %s2889 = sphi 0, %s2893
                  %p2890 = scmp.ge.s32.totalorder %s2889, 1
                  %s2894 = sphi %s2828, %s2828
                  %s2895 = sphi %s2838, %s2838
                $region212: #{attention_forward.4} parent=208 // loop_header_branch
                  %2892 = sbr.rel (%p2890) target = $region216
                $region213: #{attention_forward.4} parent=208 // loop_body
                  %v2896 = vld [vmem:[%s2894] sm:$0xff]
                  %2897 = vst [vmem:[%s2895] sm:$0xff] %v2896
                  %v2898 = vld [vmem:[%s2894 + $0x8] sm:$0xff]
                  %2899 = vst [vmem:[%s2895 + $0x10] sm:$0xff] %v2898
                  %v2900 = vld [vmem:[%s2894 + $0x10] sm:$0xff]
                  %2901 = vst [vmem:[%s2895 + $0x20] sm:$0xff] %v2900
                  %v2902 = vld [vmem:[%s2894 + $0x18] sm:$0xff]
                  %2903 = vst [vmem:[%s2895 + $0x30] sm:$0xff] %v2902
                  %v2904 = vld [vmem:[%s2894 + $0x20] sm:$0xff]
                  %2905 = vst [vmem:[%s2895 + $0x40] sm:$0xff] %v2904
                  %v2906 = vld [vmem:[%s2894 + $0x28] sm:$0xff]
                  %2907 = vst [vmem:[%s2895 + $0x50] sm:$0xff] %v2906
                  %v2908 = vld [vmem:[%s2894 + $0x30] sm:$0xff]
                  %2909 = vst [vmem:[%s2895 + $0x60] sm:$0xff] %v2908
                  %v2910 = vld [vmem:[%s2894 + $0x38] sm:$0xff]
                  %2911 = vst [vmem:[%s2895 + $0x70] sm:$0xff] %v2910
                  %v2912 = vld [vmem:[%s2894 + $0x40] sm:$0xff]
                  %2913 = vst [vmem:[%s2895 + $0x80] sm:$0xff] %v2912
                  %v2914 = vld [vmem:[%s2894 + $0x48] sm:$0xff]
                  %2915 = vst [vmem:[%s2895 + $0x90] sm:$0xff] %v2914
                  %v2916 = vld [vmem:[%s2894 + $0x50] sm:$0xff]
                  %2917 = vst [vmem:[%s2895 + $0xa0] sm:$0xff] %v2916
                  %v2918 = vld [vmem:[%s2894 + $0x58] sm:$0xff]
                  %2919 = vst [vmem:[%s2895 + $0xb0] sm:$0xff] %v2918
                  %v2920 = vld [vmem:[%s2894 + $0x60] sm:$0xff]
                  %2921 = vst [vmem:[%s2895 + $0xc0] sm:$0xff] %v2920
                  %v2922 = vld [vmem:[%s2894 + $0x68] sm:$0xff]
                  %2923 = vst [vmem:[%s2895 + $0xd0] sm:$0xff] %v2922
                  %v2924 = vld [vmem:[%s2894 + $0x70] sm:$0xff]
                  %2925 = vst [vmem:[%s2895 + $0xe0] sm:$0xff] %v2924
                  %v2926 = vld [vmem:[%s2894 + $0x78] sm:$0xff]
                  %2927 = vst [vmem:[%s2895 + $0xf0] sm:$0xff] %v2926
                $region214: #{attention_forward.4} parent=208 // loop_footer
                  %s2893 = sadd.s32 1, %s2889
                $region215: #{attention_forward.4} parent=208 // loop_footer_branch
                  %2888 = sbr.rel target = $region211
                $region216: #{attention_forward.4} parent=208 // loop_exit
                  _
              $region209: #{attention_forward.4} parent=193 // pred_fallthru
                _
              // Predicated region
              $region217: #{attention_forward.4} parent=193 // pred_check
                _
              $region218: #{attention_forward.4} parent=193 // pred_check_branch
                %2929 = sbr.rel target = $region220
              $region219: #{attention_forward.4} parent=193 // pred_region
                _
              $region220: #{attention_forward.4} parent=193 // pred_fallthru
                _
            $region194: #{attention_forward.4} parent=189 // pred_fallthru
              _
            // Predicated region
            $region195: #{attention_forward.4} parent=189 // pred_check
              _
            $region196: #{attention_forward.4} parent=189 // pred_check_branch
              %2844 = sbr.rel target = $region198
            $region197: #{attention_forward.4} parent=189 // pred_region
              loop: start=0, step=1, limit=1
              $region199: #{attention_forward.4} parent=197 // loop_pre_header
                _
              $region200: #{attention_forward.4} parent=197 // loop_header
                %s2847 = sphi 0, %s2851
                %p2848 = scmp.ge.s32.totalorder %s2847, 1
                %s2852 = sphi %s2828, %s2828
                %s2853 = sphi %s2838, %s2838
              $region201: #{attention_forward.4} parent=197 // loop_header_branch
                %2850 = sbr.rel (%p2848) target = $region205
              $region202: #{attention_forward.4} parent=197 // loop_body
                %v2854 = vld [vmem:[%s2852] sm:$0xff]
                %2855 = vst [vmem:[%s2853] sm:$0xff] %v2854
                %v2856 = vld [vmem:[%s2852 + $0x8] sm:$0xff]
                %2857 = vst [vmem:[%s2853 + $0x10] sm:$0xff] %v2856
                %v2858 = vld [vmem:[%s2852 + $0x10] sm:$0xff]
                %2859 = vst [vmem:[%s2853 + $0x20] sm:$0xff] %v2858
                %v2860 = vld [vmem:[%s2852 + $0x18] sm:$0xff]
                %2861 = vst [vmem:[%s2853 + $0x30] sm:$0xff] %v2860
                %v2862 = vld [vmem:[%s2852 + $0x20] sm:$0xff]
                %2863 = vst [vmem:[%s2853 + $0x40] sm:$0xff] %v2862
                %v2864 = vld [vmem:[%s2852 + $0x28] sm:$0xff]
                %2865 = vst [vmem:[%s2853 + $0x50] sm:$0xff] %v2864
                %v2866 = vld [vmem:[%s2852 + $0x30] sm:$0xff]
                %2867 = vst [vmem:[%s2853 + $0x60] sm:$0xff] %v2866
                %v2868 = vld [vmem:[%s2852 + $0x38] sm:$0xff]
                %2869 = vst [vmem:[%s2853 + $0x70] sm:$0xff] %v2868
                %v2870 = vld [vmem:[%s2852 + $0x40] sm:$0xff]
                %2871 = vst [vmem:[%s2853 + $0x80] sm:$0xff] %v2870
                %v2872 = vld [vmem:[%s2852 + $0x48] sm:$0xff]
                %2873 = vst [vmem:[%s2853 + $0x90] sm:$0xff] %v2872
                %v2874 = vld [vmem:[%s2852 + $0x50] sm:$0xff]
                %2875 = vst [vmem:[%s2853 + $0xa0] sm:$0xff] %v2874
                %v2876 = vld [vmem:[%s2852 + $0x58] sm:$0xff]
                %2877 = vst [vmem:[%s2853 + $0xb0] sm:$0xff] %v2876
                %v2878 = vld [vmem:[%s2852 + $0x60] sm:$0xff]
                %2879 = vst [vmem:[%s2853 + $0xc0] sm:$0xff] %v2878
                %v2880 = vld [vmem:[%s2852 + $0x68] sm:$0xff]
                %2881 = vst [vmem:[%s2853 + $0xd0] sm:$0xff] %v2880
                %v2882 = vld [vmem:[%s2852 + $0x70] sm:$0xff]
                %2883 = vst [vmem:[%s2853 + $0xe0] sm:$0xff] %v2882
                %v2884 = vld [vmem:[%s2852 + $0x78] sm:$0xff]
                %2885 = vst [vmem:[%s2853 + $0xf0] sm:$0xff] %v2884
              $region203: #{attention_forward.4} parent=197 // loop_footer
                %s2851 = sadd.s32 1, %s2847
              $region204: #{attention_forward.4} parent=197 // loop_footer_branch
                %2846 = sbr.rel target = $region200
              $region205: #{attention_forward.4} parent=197 // loop_exit
                _
            $region198: #{attention_forward.4} parent=189 // pred_fallthru
              _
          $region190: #{attention_forward.4} parent=185 // pred_fallthru
            _
          %2930 = vnop
        $region186: #{attention_forward.4} parent=149 // pred_fallthru
          _
      $region150: #{attention_forward.4} parent=5 // pred_fallthru
        _
      %p2931 = scmp.le.s32.totalorder 2, %s13
      // Predicated region
      $region221: #{attention_forward.4} parent=5 // pred_check
        %p2932 = pneg %p2931
      $region222: #{attention_forward.4} parent=5 // pred_check_branch
        %2934 = sbr.rel (%p2932) target = $region224
      $region223: #{attention_forward.4} parent=5 // pred_region
        %s2935 = ssub.s32 %s13, 2
        // Predicated region
        $region225: #{attention_forward.4} parent=223 // pred_check
          %p2936 = pneg %p286
        $region226: #{attention_forward.4} parent=223 // pred_check_branch
          %2938 = sbr.rel (%p2936) target = $region228
        $region227: #{attention_forward.4} parent=223 // pred_region
          %s2939 = sand.u32 %s271, 1
          %s2940 = sand.u32 %s271, 1
          %s2941 = smul.addr %s2940, 128
          %s2942 = scalar_lea.vmem [#allocation8], %s2941
        $region228: #{attention_forward.4} parent=223 // pred_fallthru
          _
      $region224: #{attention_forward.4} parent=5 // pred_fallthru
        _
    $region6: #{attention_forward.4} parent=1 // loop_footer
      %s17 = sadd.s32 1, %s13
    $region7: #{attention_forward.4} parent=1 // loop_footer_branch
      %12 = sbr.rel target = $region3
    $region8: #{attention_forward.4} parent=1 // loop_exit
      _

</llo_original>
